<compile_context>
chip_gen: v7x
topology: tpu7x:2x2x1
jax: 0.10.0
libtpu: 0.0.40
codegen_flags: <defaults>
</compile_context>

<pallas_src>
import numpy as np

import jax
import jax.numpy as jnp
from jax import lax
from jax.experimental import pallas as pl
from jax.experimental.pallas import tpu as pltpu


def _round_up(n: int, m: int) -> int:
    return (n + m - 1) // m * m


def _choose_tm(M: int, target: int = 1024) -> int:
    """Row-tile size: single tile when M is small; otherwise a multiple-of-8 divisor,
    preferring an even grid length (so v7x's two TensorCores split the work)."""
    tgt = max(8, target - target % 8)
    if M <= tgt:
        return M
    if M % 8 == 0:
        fallback = None
        for t in range(tgt, 7, -8):
            if M % t == 0:
                if (M // t) % 2 == 0:
                    return t
                if fallback is None:
                    fallback = t
        if fallback is not None:
            return fallback
    return tgt  # caller pads M up to a multiple of tgt


# ----------------------------------------------------------------------------
# Pallas kernels
# ----------------------------------------------------------------------------
def _conv_relu_pool_kernel(xs_ref, w_ref, b_ref, o_ref):
    """Fused conv (as per-kh Toeplitz matmuls) + bias + ReLU + 2x2 maxpool.

    xs_ref: (KH+1, tm, W*Cin)  bf16; slab j holds input rows (2*q + j) for row-pairs q.
    w_ref:  (KH, W*Cin, OW*Cout) bf16; per-kh Toeplitz weights, columns ordered
            (w-parity, ow//2, cout) so the W-pool is a max of the two lane halves.
    b_ref:  (1, OW//2 * Cout) f32 bias, tiled over ow//2.
    o_ref:  (tm, OW//2 * Cout) pooled output (lane-dense).
    """
    kh_taps = w_ref.shape[0]
    # Even / odd output rows accumulate from row-shifted input slabs.
    acc_e = jnp.dot(xs_ref[0], w_ref[0], preferred_element_type=jnp.float32)
    acc_o = jnp.dot(xs_ref[1], w_ref[0], preferred_element_type=jnp.float32)
    for kh in range(1, kh_taps):
        acc_e = acc_e + jnp.dot(xs_ref[kh], w_ref[kh],
                                preferred_element_type=jnp.float32)
        acc_o = acc_o + jnp.dot(xs_ref[kh + 1], w_ref[kh],
                                preferred_element_type=jnp.float32)
    # 2x2 maxpool in f32 while data is in vregs (bias/ReLU commute with max).
    m = jnp.maximum(acc_e, acc_o)                      # pool over the H pair
    half = m.shape[-1] // 2
    pooled = jnp.maximum(m[:, :half], m[:, half:])     # pool over the W pair
    o_ref[...] = jnp.maximum(pooled + b_ref[...], 0.0).astype(o_ref.dtype)


def _mlp_head_kernel(x_ref, w1_ref, b1_ref, w2_ref, b2_ref, o_ref):
    """Fused fc1 + ReLU + fc2 for one M tile (weights fully VMEM resident)."""
    h = jnp.dot(x_ref[...], w1_ref[...], preferred_element_type=jnp.float32)
    h = jnp.maximum(h + b1_ref[...], 0.0)
    out = jnp.dot(h.astype(w2_ref.dtype), w2_ref[...],
                  preferred_element_type=jnp.float32)
    o_ref[...] = (out + b2_ref[...]).astype(o_ref.dtype)


# ----------------------------------------------------------------------------
# Pallas-backed ops
# ----------------------------------------------------------------------------
def conv_relu_pool(x_rows, t_w, b_wide, *, out_dtype=jnp.bfloat16, tm_target=1024):
    """x_rows: (B, H, W*Cin) bf16 activation in (row=(b,h), lane=(w,c)) layout.
    t_w:    (KH, W*Cin, OW*Cout) bf16 Toeplitz-expanded weights.
    b_wide: (1, OW//2*Cout) f32 bias tiled over ow//2.
    Returns pooled activation (B*OH//2, OW//2*Cout)."""
    B, H, WC = x_rows.shape
    kh_taps = t_w.shape[0]
    NW = t_w.shape[-1]
    NW2 = NW // 2
    OH = H - kh_taps + 1
    OH2 = OH // 2

    # Stride-2 H-shifted row stacks: xs[j][b, q, :] = x_rows[b, 2*q + j, :]
    xs = jnp.stack([x_rows[:, j::2, :][:, :OH2, :] for j in range(kh_taps + 1)],
                   axis=0)
    M = B * OH2
    xs = xs.reshape(kh_taps + 1, M, WC)

    tm = _choose_tm(M, tm_target)
    Mp = _round_up(M, tm)
    if Mp != M:
        xs = jnp.pad(xs, ((0, 0), (0, Mp - M), (0, 0)))

    flops = 2 * 2 * kh_taps * Mp * WC * NW
    bytes_accessed = ((kh_taps + 1) * Mp * WC * 2 + kh_taps * WC * NW * 2
                      + NW2 * 4 + Mp * NW2 * jnp.dtype(out_dtype).itemsize)

    out = pl.pallas_call(
        _conv_relu_pool_kernel,
        out_shape=jax.ShapeDtypeStruct((Mp, NW2), out_dtype),
        grid=(Mp // tm,),
        in_specs=[
            pl.BlockSpec((kh_taps + 1, tm, WC), lambda i: (0, i, 0)),
            pl.BlockSpec((kh_taps, WC, NW), lambda i: (0, 0, 0)),
            pl.BlockSpec((1, NW2), lambda i: (0, 0)),
        ],
        out_specs=pl.BlockSpec((tm, NW2), lambda i: (i, 0)),
        compiler_params=pltpu.CompilerParams(dimension_semantics=("parallel",)),
        cost_estimate=pl.CostEstimate(flops=flops, transcendentals=0,
                                      bytes_accessed=bytes_accessed),
    )(xs, t_w, b_wide)
    return out[:M] if Mp != M else out


def mlp_head(x, w1, b1, w2, b2, *, tm_target=1024):
    """Fused fc1(+ReLU)+fc2: x (M, 800) bf16 -> logits (M, 10) f32."""
    M, K = x.shape
    N1 = w1.shape[1]
    N2 = w2.shape[1]
    tm = _choose_tm(M, tm_target)
    Mp = _round_up(M, tm)
    if Mp != M:
        x = jnp.pad(x, ((0, Mp - M), (0, 0)))

    flops = 2 * Mp * (K * N1 + N1 * N2)
    bytes_accessed = (Mp * K * 2 + K * N1 * 2 + N1 * N2 * 2
                      + (N1 + N2) * 4 + Mp * N2 * 4)

    out = pl.pallas_call(
        _mlp_head_kernel,
        out_shape=jax.ShapeDtypeStruct((Mp, N2), jnp.float32),
        grid=(Mp // tm,),
        in_specs=[
            pl.BlockSpec((tm, K), lambda i: (i, 0)),
            pl.BlockSpec((K, N1), lambda i: (0, 0)),
            pl.BlockSpec((1, N1), lambda i: (0, 0)),
            pl.BlockSpec((N1, N2), lambda i: (0, 0)),
            pl.BlockSpec((1, N2), lambda i: (0, 0)),
        ],
        out_specs=pl.BlockSpec((tm, N2), lambda i: (i, 0)),
        compiler_params=pltpu.CompilerParams(dimension_semantics=("parallel",)),
        cost_estimate=pl.CostEstimate(flops=flops, transcendentals=0,
                                      bytes_accessed=bytes_accessed),
    )(x, w1, b1, w2, b2)
    return out[:M] if Mp != M else out


# ----------------------------------------------------------------------------
# One-time parameter preparation (host side, outside the per-step forward)
# ----------------------------------------------------------------------------
def _conv_to_toeplitz(wt, w_in, dtype=jnp.bfloat16):
    """Expand a (Cout, Cin, KH, KW) torch conv weight into per-kh block-Toeplitz
    matmul weights (KH, w_in*Cin, OW*Cout).  Column order (w-parity, ow//2, cout)
    makes the kernel's W-direction 2x2 pool a max of the two lane halves."""
    wnp = np.asarray(jax.device_get(wt), np.float32)
    Cout, Cin, KH, KW = wnp.shape
    OW = w_in - KW + 1
    assert OW % 2 == 0, "pooling expects an even conv output width"
    OW2 = OW // 2
    T = np.zeros((KH, w_in * Cin, OW * Cout), np.float32)
    for kh in range(KH):
        for kw in range(KW):
            blk = wnp[:, :, kh, kw].T                     # (Cin, Cout)
            for ow in range(OW):
                w = ow + kw
                col0 = ((ow % 2) * OW2 + ow // 2) * Cout
                T[kh, w * Cin:(w + 1) * Cin, col0:col0 + Cout] = blk
    return jnp.asarray(T, dtype)


def prepare_params(params):
    """One-time layout / dtype prep (call OUTSIDE jit): Toeplitz conv weights,
    pooled-layout biases, NHWC-permuted + 512-padded fc1, matching-padded fc2."""
    c1_t = _conv_to_toeplitz(params["conv1_w"], w_in=28)     # (5, 28, 480)
    c1_b = jnp.tile(params["conv1_b"].astype(jnp.float32), 12).reshape(1, 240)
    c2_t = _conv_to_toeplitz(params["conv2_w"], w_in=12)     # (5, 240, 400)
    c2_b = jnp.tile(params["conv2_b"].astype(jnp.float32), 4).reshape(1, 200)

    # fc1 rows: torch NCHW flatten order (c,h,w) -> our NHWC flatten order (h,w,c);
    # pad the hidden dim 500 -> 512 with zeros for 128-lane alignment.
    f1 = params["fc1_w"].T.reshape(50, 4, 4, 500).transpose(1, 2, 0, 3).reshape(800, 500)
    f1 = jnp.pad(f1, ((0, 0), (0, 12))).astype(jnp.bfloat16)            # (800, 512)
    f1_b = jnp.pad(params["fc1_b"].astype(jnp.float32), (0, 12)).reshape(1, 512)
    f2 = jnp.pad(params["fc2_w"].T, ((0, 12), (0, 0))).astype(jnp.bfloat16)  # (512, 10)
    f2_b = params["fc2_b"].astype(jnp.float32).reshape(1, 10)

    return {"c1_t": c1_t, "c1_b": c1_b, "c2_t": c2_t, "c2_b": c2_b,
            "fc1_w": f1, "fc1_b": f1_b, "fc2_w": f2, "fc2_b": f2_b}


# ----------------------------------------------------------------------------
# Forward pass (3 pallas_calls; all inter-stage reshapes are free row-major)
# ----------------------------------------------------------------------------
def net_forward(x_nchw, prep):
    B = x_nchw.shape[0]
    x = x_nchw.reshape(B, 28, 28).astype(jnp.bfloat16)         # Cin=1: (b, h, w)

    h = conv_relu_pool(x, prep["c1_t"], prep["c1_b"])          # (B*12, 240)
    h = h.reshape(B, 12, 240)                                  # rows=(b,h), lanes=(w,c)

    h = conv_relu_pool(h, prep["c2_t"], prep["c2_b"])          # (B*4, 200)
    h = h.reshape(B, 800)                                      # NHWC flatten (h,w,c)

    return mlp_head(h, prep["fc1_w"], prep["fc1_b"],
                    prep["fc2_w"], prep["fc2_b"])              # (B, 10) f32


# ----------------------------------------------------------------------------
# Init + pure-JAX reference (f32) for a loose numerical sanity check
# ----------------------------------------------------------------------------
def init_params(key):
    ks = jax.random.split(key, 8)
    scale = 0.1
    return {
        "conv1_w": scale * jax.random.normal(ks[0], (20, 1, 5, 5), jnp.float32),
        "conv1_b": scale * jax.random.normal(ks[1], (20,), jnp.float32),
        "conv2_w": scale * jax.random.normal(ks[2], (50, 20, 5, 5), jnp.float32),
        "conv2_b": scale * jax.random.normal(ks[3], (50,), jnp.float32),
        "fc1_w": scale * jax.random.normal(ks[4], (500, 800), jnp.float32),
        "fc1_b": scale * jax.random.normal(ks[5], (500,), jnp.float32),
        "fc2_w": scale * jax.random.normal(ks[6], (10, 500), jnp.float32),
        "fc2_b": scale * jax.random.normal(ks[7], (10,), jnp.float32),
    }


def reference_forward(x, params):
    conv = lambda a, w, b: lax.conv_general_dilated(
        a, w, window_strides=(1, 1), padding="VALID",
        dimension_numbers=("NCHW", "OIHW", "NCHW")) + b.reshape(1, -1, 1, 1)
    pool = lambda a: lax.reduce_window(a, -jnp.inf, lax.max,
                                       (1, 1, 2, 2), (1, 1, 2, 2), "VALID")
    h = pool(jax.nn.relu(conv(x, params["conv1_w"], params["conv1_b"])))
    h = pool(jax.nn.relu(conv(h, params["conv2_w"], params["conv2_b"])))
    h = h.reshape(h.shape[0], -1)                 # torch's NCHW .view(-1, 800)
    h = jax.nn.relu(h @ params["fc1_w"].T + params["fc1_b"])
    return h @ params["fc2_w"].T + params["fc2_b"]


if __name__ == "__main__":
    key = jax.random.PRNGKey(0)
    pkey, xkey = jax.random.split(key)
    params = init_params(pkey)
    prep = prepare_params(params)     # one-time host-side weight layout prep

    # Spatial size must be 28 so the flatten is exactly 4*4*50 = 800.
    x = jax.random.normal(xkey, (2, 1, 28, 28), jnp.float32)

    logits = jax.jit(net_forward)(x, prep)
    logits = jax.block_until_ready(logits)
    assert logits.shape == (2, 10), logits.shape
    assert bool(jnp.all(jnp.isfinite(logits)))

    # Loose tolerance: the Pallas path runs bf16 matmuls with f32 accumulation.
    ref = reference_forward(x, params)
    err = float(jnp.max(jnp.abs(logits - ref)))
    assert err < 0.5, f"mismatch vs f32 reference: max abs err {err}"

    print("KERNEL_OK")
</pallas_src>

<mosaic_0001>
module attributes {stable_mosaic.version = 11 : i64} {
  func.func @_conv_relu_pool_kernel(%arg0: i32, %arg1: memref<6x24x28xbf16, #tpu.memory_space<vmem>>, %arg2: memref<5x28x480xbf16, #tpu.memory_space<vmem>>, %arg3: memref<1x240xf32, #tpu.memory_space<vmem>>, %arg4: memref<24x240xbf16, #tpu.memory_space<vmem>>) attributes {dimension_semantics = [#tpu.dimension_semantics<parallel>], iteration_bounds = array<i64: 1>, scalar_prefetch = 0 : i64, scratch_operands = 0 : i64, tpu.core_type = #tpu.core_type<tc>, window_params = [{transform_indices = @transform_0, window_bounds = array<i64: 6, 24, 28>}, {pipeline_mode = #tpu.pipeline_mode<synchronous>, transform_indices = @transform_1, window_bounds = array<i64: 5, 28, 480>}, {pipeline_mode = #tpu.pipeline_mode<synchronous>, transform_indices = @transform_2, window_bounds = array<i64: 1, 240>}, {transform_indices = @transform_3, window_bounds = array<i64: 24, 240>}]} {
    %c0 = arith.constant 0 : index
    %c0_0 = arith.constant 0 : index
    %c0_1 = arith.constant 0 : index
    %0 = vector.load %arg1[%c0, %c0_0, %c0_1] : memref<6x24x28xbf16, #tpu.memory_space<vmem>>, vector<1x24x28xbf16>
    %1 = vector.shape_cast %0 : vector<1x24x28xbf16> to vector<24x28xbf16>
    %c0_2 = arith.constant 0 : index
    %c0_3 = arith.constant 0 : index
    %c0_4 = arith.constant 0 : index
    %2 = vector.load %arg2[%c0_2, %c0_3, %c0_4] : memref<5x28x480xbf16, #tpu.memory_space<vmem>>, vector<1x28x480xbf16>
    %3 = vector.shape_cast %2 : vector<1x28x480xbf16> to vector<28x480xbf16>
    %cst = arith.constant dense<0.000000e+00> : vector<24x480xf32>
    %4 = tpu.matmul %1, %3, %cst {dimension_numbers = #tpu.dot_dimension_numbers<[1], [0], [0], [1], [0, 0, 1, 1], [], []>} : vector<24x28xbf16>, vector<28x480xbf16>, vector<24x480xf32> -> vector<24x480xf32>
    %c1 = arith.constant 1 : index
    %c0_5 = arith.constant 0 : index
    %c0_6 = arith.constant 0 : index
    %5 = vector.load %arg1[%c1, %c0_5, %c0_6] : memref<6x24x28xbf16, #tpu.memory_space<vmem>>, vector<1x24x28xbf16>
    %6 = vector.shape_cast %5 : vector<1x24x28xbf16> to vector<24x28xbf16>
    %c0_7 = arith.constant 0 : index
    %c0_8 = arith.constant 0 : index
    %c0_9 = arith.constant 0 : index
    %7 = vector.load %arg2[%c0_7, %c0_8, %c0_9] : memref<5x28x480xbf16, #tpu.memory_space<vmem>>, vector<1x28x480xbf16>
    %8 = vector.shape_cast %7 : vector<1x28x480xbf16> to vector<28x480xbf16>
    %cst_10 = arith.constant dense<0.000000e+00> : vector<24x480xf32>
    %9 = tpu.matmul %6, %8, %cst_10 {dimension_numbers = #tpu.dot_dimension_numbers<[1], [0], [0], [1], [0, 0, 1, 1], [], []>} : vector<24x28xbf16>, vector<28x480xbf16>, vector<24x480xf32> -> vector<24x480xf32>
    %c1_11 = arith.constant 1 : index
    %c0_12 = arith.constant 0 : index
    %c0_13 = arith.constant 0 : index
    %10 = vector.load %arg1[%c1_11, %c0_12, %c0_13] : memref<6x24x28xbf16, #tpu.memory_space<vmem>>, vector<1x24x28xbf16>
    %11 = vector.shape_cast %10 : vector<1x24x28xbf16> to vector<24x28xbf16>
    %c1_14 = arith.constant 1 : index
    %c0_15 = arith.constant 0 : index
    %c0_16 = arith.constant 0 : index
    %12 = vector.load %arg2[%c1_14, %c0_15, %c0_16] : memref<5x28x480xbf16, #tpu.memory_space<vmem>>, vector<1x28x480xbf16>
    %13 = vector.shape_cast %12 : vector<1x28x480xbf16> to vector<28x480xbf16>
    %cst_17 = arith.constant dense<0.000000e+00> : vector<24x480xf32>
    %14 = tpu.matmul %11, %13, %cst_17 {dimension_numbers = #tpu.dot_dimension_numbers<[1], [0], [0], [1], [0, 0, 1, 1], [], []>} : vector<24x28xbf16>, vector<28x480xbf16>, vector<24x480xf32> -> vector<24x480xf32>
    %15 = arith.addf %4, %14 : vector<24x480xf32>
    %c2 = arith.constant 2 : index
    %c0_18 = arith.constant 0 : index
    %c0_19 = arith.constant 0 : index
    %16 = vector.load %arg1[%c2, %c0_18, %c0_19] : memref<6x24x28xbf16, #tpu.memory_space<vmem>>, vector<1x24x28xbf16>
    %17 = vector.shape_cast %16 : vector<1x24x28xbf16> to vector<24x28xbf16>
    %c1_20 = arith.constant 1 : index
    %c0_21 = arith.constant 0 : index
    %c0_22 = arith.constant 0 : index
    %18 = vector.load %arg2[%c1_20, %c0_21, %c0_22] : memref<5x28x480xbf16, #tpu.memory_space<vmem>>, vector<1x28x480xbf16>
    %19 = vector.shape_cast %18 : vector<1x28x480xbf16> to vector<28x480xbf16>
    %cst_23 = arith.constant dense<0.000000e+00> : vector<24x480xf32>
    %20 = tpu.matmul %17, %19, %cst_23 {dimension_numbers = #tpu.dot_dimension_numbers<[1], [0], [0], [1], [0, 0, 1, 1], [], []>} : vector<24x28xbf16>, vector<28x480xbf16>, vector<24x480xf32> -> vector<24x480xf32>
    %21 = arith.addf %9, %20 : vector<24x480xf32>
    %c2_24 = arith.constant 2 : index
    %c0_25 = arith.constant 0 : index
    %c0_26 = arith.constant 0 : index
    %22 = vector.load %arg1[%c2_24, %c0_25, %c0_26] : memref<6x24x28xbf16, #tpu.memory_space<vmem>>, vector<1x24x28xbf16>
    %23 = vector.shape_cast %22 : vector<1x24x28xbf16> to vector<24x28xbf16>
    %c2_27 = arith.constant 2 : index
    %c0_28 = arith.constant 0 : index
    %c0_29 = arith.constant 0 : index
    %24 = vector.load %arg2[%c2_27, %c0_28, %c0_29] : memref<5x28x480xbf16, #tpu.memory_space<vmem>>, vector<1x28x480xbf16>
    %25 = vector.shape_cast %24 : vector<1x28x480xbf16> to vector<28x480xbf16>
    %cst_30 = arith.constant dense<0.000000e+00> : vector<24x480xf32>
    %26 = tpu.matmul %23, %25, %cst_30 {dimension_numbers = #tpu.dot_dimension_numbers<[1], [0], [0], [1], [0, 0, 1, 1], [], []>} : vector<24x28xbf16>, vector<28x480xbf16>, vector<24x480xf32> -> vector<24x480xf32>
    %27 = arith.addf %15, %26 : vector<24x480xf32>
    %c3 = arith.constant 3 : index
    %c0_31 = arith.constant 0 : index
    %c0_32 = arith.constant 0 : index
    %28 = vector.load %arg1[%c3, %c0_31, %c0_32] : memref<6x24x28xbf16, #tpu.memory_space<vmem>>, vector<1x24x28xbf16>
    %29 = vector.shape_cast %28 : vector<1x24x28xbf16> to vector<24x28xbf16>
    %c2_33 = arith.constant 2 : index
    %c0_34 = arith.constant 0 : index
    %c0_35 = arith.constant 0 : index
    %30 = vector.load %arg2[%c2_33, %c0_34, %c0_35] : memref<5x28x480xbf16, #tpu.memory_space<vmem>>, vector<1x28x480xbf16>
    %31 = vector.shape_cast %30 : vector<1x28x480xbf16> to vector<28x480xbf16>
    %cst_36 = arith.constant dense<0.000000e+00> : vector<24x480xf32>
    %32 = tpu.matmul %29, %31, %cst_36 {dimension_numbers = #tpu.dot_dimension_numbers<[1], [0], [0], [1], [0, 0, 1, 1], [], []>} : vector<24x28xbf16>, vector<28x480xbf16>, vector<24x480xf32> -> vector<24x480xf32>
    %33 = arith.addf %21, %32 : vector<24x480xf32>
    %c3_37 = arith.constant 3 : index
    %c0_38 = arith.constant 0 : index
    %c0_39 = arith.constant 0 : index
    %34 = vector.load %arg1[%c3_37, %c0_38, %c0_39] : memref<6x24x28xbf16, #tpu.memory_space<vmem>>, vector<1x24x28xbf16>
    %35 = vector.shape_cast %34 : vector<1x24x28xbf16> to vector<24x28xbf16>
    %c3_40 = arith.constant 3 : index
    %c0_41 = arith.constant 0 : index
    %c0_42 = arith.constant 0 : index
    %36 = vector.load %arg2[%c3_40, %c0_41, %c0_42] : memref<5x28x480xbf16, #tpu.memory_space<vmem>>, vector<1x28x480xbf16>
    %37 = vector.shape_cast %36 : vector<1x28x480xbf16> to vector<28x480xbf16>
    %cst_43 = arith.constant dense<0.000000e+00> : vector<24x480xf32>
    %38 = tpu.matmul %35, %37, %cst_43 {dimension_numbers = #tpu.dot_dimension_numbers<[1], [0], [0], [1], [0, 0, 1, 1], [], []>} : vector<24x28xbf16>, vector<28x480xbf16>, vector<24x480xf32> -> vector<24x480xf32>
    %39 = arith.addf %27, %38 : vector<24x480xf32>
    %c4 = arith.constant 4 : index
    %c0_44 = arith.constant 0 : index
    %c0_45 = arith.constant 0 : index
    %40 = vector.load %arg1[%c4, %c0_44, %c0_45] : memref<6x24x28xbf16, #tpu.memory_space<vmem>>, vector<1x24x28xbf16>
    %41 = vector.shape_cast %40 : vector<1x24x28xbf16> to vector<24x28xbf16>
    %c3_46 = arith.constant 3 : index
    %c0_47 = arith.constant 0 : index
    %c0_48 = arith.constant 0 : index
    %42 = vector.load %arg2[%c3_46, %c0_47, %c0_48] : memref<5x28x480xbf16, #tpu.memory_space<vmem>>, vector<1x28x480xbf16>
    %43 = vector.shape_cast %42 : vector<1x28x480xbf16> to vector<28x480xbf16>
    %cst_49 = arith.constant dense<0.000000e+00> : vector<24x480xf32>
    %44 = tpu.matmul %41, %43, %cst_49 {dimension_numbers = #tpu.dot_dimension_numbers<[1], [0], [0], [1], [0, 0, 1, 1], [], []>} : vector<24x28xbf16>, vector<28x480xbf16>, vector<24x480xf32> -> vector<24x480xf32>
    %45 = arith.addf %33, %44 : vector<24x480xf32>
    %c4_50 = arith.constant 4 : index
    %c0_51 = arith.constant 0 : index
    %c0_52 = arith.constant 0 : index
    %46 = vector.load %arg1[%c4_50, %c0_51, %c0_52] : memref<6x24x28xbf16, #tpu.memory_space<vmem>>, vector<1x24x28xbf16>
    %47 = vector.shape_cast %46 : vector<1x24x28xbf16> to vector<24x28xbf16>
    %c4_53 = arith.constant 4 : index
    %c0_54 = arith.constant 0 : index
    %c0_55 = arith.constant 0 : index
    %48 = vector.load %arg2[%c4_53, %c0_54, %c0_55] : memref<5x28x480xbf16, #tpu.memory_space<vmem>>, vector<1x28x480xbf16>
    %49 = vector.shape_cast %48 : vector<1x28x480xbf16> to vector<28x480xbf16>
    %cst_56 = arith.constant dense<0.000000e+00> : vector<24x480xf32>
    %50 = tpu.matmul %47, %49, %cst_56 {dimension_numbers = #tpu.dot_dimension_numbers<[1], [0], [0], [1], [0, 0, 1, 1], [], []>} : vector<24x28xbf16>, vector<28x480xbf16>, vector<24x480xf32> -> vector<24x480xf32>
    %51 = arith.addf %39, %50 : vector<24x480xf32>
    %c5 = arith.constant 5 : index
    %c0_57 = arith.constant 0 : index
    %c0_58 = arith.constant 0 : index
    %52 = vector.load %arg1[%c5, %c0_57, %c0_58] : memref<6x24x28xbf16, #tpu.memory_space<vmem>>, vector<1x24x28xbf16>
    %53 = vector.shape_cast %52 : vector<1x24x28xbf16> to vector<24x28xbf16>
    %c4_59 = arith.constant 4 : index
    %c0_60 = arith.constant 0 : index
    %c0_61 = arith.constant 0 : index
    %54 = vector.load %arg2[%c4_59, %c0_60, %c0_61] : memref<5x28x480xbf16, #tpu.memory_space<vmem>>, vector<1x28x480xbf16>
    %55 = vector.shape_cast %54 : vector<1x28x480xbf16> to vector<28x480xbf16>
    %cst_62 = arith.constant dense<0.000000e+00> : vector<24x480xf32>
    %56 = tpu.matmul %53, %55, %cst_62 {dimension_numbers = #tpu.dot_dimension_numbers<[1], [0], [0], [1], [0, 0, 1, 1], [], []>} : vector<24x28xbf16>, vector<28x480xbf16>, vector<24x480xf32> -> vector<24x480xf32>
    %57 = arith.addf %45, %56 : vector<24x480xf32>
    %58 = arith.maximumf %51, %57 : vector<24x480xf32>
    %59 = vector.extract_strided_slice %58 {offsets = [0, 0], sizes = [24, 240], strides = [1, 1]} : vector<24x480xf32> to vector<24x240xf32>
    %60 = vector.extract_strided_slice %58 {offsets = [0, 240], sizes = [24, 240], strides = [1, 1]} : vector<24x480xf32> to vector<24x240xf32>
    %61 = arith.maximumf %59, %60 : vector<24x240xf32>
    %c0_63 = arith.constant 0 : index
    %c0_64 = arith.constant 0 : index
    %62 = vector.load %arg3[%c0_63, %c0_64] : memref<1x240xf32, #tpu.memory_space<vmem>>, vector<1x240xf32>
    %63 = vector.broadcast %62 : vector<1x240xf32> to vector<24x240xf32>
    %64 = arith.addf %61, %63 : vector<24x240xf32>
    %cst_65 = arith.constant 0.000000e+00 : f32
    %65 = vector.broadcast %cst_65 : f32 to vector<24x240xf32>
    %66 = arith.maximumf %64, %65 : vector<24x240xf32>
    %67 = arith.truncf %66 : vector<24x240xf32> to vector<24x240xbf16>
    %c0_66 = arith.constant 0 : index
    %c0_67 = arith.constant 0 : index
    %68 = vector.load %arg4[%c0_66, %c0_67] : memref<24x240xbf16, #tpu.memory_space<vmem>>, vector<24x240xbf16>
    tpu.vector_store %arg4[%c0_66, %c0_67], %67 {strides = array<i32>} : memref<24x240xbf16, #tpu.memory_space<vmem>>, vector<24x240xbf16>,
    return
  }
  func.func @transform_0(%arg0: i32) -> (i32, i32, i32) {
    %c0_i32 = arith.constant 0 : i32
    %c0_i32_0 = arith.constant 0 : i32
    %c0_i32_1 = arith.constant 0 : i32
    return %c0_i32, %arg0, %c0_i32_0 : i32, i32, i32
  }
  func.func @transform_1(%arg0: i32) -> (i32, i32, i32) {
    %c0_i32 = arith.constant 0 : i32
    %c0_i32_0 = arith.constant 0 : i32
    %c0_i32_1 = arith.constant 0 : i32
    %c0_i32_2 = arith.constant 0 : i32
    return %c0_i32, %c0_i32_0, %c0_i32_1 : i32, i32, i32
  }
  func.func @transform_2(%arg0: i32) -> (i32, i32) {
    %c0_i32 = arith.constant 0 : i32
    %c0_i32_0 = arith.constant 0 : i32
    %c0_i32_1 = arith.constant 0 : i32
    return %c0_i32, %c0_i32_0 : i32, i32
  }
  func.func @transform_3(%arg0: i32) -> (i32, i32) {
    %c0_i32 = arith.constant 0 : i32
    %c0_i32_0 = arith.constant 0 : i32
    return %arg0, %c0_i32 : i32, i32
  }
}

module attributes {stable_mosaic.version = 11 : i64} {
  func.func @_conv_relu_pool_kernel(%arg0: i32, %arg1: memref<6x8x240xbf16, #tpu.memory_space<vmem>>, %arg2: memref<5x240x400xbf16, #tpu.memory_space<vmem>>, %arg3: memref<1x200xf32, #tpu.memory_space<vmem>>, %arg4: memref<8x200xbf16, #tpu.memory_space<vmem>>) attributes {dimension_semantics = [#tpu.dimension_semantics<parallel>], iteration_bounds = array<i64: 1>, scalar_prefetch = 0 : i64, scratch_operands = 0 : i64, tpu.core_type = #tpu.core_type<tc>, window_params = [{transform_indices = @transform_0, window_bounds = array<i64: 6, 8, 240>}, {pipeline_mode = #tpu.pipeline_mode<synchronous>, transform_indices = @transform_1, window_bounds = array<i64: 5, 240, 400>}, {pipeline_mode = #tpu.pipeline_mode<synchronous>, transform_indices = @transform_2, window_bounds = array<i64: 1, 200>}, {transform_indices = @transform_3, window_bounds = array<i64: 8, 200>}]} {
    %c0 = arith.constant 0 : index
    %c0_0 = arith.constant 0 : index
    %c0_1 = arith.constant 0 : index
    %0 = vector.load %arg1[%c0, %c0_0, %c0_1] : memref<6x8x240xbf16, #tpu.memory_space<vmem>>, vector<1x8x240xbf16>
    %1 = vector.shape_cast %0 : vector<1x8x240xbf16> to vector<8x240xbf16>
    %c0_2 = arith.constant 0 : index
    %c0_3 = arith.constant 0 : index
    %c0_4 = arith.constant 0 : index
    %2 = vector.load %arg2[%c0_2, %c0_3, %c0_4] : memref<5x240x400xbf16, #tpu.memory_space<vmem>>, vector<1x240x400xbf16>
    %3 = vector.shape_cast %2 : vector<1x240x400xbf16> to vector<240x400xbf16>
    %cst = arith.constant dense<0.000000e+00> : vector<8x400xf32>
    %4 = tpu.matmul %1, %3, %cst {dimension_numbers = #tpu.dot_dimension_numbers<[1], [0], [0], [1], [0, 0, 1, 1], [], []>} : vector<8x240xbf16>, vector<240x400xbf16>, vector<8x400xf32> -> vector<8x400xf32>
    %c1 = arith.constant 1 : index
    %c0_5 = arith.constant 0 : index
    %c0_6 = arith.constant 0 : index
    %5 = vector.load %arg1[%c1, %c0_5, %c0_6] : memref<6x8x240xbf16, #tpu.memory_space<vmem>>, vector<1x8x240xbf16>
    %6 = vector.shape_cast %5 : vector<1x8x240xbf16> to vector<8x240xbf16>
    %c0_7 = arith.constant 0 : index
    %c0_8 = arith.constant 0 : index
    %c0_9 = arith.constant 0 : index
    %7 = vector.load %arg2[%c0_7, %c0_8, %c0_9] : memref<5x240x400xbf16, #tpu.memory_space<vmem>>, vector<1x240x400xbf16>
    %8 = vector.shape_cast %7 : vector<1x240x400xbf16> to vector<240x400xbf16>
    %cst_10 = arith.constant dense<0.000000e+00> : vector<8x400xf32>
    %9 = tpu.matmul %6, %8, %cst_10 {dimension_numbers = #tpu.dot_dimension_numbers<[1], [0], [0], [1], [0, 0, 1, 1], [], []>} : vector<8x240xbf16>, vector<240x400xbf16>, vector<8x400xf32> -> vector<8x400xf32>
    %c1_11 = arith.constant 1 : index
    %c0_12 = arith.constant 0 : index
    %c0_13 = arith.constant 0 : index
    %10 = vector.load %arg1[%c1_11, %c0_12, %c0_13] : memref<6x8x240xbf16, #tpu.memory_space<vmem>>, vector<1x8x240xbf16>
    %11 = vector.shape_cast %10 : vector<1x8x240xbf16> to vector<8x240xbf16>
    %c1_14 = arith.constant 1 : index
    %c0_15 = arith.constant 0 : index
    %c0_16 = arith.constant 0 : index
    %12 = vector.load %arg2[%c1_14, %c0_15, %c0_16] : memref<5x240x400xbf16, #tpu.memory_space<vmem>>, vector<1x240x400xbf16>
    %13 = vector.shape_cast %12 : vector<1x240x400xbf16> to vector<240x400xbf16>
    %cst_17 = arith.constant dense<0.000000e+00> : vector<8x400xf32>
    %14 = tpu.matmul %11, %13, %cst_17 {dimension_numbers = #tpu.dot_dimension_numbers<[1], [0], [0], [1], [0, 0, 1, 1], [], []>} : vector<8x240xbf16>, vector<240x400xbf16>, vector<8x400xf32> -> vector<8x400xf32>
    %15 = arith.addf %4, %14 : vector<8x400xf32>
    %c2 = arith.constant 2 : index
    %c0_18 = arith.constant 0 : index
    %c0_19 = arith.constant 0 : index
    %16 = vector.load %arg1[%c2, %c0_18, %c0_19] : memref<6x8x240xbf16, #tpu.memory_space<vmem>>, vector<1x8x240xbf16>
    %17 = vector.shape_cast %16 : vector<1x8x240xbf16> to vector<8x240xbf16>
    %c1_20 = arith.constant 1 : index
    %c0_21 = arith.constant 0 : index
    %c0_22 = arith.constant 0 : index
    %18 = vector.load %arg2[%c1_20, %c0_21, %c0_22] : memref<5x240x400xbf16, #tpu.memory_space<vmem>>, vector<1x240x400xbf16>
    %19 = vector.shape_cast %18 : vector<1x240x400xbf16> to vector<240x400xbf16>
    %cst_23 = arith.constant dense<0.000000e+00> : vector<8x400xf32>
    %20 = tpu.matmul %17, %19, %cst_23 {dimension_numbers = #tpu.dot_dimension_numbers<[1], [0], [0], [1], [0, 0, 1, 1], [], []>} : vector<8x240xbf16>, vector<240x400xbf16>, vector<8x400xf32> -> vector<8x400xf32>
    %21 = arith.addf %9, %20 : vector<8x400xf32>
    %c2_24 = arith.constant 2 : index
    %c0_25 = arith.constant 0 : index
    %c0_26 = arith.constant 0 : index
    %22 = vector.load %arg1[%c2_24, %c0_25, %c0_26] : memref<6x8x240xbf16, #tpu.memory_space<vmem>>, vector<1x8x240xbf16>
    %23 = vector.shape_cast %22 : vector<1x8x240xbf16> to vector<8x240xbf16>
    %c2_27 = arith.constant 2 : index
    %c0_28 = arith.constant 0 : index
    %c0_29 = arith.constant 0 : index
    %24 = vector.load %arg2[%c2_27, %c0_28, %c0_29] : memref<5x240x400xbf16, #tpu.memory_space<vmem>>, vector<1x240x400xbf16>
    %25 = vector.shape_cast %24 : vector<1x240x400xbf16> to vector<240x400xbf16>
    %cst_30 = arith.constant dense<0.000000e+00> : vector<8x400xf32>
    %26 = tpu.matmul %23, %25, %cst_30 {dimension_numbers = #tpu.dot_dimension_numbers<[1], [0], [0], [1], [0, 0, 1, 1], [], []>} : vector<8x240xbf16>, vector<240x400xbf16>, vector<8x400xf32> -> vector<8x400xf32>
    %27 = arith.addf %15, %26 : vector<8x400xf32>
    %c3 = arith.constant 3 : index
    %c0_31 = arith.constant 0 : index
    %c0_32 = arith.constant 0 : index
    %28 = vector.load %arg1[%c3, %c0_31, %c0_32] : memref<6x8x240xbf16, #tpu.memory_space<vmem>>, vector<1x8x240xbf16>
    %29 = vector.shape_cast %28 : vector<1x8x240xbf16> to vector<8x240xbf16>
    %c2_33 = arith.constant 2 : index
    %c0_34 = arith.constant 0 : index
    %c0_35 = arith.constant 0 : index
    %30 = vector.load %arg2[%c2_33, %c0_34, %c0_35] : memref<5x240x400xbf16, #tpu.memory_space<vmem>>, vector<1x240x400xbf16>
    %31 = vector.shape_cast %30 : vector<1x240x400xbf16> to vector<240x400xbf16>
    %cst_36 = arith.constant dense<0.000000e+00> : vector<8x400xf32>
    %32 = tpu.matmul %29, %31, %cst_36 {dimension_numbers = #tpu.dot_dimension_numbers<[1], [0], [0], [1], [0, 0, 1, 1], [], []>} : vector<8x240xbf16>, vector<240x400xbf16>, vector<8x400xf32> -> vector<8x400xf32>
    %33 = arith.addf %21, %32 : vector<8x400xf32>
    %c3_37 = arith.constant 3 : index
    %c0_38 = arith.constant 0 : index
    %c0_39 = arith.constant 0 : index
    %34 = vector.load %arg1[%c3_37, %c0_38, %c0_39] : memref<6x8x240xbf16, #tpu.memory_space<vmem>>, vector<1x8x240xbf16>
    %35 = vector.shape_cast %34 : vector<1x8x240xbf16> to vector<8x240xbf16>
    %c3_40 = arith.constant 3 : index
    %c0_41 = arith.constant 0 : index
    %c0_42 = arith.constant 0 : index
    %36 = vector.load %arg2[%c3_40, %c0_41, %c0_42] : memref<5x240x400xbf16, #tpu.memory_space<vmem>>, vector<1x240x400xbf16>
    %37 = vector.shape_cast %36 : vector<1x240x400xbf16> to vector<240x400xbf16>
    %cst_43 = arith.constant dense<0.000000e+00> : vector<8x400xf32>
    %38 = tpu.matmul %35, %37, %cst_43 {dimension_numbers = #tpu.dot_dimension_numbers<[1], [0], [0], [1], [0, 0, 1, 1], [], []>} : vector<8x240xbf16>, vector<240x400xbf16>, vector<8x400xf32> -> vector<8x400xf32>
    %39 = arith.addf %27, %38 : vector<8x400xf32>
    %c4 = arith.constant 4 : index
    %c0_44 = arith.constant 0 : index
    %c0_45 = arith.constant 0 : index
    %40 = vector.load %arg1[%c4, %c0_44, %c0_45] : memref<6x8x240xbf16, #tpu.memory_space<vmem>>, vector<1x8x240xbf16>
    %41 = vector.shape_cast %40 : vector<1x8x240xbf16> to vector<8x240xbf16>
    %c3_46 = arith.constant 3 : index
    %c0_47 = arith.constant 0 : index
    %c0_48 = arith.constant 0 : index
    %42 = vector.load %arg2[%c3_46, %c0_47, %c0_48] : memref<5x240x400xbf16, #tpu.memory_space<vmem>>, vector<1x240x400xbf16>
    %43 = vector.shape_cast %42 : vector<1x240x400xbf16> to vector<240x400xbf16>
    %cst_49 = arith.constant dense<0.000000e+00> : vector<8x400xf32>
    %44 = tpu.matmul %41, %43, %cst_49 {dimension_numbers = #tpu.dot_dimension_numbers<[1], [0], [0], [1], [0, 0, 1, 1], [], []>} : vector<8x240xbf16>, vector<240x400xbf16>, vector<8x400xf32> -> vector<8x400xf32>
    %45 = arith.addf %33, %44 : vector<8x400xf32>
    %c4_50 = arith.constant 4 : index
    %c0_51 = arith.constant 0 : index
    %c0_52 = arith.constant 0 : index
    %46 = vector.load %arg1[%c4_50, %c0_51, %c0_52] : memref<6x8x240xbf16, #tpu.memory_space<vmem>>, vector<1x8x240xbf16>
    %47 = vector.shape_cast %46 : vector<1x8x240xbf16> to vector<8x240xbf16>
    %c4_53 = arith.constant 4 : index
    %c0_54 = arith.constant 0 : index
    %c0_55 = arith.constant 0 : index
    %48 = vector.load %arg2[%c4_53, %c0_54, %c0_55] : memref<5x240x400xbf16, #tpu.memory_space<vmem>>, vector<1x240x400xbf16>
    %49 = vector.shape_cast %48 : vector<1x240x400xbf16> to vector<240x400xbf16>
    %cst_56 = arith.constant dense<0.000000e+00> : vector<8x400xf32>
    %50 = tpu.matmul %47, %49, %cst_56 {dimension_numbers = #tpu.dot_dimension_numbers<[1], [0], [0], [1], [0, 0, 1, 1], [], []>} : vector<8x240xbf16>, vector<240x400xbf16>, vector<8x400xf32> -> vector<8x400xf32>
    %51 = arith.addf %39, %50 : vector<8x400xf32>
    %c5 = arith.constant 5 : index
    %c0_57 = arith.constant 0 : index
    %c0_58 = arith.constant 0 : index
    %52 = vector.load %arg1[%c5, %c0_57, %c0_58] : memref<6x8x240xbf16, #tpu.memory_space<vmem>>, vector<1x8x240xbf16>
    %53 = vector.shape_cast %52 : vector<1x8x240xbf16> to vector<8x240xbf16>
    %c4_59 = arith.constant 4 : index
    %c0_60 = arith.constant 0 : index
    %c0_61 = arith.constant 0 : index
    %54 = vector.load %arg2[%c4_59, %c0_60, %c0_61] : memref<5x240x400xbf16, #tpu.memory_space<vmem>>, vector<1x240x400xbf16>
    %55 = vector.shape_cast %54 : vector<1x240x400xbf16> to vector<240x400xbf16>
    %cst_62 = arith.constant dense<0.000000e+00> : vector<8x400xf32>
    %56 = tpu.matmul %53, %55, %cst_62 {dimension_numbers = #tpu.dot_dimension_numbers<[1], [0], [0], [1], [0, 0, 1, 1], [], []>} : vector<8x240xbf16>, vector<240x400xbf16>, vector<8x400xf32> -> vector<8x400xf32>
    %57 = arith.addf %45, %56 : vector<8x400xf32>
    %58 = arith.maximumf %51, %57 : vector<8x400xf32>
    %59 = vector.extract_strided_slice %58 {offsets = [0, 0], sizes = [8, 200], strides = [1, 1]} : vector<8x400xf32> to vector<8x200xf32>
    %60 = vector.extract_strided_slice %58 {offsets = [0, 200], sizes = [8, 200], strides = [1, 1]} : vector<8x400xf32> to vector<8x200xf32>
    %61 = arith.maximumf %59, %60 : vector<8x200xf32>
    %c0_63 = arith.constant 0 : index
    %c0_64 = arith.constant 0 : index
    %62 = vector.load %arg3[%c0_63, %c0_64] : memref<1x200xf32, #tpu.memory_space<vmem>>, vector<1x200xf32>
    %63 = vector.broadcast %62 : vector<1x200xf32> to vector<8x200xf32>
    %64 = arith.addf %61, %63 : vector<8x200xf32>
    %cst_65 = arith.constant 0.000000e+00 : f32
    %65 = vector.broadcast %cst_65 : f32 to vector<8x200xf32>
    %66 = arith.maximumf %64, %65 : vector<8x200xf32>
    %67 = arith.truncf %66 : vector<8x200xf32> to vector<8x200xbf16>
    %c0_66 = arith.constant 0 : index
    %c0_67 = arith.constant 0 : index
    %68 = vector.load %arg4[%c0_66, %c0_67] : memref<8x200xbf16, #tpu.memory_space<vmem>>, vector<8x200xbf16>
    tpu.vector_store %arg4[%c0_66, %c0_67], %67 {strides = array<i32>} : memref<8x200xbf16, #tpu.memory_space<vmem>>, vector<8x200xbf16>,
    return
  }
  func.func @transform_0(%arg0: i32) -> (i32, i32, i32) {
    %c0_i32 = arith.constant 0 : i32
    %c0_i32_0 = arith.constant 0 : i32
    %c0_i32_1 = arith.constant 0 : i32
    return %c0_i32, %arg0, %c0_i32_0 : i32, i32, i32
  }
  func.func @transform_1(%arg0: i32) -> (i32, i32, i32) {
    %c0_i32 = arith.constant 0 : i32
    %c0_i32_0 = arith.constant 0 : i32
    %c0_i32_1 = arith.constant 0 : i32
    %c0_i32_2 = arith.constant 0 : i32
    return %c0_i32, %c0_i32_0, %c0_i32_1 : i32, i32, i32
  }
  func.func @transform_2(%arg0: i32) -> (i32, i32) {
    %c0_i32 = arith.constant 0 : i32
    %c0_i32_0 = arith.constant 0 : i32
    %c0_i32_1 = arith.constant 0 : i32
    return %c0_i32, %c0_i32_0 : i32, i32
  }
  func.func @transform_3(%arg0: i32) -> (i32, i32) {
    %c0_i32 = arith.constant 0 : i32
    %c0_i32_0 = arith.constant 0 : i32
    return %arg0, %c0_i32 : i32, i32
  }
}

module attributes {stable_mosaic.version = 11 : i64} {
  func.func @_mlp_head_kernel(%arg0: i32, %arg1: memref<2x800xbf16, #tpu.memory_space<vmem>>, %arg2: memref<800x512xbf16, #tpu.memory_space<vmem>>, %arg3: memref<1x512xf32, #tpu.memory_space<vmem>>, %arg4: memref<512x10xbf16, #tpu.memory_space<vmem>>, %arg5: memref<1x10xf32, #tpu.memory_space<vmem>>, %arg6: memref<2x10xf32, #tpu.memory_space<vmem>>) attributes {dimension_semantics = [#tpu.dimension_semantics<parallel>], iteration_bounds = array<i64: 1>, scalar_prefetch = 0 : i64, scratch_operands = 0 : i64, tpu.core_type = #tpu.core_type<tc>, window_params = [{transform_indices = @transform_0, window_bounds = array<i64: 2, 800>}, {pipeline_mode = #tpu.pipeline_mode<synchronous>, transform_indices = @transform_1, window_bounds = array<i64: 800, 512>}, {pipeline_mode = #tpu.pipeline_mode<synchronous>, transform_indices = @transform_2, window_bounds = array<i64: 1, 512>}, {pipeline_mode = #tpu.pipeline_mode<synchronous>, transform_indices = @transform_3, window_bounds = array<i64: 512, 10>}, {pipeline_mode = #tpu.pipeline_mode<synchronous>, transform_indices = @transform_4, window_bounds = array<i64: 1, 10>}, {transform_indices = @transform_5, window_bounds = array<i64: 2, 10>}]} {
    %c0 = arith.constant 0 : index
    %c0_0 = arith.constant 0 : index
    %0 = vector.load %arg1[%c0, %c0_0] : memref<2x800xbf16, #tpu.memory_space<vmem>>, vector<2x800xbf16>
    %c0_1 = arith.constant 0 : index
    %c0_2 = arith.constant 0 : index
    %1 = vector.load %arg2[%c0_1, %c0_2] : memref<800x512xbf16, #tpu.memory_space<vmem>>, vector<800x512xbf16>
    %cst = arith.constant dense<0.000000e+00> : vector<2x512xf32>
    %2 = tpu.matmul %0, %1, %cst {dimension_numbers = #tpu.dot_dimension_numbers<[1], [0], [0], [1], [0, 0, 1, 1], [], []>} : vector<2x800xbf16>, vector<800x512xbf16>, vector<2x512xf32> -> vector<2x512xf32>
    %c0_3 = arith.constant 0 : index
    %c0_4 = arith.constant 0 : index
    %3 = vector.load %arg3[%c0_3, %c0_4] : memref<1x512xf32, #tpu.memory_space<vmem>>, vector<1x512xf32>
    %4 = vector.broadcast %3 : vector<1x512xf32> to vector<2x512xf32>
    %5 = arith.addf %2, %4 : vector<2x512xf32>
    %cst_5 = arith.constant 0.000000e+00 : f32
    %6 = vector.broadcast %cst_5 : f32 to vector<2x512xf32>
    %7 = arith.maximumf %5, %6 : vector<2x512xf32>
    %8 = arith.truncf %7 : vector<2x512xf32> to vector<2x512xbf16>
    %c0_6 = arith.constant 0 : index
    %c0_7 = arith.constant 0 : index
    %9 = vector.load %arg4[%c0_6, %c0_7] : memref<512x10xbf16, #tpu.memory_space<vmem>>, vector<512x10xbf16>
    %cst_8 = arith.constant dense<0.000000e+00> : vector<2x10xf32>
    %10 = tpu.matmul %8, %9, %cst_8 {dimension_numbers = #tpu.dot_dimension_numbers<[1], [0], [0], [1], [0, 0, 1, 1], [], []>} : vector<2x512xbf16>, vector<512x10xbf16>, vector<2x10xf32> -> vector<2x10xf32>
    %c0_9 = arith.constant 0 : index
    %c0_10 = arith.constant 0 : index
    %11 = vector.load %arg5[%c0_9, %c0_10] : memref<1x10xf32, #tpu.memory_space<vmem>>, vector<1x10xf32>
    %12 = vector.broadcast %11 : vector<1x10xf32> to vector<2x10xf32>
    %13 = arith.addf %10, %12 : vector<2x10xf32>
    %c0_11 = arith.constant 0 : index
    %c0_12 = arith.constant 0 : index
    %14 = vector.load %arg6[%c0_11, %c0_12] : memref<2x10xf32, #tpu.memory_space<vmem>>, vector<2x10xf32>
    tpu.vector_store %arg6[%c0_11, %c0_12], %13 {strides = array<i32>} : memref<2x10xf32, #tpu.memory_space<vmem>>, vector<2x10xf32>,
    return
  }
  func.func @transform_0(%arg0: i32) -> (i32, i32) {
    %c0_i32 = arith.constant 0 : i32
    %c0_i32_0 = arith.constant 0 : i32
    return %arg0, %c0_i32 : i32, i32
  }
  func.func @transform_1(%arg0: i32) -> (i32, i32) {
    %c0_i32 = arith.constant 0 : i32
    %c0_i32_0 = arith.constant 0 : i32
    %c0_i32_1 = arith.constant 0 : i32
    return %c0_i32, %c0_i32_0 : i32, i32
  }
  func.func @transform_2(%arg0: i32) -> (i32, i32) {
    %c0_i32 = arith.constant 0 : i32
    %c0_i32_0 = arith.constant 0 : i32
    %c0_i32_1 = arith.constant 0 : i32
    return %c0_i32, %c0_i32_0 : i32, i32
  }
  func.func @transform_3(%arg0: i32) -> (i32, i32) {
    %c0_i32 = arith.constant 0 : i32
    %c0_i32_0 = arith.constant 0 : i32
    %c0_i32_1 = arith.constant 0 : i32
    return %c0_i32, %c0_i32_0 : i32, i32
  }
  func.func @transform_4(%arg0: i32) -> (i32, i32) {
    %c0_i32 = arith.constant 0 : i32
    %c0_i32_0 = arith.constant 0 : i32
    %c0_i32_1 = arith.constant 0 : i32
    return %c0_i32, %c0_i32_0 : i32, i32
  }
  func.func @transform_5(%arg0: i32) -> (i32, i32) {
    %c0_i32 = arith.constant 0 : i32
    %c0_i32_0 = arith.constant 0 : i32
    return %arg0, %c0_i32 : i32, i32
  }
}

</mosaic_0001>

<llo_original>
// kernel: net_forward.3
$region0: #{net_forward.3}
  #allocation0 [shape = 'u32[]', space=smem, size = 0x4, offset = 0x4, fixed_abs, tag = 'smem constant byte address 0x4 - core index']
  #allocation1 [shape = 'u32[144,128]{1,0:T(1,128)}', space=vmem, size = 0x12000, scoped, tag = 'internal scratch']
  %s0 = inlined_call_operand.vmem [shape: bf16[6,24,28], index: 0, kind: input, shape index: {}]
  %s1 = inlined_call_operand.hbm [shape: bf16[5,28,480], index: 1, kind: input, shape index: {}]
  %s2 = inlined_call_operand.hbm [shape: f32[1,240], index: 2, kind: input, shape index: {}]
  %s3 = inlined_call_operand.vmem [shape: bf16[24,240], index: 3, kind: output, shape index: {}]
  %s4 = sld [smem:[#allocation0]]
  $region30: #{net_forward.3} parent=0
    _
  %s6 = ssub.s32 1, %s4
  %s7 = scalar_select 0, %s6, %s4
  $region1: #{net_forward.3} parent=0
    #allocation2 [shape = 'u8[163840]{0}', space=vmem, size = 0x28000, scoped, tag = 'input window, operand 1, single buffered']
    #allocation3 [shape = 's32[1]{0}', space=sflag, size = 0x4, scoped, tag = 'scoped memory for net_forward.3']
    #allocation4 [shape = 'u8[1024]{0}', space=vmem, size = 0x400, scoped, tag = 'input window, operand 2, single buffered']
    #allocation5 [shape = 's32[1]{0}', space=sflag, size = 0x4, scoped, tag = 'scoped memory for net_forward.3']
    %8 = vsyncpa [#allocation3], 0
    %9 = vsyncpa [#allocation5], 0
    // Predicated region
    $region2: #{net_forward.3} parent=1 // pred_check
      _
    $region3: #{net_forward.3} parent=1 // pred_check_branch
      %11 = sbr.rel (0) target = $region5
    $region4: #{net_forward.3} parent=1 // pred_region
      _
    $region5: #{net_forward.3} parent=1 // pred_fallthru
      _
    // Predicated region
    $region6: #{net_forward.3} parent=1 // pred_check
      _
    $region7: #{net_forward.3} parent=1 // pred_check_branch
      %13 = sbr.rel (0) target = $region9
    $region8: #{net_forward.3} parent=1 // pred_region
      %s15 = ssub.s32 5120, 5120
      %16 = vsyncadd [#allocation3], %s15
      %s17 = sshll.u32 [#allocation2], 4
      %s18 = int_to_ptr.vmem [resolvable:$true] %s17
      %23 = dma.hbm_to_vmem [thread:$0]  %s1, 5120, %s18, [#allocation3], 256, 256, 16
    $region9: #{net_forward.3} parent=1 // pred_fallthru
      _
    // Predicated region
    $region10: #{net_forward.3} parent=1 // pred_check
      _
    $region11: #{net_forward.3} parent=1 // pred_check_branch
      %25 = sbr.rel (0) target = $region13
    $region12: #{net_forward.3} parent=1 // pred_region
      %s27 = ssub.s32 32, 32
      %28 = vsyncadd [#allocation5], %s27
      %s30 = sshll.u32 [#allocation4], 4
      %s31 = int_to_ptr.vmem [resolvable:$true] %s30
      %33 = dma.hbm_to_vmem [thread:$0]  %s2, 32, %s31, [#allocation5]
    $region13: #{net_forward.3} parent=1 // pred_fallthru
      _
    // Predicated region
    $region14: #{net_forward.3} parent=1 // pred_check
      _
    $region15: #{net_forward.3} parent=1 // pred_check_branch
      %35 = sbr.rel (0) target = $region17
    $region16: #{net_forward.3} parent=1 // pred_region
      %36 = dma.done [#allocation3], 5120
    $region17: #{net_forward.3} parent=1 // pred_fallthru
      _
    // Predicated region
    $region18: #{net_forward.3} parent=1 // pred_check
      _
    $region19: #{net_forward.3} parent=1 // pred_check_branch
      %38 = sbr.rel (0) target = $region21
    $region20: #{net_forward.3} parent=1 // pred_region
      %39 = dma.done [#allocation5], 32
    $region21: #{net_forward.3} parent=1 // pred_fallthru
      _
    %v41 = vld [vmem:[%s0] sm:$0xf]
    %v42 = vld [vmem:[%s0 + $0x4] sm:$0xf]
    %v43 = vld [vmem:[%s0 + $0x8] sm:$0xf]
    %v44 = vld [vmem:[#allocation2] sm:$0xff]
    %v45 = vld [vmem:[#allocation2 + $0x8] sm:$0xff]
    %v46 = vld [vmem:[#allocation2 + $0x10] sm:$0xff]
    %v47 = vld [vmem:[#allocation2 + $0x18] sm:$0xff]
    %v48 = vld [vmem:[#allocation2 + $0x20] sm:$0xff]
    %v49 = vld [vmem:[#allocation2 + $0x28] sm:$0xff]
    %v50 = vld [vmem:[#allocation2 + $0x30] sm:$0x33]
    %v51 = vld [vmem:[#allocation2 + $0x38] sm:$0x33]
    %s52 = scalar_lea.vmem %s0, 12
    %v53 = vld [vmem:[%s52] sm:$0xf]
    %v54 = vld [vmem:[%s52 + $0x4] sm:$0xf]
    %v55 = vld [vmem:[%s52 + $0x8] sm:$0xf]
    %s56 = scalar_lea.vmem [#allocation2], 64
    %v57 = vld [vmem:[%s56] sm:$0xff]
    %v58 = vld [vmem:[%s56 + $0x8] sm:$0xff]
    %v59 = vld [vmem:[%s56 + $0x10] sm:$0xff]
    %v60 = vld [vmem:[%s56 + $0x18] sm:$0xff]
    %v61 = vld [vmem:[%s56 + $0x20] sm:$0xff]
    %v62 = vld [vmem:[%s56 + $0x28] sm:$0xff]
    %v63 = vld [vmem:[%s56 + $0x30] sm:$0x33]
    %v64 = vld [vmem:[%s56 + $0x38] sm:$0x33]
    %v68 = vunpack.c.l.b16 %v53
    %v69 = vunpack.c.l.b16 %v54
    %v70 = vunpack.c.l.b16 %v55
    %v71 = vpack.c.b16 %v69, %v68
    %v72 = vpack.c.b16 %v70, %v70
    %v81 = vunpack.c.l.b16 %v57
    %v82 = vunpack.c.h.b16 %v57
    %v83 = vunpack.c.l.b16 %v58
    %v84 = vunpack.c.h.b16 %v58
    %v85 = vunpack.c.l.b16 %v59
    %v86 = vunpack.c.h.b16 %v59
    %v87 = vunpack.c.l.b16 %v60
    %v88 = vunpack.c.h.b16 %v60
    %v89 = vunpack.c.l.b16 %v61
    %v90 = vunpack.c.h.b16 %v61
    %v91 = vunpack.c.l.b16 %v62
    %v92 = vunpack.c.h.b16 %v62
    %v93 = vunpack.c.l.b16 %v63
    %v94 = vunpack.c.h.b16 %v63
    %v95 = vunpack.c.l.b16 %v64
    %v96 = vunpack.c.h.b16 %v64
    %v97 = vpack.c.b16 %v85, %v81
    %v98 = vpack.c.b16 %v86, %v82
    %v99 = vpack.c.b16 %v87, %v83
    %v100 = vpack.c.b16 %v88, %v84
    %v101 = vpack.c.b16 %v93, %v89
    %v102 = vpack.c.b16 %v94, %v90
    %v103 = vpack.c.b16 %v95, %v91
    %v104 = vpack.c.b16 %v96, %v92
    %vm109 = vcmask 228352
    %v111 = vsel %vm109, %v71, 0
    %v114 = vsel %vm109, %v72, 0
    %vm116 = vcmask 1045504
    %v118 = vsel %vm116, %v101, 0
    %v121 = vsel %vm116, %v102, 0
    %v124 = vsel %vm116, %v103, 0
    %v127 = vsel %vm116, %v104, 0
    %129 = vmatprep.subr.bf16.mxu0 %v98
    %130 = vmatpush1.bf16.msra.mxu0 %v97
    %131 = vmatprep.subr.bf16.mxu0 %v121
    %132 = vmatpush1.bf16.msra.mxu0 %v118
    %133 = vmatprep.subr.bf16.mxu0 0
    %134 = vmatpush1.bf16.msra.mxu0 0
    %135 = vmatprep.subr.bf16.mxu0 0
    %136 = vmatpush1.bf16.msra.mxu0 0
    %137 = vmatprep.subr.bf16.mxu0 0
    %138 = vmatpush1.bf16.msra.mxu0 0
    %139 = vmatprep.subr.bf16.mxu0 0
    %140 = vmatpush1.bf16.msra.mxu0 0
    %141 = vmatprep.subr.bf16.mxu0 0
    %142 = vmatpush1.bf16.msra.mxu0 0
    %143 = vmatprep.subr.bf16.mxu0 0
    %144 = vmatpush1.bf16.msra.mxu0 0
    %145 = vmatprep.subr.bf16.mxu0 0
    %146 = vmatpush1.bf16.msra.mxu0 0
    %147 = vmatprep.subr.bf16.mxu0 0
    %148 = vmatpush1.bf16.msra.mxu0 0
    %149 = vmatprep.subr.bf16.mxu0 0
    %150 = vmatpush1.bf16.msra.mxu0 0
    %151 = vmatprep.subr.bf16.mxu0 0
    %152 = vmatpush1.bf16.msra.mxu0 0
    %153 = vmatprep.subr.bf16.mxu0 0
    %154 = vmatpush1.bf16.msra.mxu0 0
    %155 = vmatprep.subr.bf16.mxu0 0
    %156 = vmatpush1.bf16.msra.mxu0 0
    %157 = vmatprep.subr.bf16.mxu0 0
    %158 = vmatpush1.bf16.msra.mxu0 0
    %159 = vmatprep.subr.bf16.mxu0 0
    %160 = vmatpush1.bf16.msra.mxu0 0
    %161 = vmatprep.mubr.bf16.mxu0 0
    %162 = vmatmul.mubr.bf16.gmra.mrb[0].mxu0 %v111
    %v163 = vpop.f32.mrb[0].mxu0
    %v164 = vadd.f32 0.0, %v163
    %v165 = vpop.f32.mrb[0].mxu0
    %v166 = vadd.f32 0.0, %v165
    %v167 = vpop.f32.mrb[0].mxu0
    %v168 = vadd.f32 0.0, %v167
    %v169 = vpop.f32.mrb[0].mxu0
    %v170 = vadd.f32 0.0, %v169
    %171 = vmatprep.mubr.bf16.mxu0 0
    %172 = vmatmul.mubr.bf16.gmra.mrb[0].mxu0 %v114
    %v173 = vpop.f32.mrb[0].mxu0
    %v174 = vadd.f32 0.0, %v173
    %v175 = vpop.f32.mrb[0].mxu0
    %v176 = vadd.f32 0.0, %v175
    %v177 = vpop.f32.mrb[0].mxu0
    %v178 = vpop.f32.mrb[0].mxu0
    %179 = vdwg.mxu0
    %180 = vmatprep.subr.bf16.mxu0 %v100
    %181 = vmatpush1.bf16.msra.mxu0 %v99
    %182 = vmatprep.subr.bf16.mxu0 %v127
    %183 = vmatpush1.bf16.msra.mxu0 %v124
    %184 = vmatprep.subr.bf16.mxu0 0
    %185 = vmatpush1.bf16.msra.mxu0 0
    %186 = vmatprep.subr.bf16.mxu0 0
    %187 = vmatpush1.bf16.msra.mxu0 0
    %188 = vmatprep.subr.bf16.mxu0 0
    %189 = vmatpush1.bf16.msra.mxu0 0
    %190 = vmatprep.subr.bf16.mxu0 0
    %191 = vmatpush1.bf16.msra.mxu0 0
    %192 = vmatprep.subr.bf16.mxu0 0
    %193 = vmatpush1.bf16.msra.mxu0 0
    %194 = vmatprep.subr.bf16.mxu0 0
    %195 = vmatpush1.bf16.msra.mxu0 0
    %196 = vmatprep.subr.bf16.mxu0 0
    %197 = vmatpush1.bf16.msra.mxu0 0
    %198 = vmatprep.subr.bf16.mxu0 0
    %199 = vmatpush1.bf16.msra.mxu0 0
    %200 = vmatprep.subr.bf16.mxu0 0
    %201 = vmatpush1.bf16.msra.mxu0 0
    %202 = vmatprep.subr.bf16.mxu0 0
    %203 = vmatpush1.bf16.msra.mxu0 0
    %204 = vmatprep.subr.bf16.mxu0 0
    %205 = vmatpush1.bf16.msra.mxu0 0
    %206 = vmatprep.subr.bf16.mxu0 0
    %207 = vmatpush1.bf16.msra.mxu0 0
    %208 = vmatprep.subr.bf16.mxu0 0
    %209 = vmatpush1.bf16.msra.mxu0 0
    %210 = vmatprep.subr.bf16.mxu0 0
    %211 = vmatpush1.bf16.msra.mxu0 0
    %212 = vmatprep.mubr.bf16.mxu0 0
    %213 = vmatmul.mubr.bf16.gmra.mrb[0].mxu0 %v111
    %v214 = vpop.f32.mrb[0].mxu0
    %v215 = vadd.f32 0.0, %v214
    %v216 = vpop.f32.mrb[0].mxu0
    %v217 = vadd.f32 0.0, %v216
    %v218 = vpop.f32.mrb[0].mxu0
    %v219 = vadd.f32 0.0, %v218
    %v220 = vpop.f32.mrb[0].mxu0
    %v221 = vadd.f32 0.0, %v220
    %222 = vmatprep.mubr.bf16.mxu0 0
    %223 = vmatmul.mubr.bf16.gmra.mrb[0].mxu0 %v114
    %v224 = vpop.f32.mrb[0].mxu0
    %v225 = vadd.f32 0.0, %v224
    %v226 = vpop.f32.mrb[0].mxu0
    %v227 = vadd.f32 0.0, %v226
    %v228 = vpop.f32.mrb[0].mxu0
    %v229 = vpop.f32.mrb[0].mxu0
    %230 = vdwg.mxu0
    %v234 = vunpack.c.l.b16 %v41
    %v235 = vunpack.c.l.b16 %v42
    %v236 = vunpack.c.l.b16 %v43
    %v237 = vpack.c.b16 %v235, %v234
    %v238 = vpack.c.b16 %v236, %v236
    %v247 = vunpack.c.l.b16 %v44
    %v248 = vunpack.c.h.b16 %v44
    %v249 = vunpack.c.l.b16 %v45
    %v250 = vunpack.c.h.b16 %v45
    %v251 = vunpack.c.l.b16 %v46
    %v252 = vunpack.c.h.b16 %v46
    %v253 = vunpack.c.l.b16 %v47
    %v254 = vunpack.c.h.b16 %v47
    %v255 = vunpack.c.l.b16 %v48
    %v256 = vunpack.c.h.b16 %v48
    %v257 = vunpack.c.l.b16 %v49
    %v258 = vunpack.c.h.b16 %v49
    %v259 = vunpack.c.l.b16 %v50
    %v260 = vunpack.c.h.b16 %v50
    %v261 = vunpack.c.l.b16 %v51
    %v262 = vunpack.c.h.b16 %v51
    %v263 = vpack.c.b16 %v251, %v247
    %v264 = vpack.c.b16 %v252, %v248
    %v265 = vpack.c.b16 %v253, %v249
    %v266 = vpack.c.b16 %v254, %v250
    %v267 = vpack.c.b16 %v259, %v255
    %v268 = vpack.c.b16 %v260, %v256
    %v269 = vpack.c.b16 %v261, %v257
    %v270 = vpack.c.b16 %v262, %v258
    %v276 = vsel %vm109, %v237, 0
    %v279 = vsel %vm109, %v238, 0
    %v282 = vsel %vm116, %v267, 0
    %v285 = vsel %vm116, %v268, 0
    %v288 = vsel %vm116, %v269, 0
    %v291 = vsel %vm116, %v270, 0
    %293 = vmatprep.subr.bf16.mxu0 %v264
    %294 = vmatpush1.bf16.msra.mxu0 %v263
    %295 = vmatprep.subr.bf16.mxu0 %v285
    %296 = vmatpush1.bf16.msra.mxu0 %v282
    %297 = vmatprep.subr.bf16.mxu0 0
    %298 = vmatpush1.bf16.msra.mxu0 0
    %299 = vmatprep.subr.bf16.mxu0 0
    %300 = vmatpush1.bf16.msra.mxu0 0
    %301 = vmatprep.subr.bf16.mxu0 0
    %302 = vmatpush1.bf16.msra.mxu0 0
    %303 = vmatprep.subr.bf16.mxu0 0
    %304 = vmatpush1.bf16.msra.mxu0 0
    %305 = vmatprep.subr.bf16.mxu0 0
    %306 = vmatpush1.bf16.msra.mxu0 0
    %307 = vmatprep.subr.bf16.mxu0 0
    %308 = vmatpush1.bf16.msra.mxu0 0
    %309 = vmatprep.subr.bf16.mxu0 0
    %310 = vmatpush1.bf16.msra.mxu0 0
    %311 = vmatprep.subr.bf16.mxu0 0
    %312 = vmatpush1.bf16.msra.mxu0 0
    %313 = vmatprep.subr.bf16.mxu0 0
    %314 = vmatpush1.bf16.msra.mxu0 0
    %315 = vmatprep.subr.bf16.mxu0 0
    %316 = vmatpush1.bf16.msra.mxu0 0
    %317 = vmatprep.subr.bf16.mxu0 0
    %318 = vmatpush1.bf16.msra.mxu0 0
    %319 = vmatprep.subr.bf16.mxu0 0
    %320 = vmatpush1.bf16.msra.mxu0 0
    %321 = vmatprep.subr.bf16.mxu0 0
    %322 = vmatpush1.bf16.msra.mxu0 0
    %323 = vmatprep.subr.bf16.mxu0 0
    %324 = vmatpush1.bf16.msra.mxu0 0
    %325 = vmatprep.mubr.bf16.mxu0 0
    %326 = vmatmul.mubr.bf16.gmra.mrb[0].mxu0 %v276
    %v327 = vpop.f32.mrb[0].mxu0
    %v328 = vadd.f32 %v164, %v327
    %v329 = vpop.f32.mrb[0].mxu0
    %v330 = vadd.f32 %v166, %v329
    %v331 = vpop.f32.mrb[0].mxu0
    %v332 = vadd.f32 %v168, %v331
    %v333 = vpop.f32.mrb[0].mxu0
    %v334 = vadd.f32 %v170, %v333
    %335 = vmatprep.mubr.bf16.mxu0 0
    %336 = vmatmul.mubr.bf16.gmra.mrb[0].mxu0 %v279
    %v337 = vpop.f32.mrb[0].mxu0
    %v338 = vadd.f32 %v174, %v337
    %v339 = vpop.f32.mrb[0].mxu0
    %v340 = vadd.f32 %v176, %v339
    %v341 = vpop.f32.mrb[0].mxu0
    %v342 = vpop.f32.mrb[0].mxu0
    %343 = vdwg.mxu0
    %344 = vmatprep.subr.bf16.mxu0 %v266
    %345 = vmatpush1.bf16.msra.mxu0 %v265
    %346 = vmatprep.subr.bf16.mxu0 %v291
    %347 = vmatpush1.bf16.msra.mxu0 %v288
    %348 = vmatprep.subr.bf16.mxu0 0
    %349 = vmatpush1.bf16.msra.mxu0 0
    %350 = vmatprep.subr.bf16.mxu0 0
    %351 = vmatpush1.bf16.msra.mxu0 0
    %352 = vmatprep.subr.bf16.mxu0 0
    %353 = vmatpush1.bf16.msra.mxu0 0
    %354 = vmatprep.subr.bf16.mxu0 0
    %355 = vmatpush1.bf16.msra.mxu0 0
    %356 = vmatprep.subr.bf16.mxu0 0
    %357 = vmatpush1.bf16.msra.mxu0 0
    %358 = vmatprep.subr.bf16.mxu0 0
    %359 = vmatpush1.bf16.msra.mxu0 0
    %360 = vmatprep.subr.bf16.mxu0 0
    %361 = vmatpush1.bf16.msra.mxu0 0
    %362 = vmatprep.subr.bf16.mxu0 0
    %363 = vmatpush1.bf16.msra.mxu0 0
    %364 = vmatprep.subr.bf16.mxu0 0
    %365 = vmatpush1.bf16.msra.mxu0 0
    %366 = vmatprep.subr.bf16.mxu0 0
    %367 = vmatpush1.bf16.msra.mxu0 0
    %368 = vmatprep.subr.bf16.mxu0 0
    %369 = vmatpush1.bf16.msra.mxu0 0
    %370 = vmatprep.subr.bf16.mxu0 0
    %371 = vmatpush1.bf16.msra.mxu0 0
    %372 = vmatprep.subr.bf16.mxu0 0
    %373 = vmatpush1.bf16.msra.mxu0 0
    %374 = vmatprep.subr.bf16.mxu0 0
    %375 = vmatpush1.bf16.msra.mxu0 0
    %376 = vmatprep.mubr.bf16.mxu0 0
    %377 = vmatmul.mubr.bf16.gmra.mrb[0].mxu0 %v276
    %v378 = vpop.f32.mrb[0].mxu0
    %v379 = vadd.f32 %v215, %v378
    %v380 = vpop.f32.mrb[0].mxu0
    %v381 = vadd.f32 %v217, %v380
    %v382 = vpop.f32.mrb[0].mxu0
    %v383 = vadd.f32 %v219, %v382
    %v384 = vpop.f32.mrb[0].mxu0
    %v385 = vadd.f32 %v221, %v384
    %386 = vmatprep.mubr.bf16.mxu0 0
    %387 = vmatmul.mubr.bf16.gmra.mrb[0].mxu0 %v279
    %v388 = vpop.f32.mrb[0].mxu0
    %v389 = vadd.f32 %v225, %v388
    %v390 = vpop.f32.mrb[0].mxu0
    %v391 = vadd.f32 %v227, %v390
    %v392 = vpop.f32.mrb[0].mxu0
    %v393 = vpop.f32.mrb[0].mxu0
    %394 = vdwg.mxu0
    %s395 = scalar_lea.vmem %s0, 24
    %v396 = vld [vmem:[%s395] sm:$0xf]
    %v397 = vld [vmem:[%s395 + $0x4] sm:$0xf]
    %v398 = vld [vmem:[%s395 + $0x8] sm:$0xf]
    %v402 = vunpack.c.l.b16 %v396
    %v403 = vunpack.c.l.b16 %v397
    %v404 = vunpack.c.l.b16 %v398
    %v405 = vpack.c.b16 %v403, %v402
    %v406 = vpack.c.b16 %v404, %v404
    %v408 = vsel %vm109, %v405, 0
    %v411 = vsel %vm109, %v406, 0
    %413 = vmatprep.subr.bf16.mxu0 %v98
    %414 = vmatpush1.bf16.msra.mxu0 %v97
    %415 = vmatprep.subr.bf16.mxu0 %v121
    %416 = vmatpush1.bf16.msra.mxu0 %v118
    %417 = vmatprep.subr.bf16.mxu0 0
    %418 = vmatpush1.bf16.msra.mxu0 0
    %419 = vmatprep.subr.bf16.mxu0 0
    %420 = vmatpush1.bf16.msra.mxu0 0
    %421 = vmatprep.subr.bf16.mxu0 0
    %422 = vmatpush1.bf16.msra.mxu0 0
    %423 = vmatprep.subr.bf16.mxu0 0
    %424 = vmatpush1.bf16.msra.mxu0 0
    %425 = vmatprep.subr.bf16.mxu0 0
    %426 = vmatpush1.bf16.msra.mxu0 0
    %427 = vmatprep.subr.bf16.mxu0 0
    %428 = vmatpush1.bf16.msra.mxu0 0
    %429 = vmatprep.subr.bf16.mxu0 0
    %430 = vmatpush1.bf16.msra.mxu0 0
    %431 = vmatprep.subr.bf16.mxu0 0
    %432 = vmatpush1.bf16.msra.mxu0 0
    %433 = vmatprep.subr.bf16.mxu0 0
    %434 = vmatpush1.bf16.msra.mxu0 0
    %435 = vmatprep.subr.bf16.mxu0 0
    %436 = vmatpush1.bf16.msra.mxu0 0
    %437 = vmatprep.subr.bf16.mxu0 0
    %438 = vmatpush1.bf16.msra.mxu0 0
    %439 = vmatprep.subr.bf16.mxu0 0
    %440 = vmatpush1.bf16.msra.mxu0 0
    %441 = vmatprep.subr.bf16.mxu0 0
    %442 = vmatpush1.bf16.msra.mxu0 0
    %443 = vmatprep.subr.bf16.mxu0 0
    %444 = vmatpush1.bf16.msra.mxu0 0
    %445 = vmatprep.mubr.bf16.mxu0 0
    %446 = vmatmul.mubr.bf16.gmra.mrb[0].mxu0 %v408
    %v447 = vpop.f32.mrb[0].mxu0
    %v448 = vadd.f32 0.0, %v447
    %v449 = vpop.f32.mrb[0].mxu0
    %v450 = vadd.f32 0.0, %v449
    %v451 = vpop.f32.mrb[0].mxu0
    %v452 = vadd.f32 0.0, %v451
    %v453 = vpop.f32.mrb[0].mxu0
    %v454 = vadd.f32 0.0, %v453
    %455 = vmatprep.mubr.bf16.mxu0 0
    %456 = vmatmul.mubr.bf16.gmra.mrb[0].mxu0 %v411
    %v457 = vpop.f32.mrb[0].mxu0
    %v458 = vadd.f32 0.0, %v457
    %v459 = vpop.f32.mrb[0].mxu0
    %v460 = vadd.f32 0.0, %v459
    %v461 = vpop.f32.mrb[0].mxu0
    %v462 = vpop.f32.mrb[0].mxu0
    %463 = vdwg.mxu0
    %464 = vmatprep.subr.bf16.mxu0 %v100
    %465 = vmatpush1.bf16.msra.mxu0 %v99
    %466 = vmatprep.subr.bf16.mxu0 %v127
    %467 = vmatpush1.bf16.msra.mxu0 %v124
    %468 = vmatprep.subr.bf16.mxu0 0
    %469 = vmatpush1.bf16.msra.mxu0 0
    %470 = vmatprep.subr.bf16.mxu0 0
    %471 = vmatpush1.bf16.msra.mxu0 0
    %472 = vmatprep.subr.bf16.mxu0 0
    %473 = vmatpush1.bf16.msra.mxu0 0
    %474 = vmatprep.subr.bf16.mxu0 0
    %475 = vmatpush1.bf16.msra.mxu0 0
    %476 = vmatprep.subr.bf16.mxu0 0
    %477 = vmatpush1.bf16.msra.mxu0 0
    %478 = vmatprep.subr.bf16.mxu0 0
    %479 = vmatpush1.bf16.msra.mxu0 0
    %480 = vmatprep.subr.bf16.mxu0 0
    %481 = vmatpush1.bf16.msra.mxu0 0
    %482 = vmatprep.subr.bf16.mxu0 0
    %483 = vmatpush1.bf16.msra.mxu0 0
    %484 = vmatprep.subr.bf16.mxu0 0
    %485 = vmatpush1.bf16.msra.mxu0 0
    %486 = vmatprep.subr.bf16.mxu0 0
    %487 = vmatpush1.bf16.msra.mxu0 0
    %488 = vmatprep.subr.bf16.mxu0 0
    %489 = vmatpush1.bf16.msra.mxu0 0
    %490 = vmatprep.subr.bf16.mxu0 0
    %491 = vmatpush1.bf16.msra.mxu0 0
    %492 = vmatprep.subr.bf16.mxu0 0
    %493 = vmatpush1.bf16.msra.mxu0 0
    %494 = vmatprep.subr.bf16.mxu0 0
    %495 = vmatpush1.bf16.msra.mxu0 0
    %496 = vmatprep.mubr.bf16.mxu0 0
    %497 = vmatmul.mubr.bf16.gmra.mrb[0].mxu0 %v408
    %v498 = vpop.f32.mrb[0].mxu0
    %v499 = vadd.f32 0.0, %v498
    %v500 = vpop.f32.mrb[0].mxu0
    %v501 = vadd.f32 0.0, %v500
    %v502 = vpop.f32.mrb[0].mxu0
    %v503 = vadd.f32 0.0, %v502
    %v504 = vpop.f32.mrb[0].mxu0
    %v505 = vadd.f32 0.0, %v504
    %506 = vmatprep.mubr.bf16.mxu0 0
    %507 = vmatmul.mubr.bf16.gmra.mrb[0].mxu0 %v411
    %v508 = vpop.f32.mrb[0].mxu0
    %v509 = vadd.f32 0.0, %v508
    %v510 = vpop.f32.mrb[0].mxu0
    %v511 = vadd.f32 0.0, %v510
    %v512 = vpop.f32.mrb[0].mxu0
    %v513 = vpop.f32.mrb[0].mxu0
    %514 = vdwg.mxu0
    %515 = vmatprep.subr.bf16.mxu0 %v264
    %516 = vmatpush1.bf16.msra.mxu0 %v263
    %517 = vmatprep.subr.bf16.mxu0 %v285
    %518 = vmatpush1.bf16.msra.mxu0 %v282
    %519 = vmatprep.subr.bf16.mxu0 0
    %520 = vmatpush1.bf16.msra.mxu0 0
    %521 = vmatprep.subr.bf16.mxu0 0
    %522 = vmatpush1.bf16.msra.mxu0 0
    %523 = vmatprep.subr.bf16.mxu0 0
    %524 = vmatpush1.bf16.msra.mxu0 0
    %525 = vmatprep.subr.bf16.mxu0 0
    %526 = vmatpush1.bf16.msra.mxu0 0
    %527 = vmatprep.subr.bf16.mxu0 0
    %528 = vmatpush1.bf16.msra.mxu0 0
    %529 = vmatprep.subr.bf16.mxu0 0
    %530 = vmatpush1.bf16.msra.mxu0 0
    %531 = vmatprep.subr.bf16.mxu0 0
    %532 = vmatpush1.bf16.msra.mxu0 0
    %533 = vmatprep.subr.bf16.mxu0 0
    %534 = vmatpush1.bf16.msra.mxu0 0
    %535 = vmatprep.subr.bf16.mxu0 0
    %536 = vmatpush1.bf16.msra.mxu0 0
    %537 = vmatprep.subr.bf16.mxu0 0
    %538 = vmatpush1.bf16.msra.mxu0 0
    %539 = vmatprep.subr.bf16.mxu0 0
    %540 = vmatpush1.bf16.msra.mxu0 0
    %541 = vmatprep.subr.bf16.mxu0 0
    %542 = vmatpush1.bf16.msra.mxu0 0
    %543 = vmatprep.subr.bf16.mxu0 0
    %544 = vmatpush1.bf16.msra.mxu0 0
    %545 = vmatprep.subr.bf16.mxu0 0
    %546 = vmatpush1.bf16.msra.mxu0 0
    %547 = vmatprep.mubr.bf16.mxu0 0
    %548 = vmatmul.mubr.bf16.gmra.mrb[0].mxu0 %v111
    %v549 = vpop.f32.mrb[0].mxu0
    %v550 = vadd.f32 %v448, %v549
    %v551 = vpop.f32.mrb[0].mxu0
    %v552 = vadd.f32 %v450, %v551
    %v553 = vpop.f32.mrb[0].mxu0
    %v554 = vadd.f32 %v452, %v553
    %v555 = vpop.f32.mrb[0].mxu0
    %v556 = vadd.f32 %v454, %v555
    %557 = vmatprep.mubr.bf16.mxu0 0
    %558 = vmatmul.mubr.bf16.gmra.mrb[0].mxu0 %v114
    %v559 = vpop.f32.mrb[0].mxu0
    %v560 = vadd.f32 %v458, %v559
    %v561 = vpop.f32.mrb[0].mxu0
    %v562 = vadd.f32 %v460, %v561
    %v563 = vpop.f32.mrb[0].mxu0
    %v564 = vpop.f32.mrb[0].mxu0
    %565 = vdwg.mxu0
    %566 = vmatprep.subr.bf16.mxu0 %v266
    %567 = vmatpush1.bf16.msra.mxu0 %v265
    %568 = vmatprep.subr.bf16.mxu0 %v291
    %569 = vmatpush1.bf16.msra.mxu0 %v288
    %570 = vmatprep.subr.bf16.mxu0 0
    %571 = vmatpush1.bf16.msra.mxu0 0
    %572 = vmatprep.subr.bf16.mxu0 0
    %573 = vmatpush1.bf16.msra.mxu0 0
    %574 = vmatprep.subr.bf16.mxu0 0
    %575 = vmatpush1.bf16.msra.mxu0 0
    %576 = vmatprep.subr.bf16.mxu0 0
    %577 = vmatpush1.bf16.msra.mxu0 0
    %578 = vmatprep.subr.bf16.mxu0 0
    %579 = vmatpush1.bf16.msra.mxu0 0
    %580 = vmatprep.subr.bf16.mxu0 0
    %581 = vmatpush1.bf16.msra.mxu0 0
    %582 = vmatprep.subr.bf16.mxu0 0
    %583 = vmatpush1.bf16.msra.mxu0 0
    %584 = vmatprep.subr.bf16.mxu0 0
    %585 = vmatpush1.bf16.msra.mxu0 0
    %586 = vmatprep.subr.bf16.mxu0 0
    %587 = vmatpush1.bf16.msra.mxu0 0
    %588 = vmatprep.subr.bf16.mxu0 0
    %589 = vmatpush1.bf16.msra.mxu0 0
    %590 = vmatprep.subr.bf16.mxu0 0
    %591 = vmatpush1.bf16.msra.mxu0 0
    %592 = vmatprep.subr.bf16.mxu0 0
    %593 = vmatpush1.bf16.msra.mxu0 0
    %594 = vmatprep.subr.bf16.mxu0 0
    %595 = vmatpush1.bf16.msra.mxu0 0
    %596 = vmatprep.subr.bf16.mxu0 0
    %597 = vmatpush1.bf16.msra.mxu0 0
    %598 = vmatprep.mubr.bf16.mxu0 0
    %599 = vmatmul.mubr.bf16.gmra.mrb[0].mxu0 %v111
    %v600 = vpop.f32.mrb[0].mxu0
    %v601 = vadd.f32 %v499, %v600
    %v602 = vpop.f32.mrb[0].mxu0
    %v603 = vadd.f32 %v501, %v602
    %v604 = vpop.f32.mrb[0].mxu0
    %v605 = vadd.f32 %v503, %v604
    %v606 = vpop.f32.mrb[0].mxu0
    %v607 = vadd.f32 %v505, %v606
    %608 = vmatprep.mubr.bf16.mxu0 0
    %609 = vmatmul.mubr.bf16.gmra.mrb[0].mxu0 %v114
    %v610 = vpop.f32.mrb[0].mxu0
    %v611 = vadd.f32 %v509, %v610
    %v612 = vpop.f32.mrb[0].mxu0
    %v613 = vadd.f32 %v511, %v612
    %v614 = vpop.f32.mrb[0].mxu0
    %v615 = vpop.f32.mrb[0].mxu0
    %616 = vdwg.mxu0
    %s617 = scalar_lea.vmem [#allocation2], 128
    %v618 = vld [vmem:[%s617] sm:$0xff]
    %v619 = vld [vmem:[%s617 + $0x8] sm:$0xff]
    %v620 = vld [vmem:[%s617 + $0x10] sm:$0xff]
    %v621 = vld [vmem:[%s617 + $0x18] sm:$0xff]
    %v622 = vld [vmem:[%s617 + $0x20] sm:$0xff]
    %v623 = vld [vmem:[%s617 + $0x28] sm:$0xff]
    %v624 = vld [vmem:[%s617 + $0x30] sm:$0x33]
    %v625 = vld [vmem:[%s617 + $0x38] sm:$0x33]
    %v634 = vunpack.c.l.b16 %v618
    %v635 = vunpack.c.h.b16 %v618
    %v636 = vunpack.c.l.b16 %v619
    %v637 = vunpack.c.h.b16 %v619
    %v638 = vunpack.c.l.b16 %v620
    %v639 = vunpack.c.h.b16 %v620
    %v640 = vunpack.c.l.b16 %v621
    %v641 = vunpack.c.h.b16 %v621
    %v642 = vunpack.c.l.b16 %v622
    %v643 = vunpack.c.h.b16 %v622
    %v644 = vunpack.c.l.b16 %v623
    %v645 = vunpack.c.h.b16 %v623
    %v646 = vunpack.c.l.b16 %v624
    %v647 = vunpack.c.h.b16 %v624
    %v648 = vunpack.c.l.b16 %v625
    %v649 = vunpack.c.h.b16 %v625
    %v650 = vpack.c.b16 %v638, %v634
    %v651 = vpack.c.b16 %v639, %v635
    %v652 = vpack.c.b16 %v640, %v636
    %v653 = vpack.c.b16 %v641, %v637
    %v654 = vpack.c.b16 %v646, %v642
    %v655 = vpack.c.b16 %v647, %v643
    %v656 = vpack.c.b16 %v648, %v644
    %v657 = vpack.c.b16 %v649, %v645
    %v663 = vsel %vm116, %v654, 0
    %v666 = vsel %vm116, %v655, 0
    %v669 = vsel %vm116, %v656, 0
    %v672 = vsel %vm116, %v657, 0
    %674 = vmatprep.subr.bf16.mxu0 %v651
    %675 = vmatpush1.bf16.msra.mxu0 %v650
    %676 = vmatprep.subr.bf16.mxu0 %v666
    %677 = vmatpush1.bf16.msra.mxu0 %v663
    %678 = vmatprep.subr.bf16.mxu0 0
    %679 = vmatpush1.bf16.msra.mxu0 0
    %680 = vmatprep.subr.bf16.mxu0 0
    %681 = vmatpush1.bf16.msra.mxu0 0
    %682 = vmatprep.subr.bf16.mxu0 0
    %683 = vmatpush1.bf16.msra.mxu0 0
    %684 = vmatprep.subr.bf16.mxu0 0
    %685 = vmatpush1.bf16.msra.mxu0 0
    %686 = vmatprep.subr.bf16.mxu0 0
    %687 = vmatpush1.bf16.msra.mxu0 0
    %688 = vmatprep.subr.bf16.mxu0 0
    %689 = vmatpush1.bf16.msra.mxu0 0
    %690 = vmatprep.subr.bf16.mxu0 0
    %691 = vmatpush1.bf16.msra.mxu0 0
    %692 = vmatprep.subr.bf16.mxu0 0
    %693 = vmatpush1.bf16.msra.mxu0 0
    %694 = vmatprep.subr.bf16.mxu0 0
    %695 = vmatpush1.bf16.msra.mxu0 0
    %696 = vmatprep.subr.bf16.mxu0 0
    %697 = vmatpush1.bf16.msra.mxu0 0
    %698 = vmatprep.subr.bf16.mxu0 0
    %699 = vmatpush1.bf16.msra.mxu0 0
    %700 = vmatprep.subr.bf16.mxu0 0
    %701 = vmatpush1.bf16.msra.mxu0 0
    %702 = vmatprep.subr.bf16.mxu0 0
    %703 = vmatpush1.bf16.msra.mxu0 0
    %704 = vmatprep.subr.bf16.mxu0 0
    %705 = vmatpush1.bf16.msra.mxu0 0
    %706 = vmatprep.mubr.bf16.mxu0 0
    %707 = vmatmul.mubr.bf16.gmra.mrb[0].mxu0 %v408
    %v708 = vpop.f32.mrb[0].mxu0
    %v709 = vadd.f32 0.0, %v708
    %v710 = vpop.f32.mrb[0].mxu0
    %v711 = vadd.f32 0.0, %v710
    %v712 = vpop.f32.mrb[0].mxu0
    %v713 = vadd.f32 0.0, %v712
    %v714 = vpop.f32.mrb[0].mxu0
    %v715 = vadd.f32 0.0, %v714
    %716 = vmatprep.mubr.bf16.mxu0 0
    %717 = vmatmul.mubr.bf16.gmra.mrb[0].mxu0 %v411
    %v718 = vpop.f32.mrb[0].mxu0
    %v719 = vadd.f32 0.0, %v718
    %v720 = vpop.f32.mrb[0].mxu0
    %v721 = vadd.f32 0.0, %v720
    %v722 = vpop.f32.mrb[0].mxu0
    %v723 = vpop.f32.mrb[0].mxu0
    %724 = vdwg.mxu0
    %725 = vmatprep.subr.bf16.mxu0 %v653
    %726 = vmatpush1.bf16.msra.mxu0 %v652
    %727 = vmatprep.subr.bf16.mxu0 %v672
    %728 = vmatpush1.bf16.msra.mxu0 %v669
    %729 = vmatprep.subr.bf16.mxu0 0
    %730 = vmatpush1.bf16.msra.mxu0 0
    %731 = vmatprep.subr.bf16.mxu0 0
    %732 = vmatpush1.bf16.msra.mxu0 0
    %733 = vmatprep.subr.bf16.mxu0 0
    %734 = vmatpush1.bf16.msra.mxu0 0
    %735 = vmatprep.subr.bf16.mxu0 0
    %736 = vmatpush1.bf16.msra.mxu0 0
    %737 = vmatprep.subr.bf16.mxu0 0
    %738 = vmatpush1.bf16.msra.mxu0 0
    %739 = vmatprep.subr.bf16.mxu0 0
    %740 = vmatpush1.bf16.msra.mxu0 0
    %741 = vmatprep.subr.bf16.mxu0 0
    %742 = vmatpush1.bf16.msra.mxu0 0
    %743 = vmatprep.subr.bf16.mxu0 0
    %744 = vmatpush1.bf16.msra.mxu0 0
    %745 = vmatprep.subr.bf16.mxu0 0
    %746 = vmatpush1.bf16.msra.mxu0 0
    %747 = vmatprep.subr.bf16.mxu0 0
    %748 = vmatpush1.bf16.msra.mxu0 0
    %749 = vmatprep.subr.bf16.mxu0 0
    %750 = vmatpush1.bf16.msra.mxu0 0
    %751 = vmatprep.subr.bf16.mxu0 0
    %752 = vmatpush1.bf16.msra.mxu0 0
    %753 = vmatprep.subr.bf16.mxu0 0
    %754 = vmatpush1.bf16.msra.mxu0 0
    %755 = vmatprep.subr.bf16.mxu0 0
    %756 = vmatpush1.bf16.msra.mxu0 0
    %757 = vmatprep.mubr.bf16.mxu0 0
    %758 = vmatmul.mubr.bf16.gmra.mrb[0].mxu0 %v408
    %v759 = vpop.f32.mrb[0].mxu0
    %v760 = vadd.f32 0.0, %v759
    %v761 = vpop.f32.mrb[0].mxu0
    %v762 = vadd.f32 0.0, %v761
    %v763 = vpop.f32.mrb[0].mxu0
    %v764 = vadd.f32 0.0, %v763
    %v765 = vpop.f32.mrb[0].mxu0
    %v766 = vadd.f32 0.0, %v765
    %767 = vmatprep.mubr.bf16.mxu0 0
    %768 = vmatmul.mubr.bf16.gmra.mrb[0].mxu0 %v411
    %v769 = vpop.f32.mrb[0].mxu0
    %v770 = vadd.f32 0.0, %v769
    %v771 = vpop.f32.mrb[0].mxu0
    %v772 = vadd.f32 0.0, %v771
    %v773 = vpop.f32.mrb[0].mxu0
    %v774 = vpop.f32.mrb[0].mxu0
    %775 = vdwg.mxu0
    %v776 = vadd.f32 %v328, %v709
    %v777 = vadd.f32 %v330, %v711
    %v778 = vadd.f32 %v379, %v760
    %v779 = vadd.f32 %v381, %v762
    %v780 = vadd.f32 %v332, %v713
    %v781 = vadd.f32 %v334, %v715
    %v782 = vadd.f32 %v383, %v764
    %v783 = vadd.f32 %v385, %v766
    %v784 = vadd.f32 %v338, %v719
    %v785 = vadd.f32 %v340, %v721
    %v786 = vadd.f32 %v389, %v770
    %v787 = vadd.f32 %v391, %v772
    %s788 = scalar_lea.vmem %s0, 36
    %v789 = vld [vmem:[%s788] sm:$0xf]
    %v790 = vld [vmem:[%s788 + $0x4] sm:$0xf]
    %v791 = vld [vmem:[%s788 + $0x8] sm:$0xf]
    %v795 = vunpack.c.l.b16 %v789
    %v796 = vunpack.c.l.b16 %v790
    %v797 = vunpack.c.l.b16 %v791
    %v798 = vpack.c.b16 %v796, %v795
    %v799 = vpack.c.b16 %v797, %v797
    %v801 = vsel %vm109, %v798, 0
    %v804 = vsel %vm109, %v799, 0
    %806 = vmatprep.subr.bf16.mxu0 %v651
    %807 = vmatpush1.bf16.msra.mxu0 %v650
    %808 = vmatprep.subr.bf16.mxu0 %v666
    %809 = vmatpush1.bf16.msra.mxu0 %v663
    %810 = vmatprep.subr.bf16.mxu0 0
    %811 = vmatpush1.bf16.msra.mxu0 0
    %812 = vmatprep.subr.bf16.mxu0 0
    %813 = vmatpush1.bf16.msra.mxu0 0
    %814 = vmatprep.subr.bf16.mxu0 0
    %815 = vmatpush1.bf16.msra.mxu0 0
    %816 = vmatprep.subr.bf16.mxu0 0
    %817 = vmatpush1.bf16.msra.mxu0 0
    %818 = vmatprep.subr.bf16.mxu0 0
    %819 = vmatpush1.bf16.msra.mxu0 0
    %820 = vmatprep.subr.bf16.mxu0 0
    %821 = vmatpush1.bf16.msra.mxu0 0
    %822 = vmatprep.subr.bf16.mxu0 0
    %823 = vmatpush1.bf16.msra.mxu0 0
    %824 = vmatprep.subr.bf16.mxu0 0
    %825 = vmatpush1.bf16.msra.mxu0 0
    %826 = vmatprep.subr.bf16.mxu0 0
    %827 = vmatpush1.bf16.msra.mxu0 0
    %828 = vmatprep.subr.bf16.mxu0 0
    %829 = vmatpush1.bf16.msra.mxu0 0
    %830 = vmatprep.subr.bf16.mxu0 0
    %831 = vmatpush1.bf16.msra.mxu0 0
    %832 = vmatprep.subr.bf16.mxu0 0
    %833 = vmatpush1.bf16.msra.mxu0 0
    %834 = vmatprep.subr.bf16.mxu0 0
    %835 = vmatpush1.bf16.msra.mxu0 0
    %836 = vmatprep.subr.bf16.mxu0 0
    %837 = vmatpush1.bf16.msra.mxu0 0
    %838 = vmatprep.mubr.bf16.mxu0 0
    %839 = vmatmul.mubr.bf16.gmra.mrb[0].mxu0 %v801
    %v840 = vpop.f32.mrb[0].mxu0
    %v841 = vadd.f32 0.0, %v840
    %v842 = vpop.f32.mrb[0].mxu0
    %v843 = vadd.f32 0.0, %v842
    %v844 = vpop.f32.mrb[0].mxu0
    %v845 = vadd.f32 0.0, %v844
    %v846 = vpop.f32.mrb[0].mxu0
    %v847 = vadd.f32 0.0, %v846
    %848 = vmatprep.mubr.bf16.mxu0 0
    %849 = vmatmul.mubr.bf16.gmra.mrb[0].mxu0 %v804
    %v850 = vpop.f32.mrb[0].mxu0
    %v851 = vadd.f32 0.0, %v850
    %v852 = vpop.f32.mrb[0].mxu0
    %v853 = vadd.f32 0.0, %v852
    %v854 = vpop.f32.mrb[0].mxu0
    %v855 = vpop.f32.mrb[0].mxu0
    %856 = vdwg.mxu0
    %857 = vmatprep.subr.bf16.mxu0 %v653
    %858 = vmatpush1.bf16.msra.mxu0 %v652
    %859 = vmatprep.subr.bf16.mxu0 %v672
    %860 = vmatpush1.bf16.msra.mxu0 %v669
    %861 = vmatprep.subr.bf16.mxu0 0
    %862 = vmatpush1.bf16.msra.mxu0 0
    %863 = vmatprep.subr.bf16.mxu0 0
    %864 = vmatpush1.bf16.msra.mxu0 0
    %865 = vmatprep.subr.bf16.mxu0 0
    %866 = vmatpush1.bf16.msra.mxu0 0
    %867 = vmatprep.subr.bf16.mxu0 0
    %868 = vmatpush1.bf16.msra.mxu0 0
    %869 = vmatprep.subr.bf16.mxu0 0
    %870 = vmatpush1.bf16.msra.mxu0 0
    %871 = vmatprep.subr.bf16.mxu0 0
    %872 = vmatpush1.bf16.msra.mxu0 0
    %873 = vmatprep.subr.bf16.mxu0 0
    %874 = vmatpush1.bf16.msra.mxu0 0
    %875 = vmatprep.subr.bf16.mxu0 0
    %876 = vmatpush1.bf16.msra.mxu0 0
    %877 = vmatprep.subr.bf16.mxu0 0
    %878 = vmatpush1.bf16.msra.mxu0 0
    %879 = vmatprep.subr.bf16.mxu0 0
    %880 = vmatpush1.bf16.msra.mxu0 0
    %881 = vmatprep.subr.bf16.mxu0 0
    %882 = vmatpush1.bf16.msra.mxu0 0
    %883 = vmatprep.subr.bf16.mxu0 0
    %884 = vmatpush1.bf16.msra.mxu0 0
    %885 = vmatprep.subr.bf16.mxu0 0
    %886 = vmatpush1.bf16.msra.mxu0 0
    %887 = vmatprep.subr.bf16.mxu0 0
    %888 = vmatpush1.bf16.msra.mxu0 0
    %889 = vmatprep.mubr.bf16.mxu0 0
    %890 = vmatmul.mubr.bf16.gmra.mrb[0].mxu0 %v801
    %v891 = vpop.f32.mrb[0].mxu0
    %v892 = vadd.f32 0.0, %v891
    %v893 = vpop.f32.mrb[0].mxu0
    %v894 = vadd.f32 0.0, %v893
    %v895 = vpop.f32.mrb[0].mxu0
    %v896 = vadd.f32 0.0, %v895
    %v897 = vpop.f32.mrb[0].mxu0
    %v898 = vadd.f32 0.0, %v897
    %899 = vmatprep.mubr.bf16.mxu0 0
    %900 = vmatmul.mubr.bf16.gmra.mrb[0].mxu0 %v804
    %v901 = vpop.f32.mrb[0].mxu0
    %v902 = vadd.f32 0.0, %v901
    %v903 = vpop.f32.mrb[0].mxu0
    %v904 = vadd.f32 0.0, %v903
    %v905 = vpop.f32.mrb[0].mxu0
    %v906 = vpop.f32.mrb[0].mxu0
    %907 = vdwg.mxu0
    %v908 = vadd.f32 %v550, %v841
    %v909 = vadd.f32 %v552, %v843
    %v910 = vadd.f32 %v601, %v892
    %v911 = vadd.f32 %v603, %v894
    %v912 = vadd.f32 %v554, %v845
    %v913 = vadd.f32 %v556, %v847
    %v914 = vadd.f32 %v605, %v896
    %v915 = vadd.f32 %v607, %v898
    %v916 = vadd.f32 %v560, %v851
    %v917 = vadd.f32 %v562, %v853
    %v918 = vadd.f32 %v611, %v902
    %v919 = vadd.f32 %v613, %v904
    %s920 = scalar_lea.vmem [#allocation2], 192
    %v921 = vld [vmem:[%s920] sm:$0xff]
    %v922 = vld [vmem:[%s920 + $0x8] sm:$0xff]
    %v923 = vld [vmem:[%s920 + $0x10] sm:$0xff]
    %v924 = vld [vmem:[%s920 + $0x18] sm:$0xff]
    %v925 = vld [vmem:[%s920 + $0x20] sm:$0xff]
    %v926 = vld [vmem:[%s920 + $0x28] sm:$0xff]
    %v927 = vld [vmem:[%s920 + $0x30] sm:$0x33]
    %v928 = vld [vmem:[%s920 + $0x38] sm:$0x33]
    %v937 = vunpack.c.l.b16 %v921
    %v938 = vunpack.c.h.b16 %v921
    %v939 = vunpack.c.l.b16 %v922
    %v940 = vunpack.c.h.b16 %v922
    %v941 = vunpack.c.l.b16 %v923
    %v942 = vunpack.c.h.b16 %v923
    %v943 = vunpack.c.l.b16 %v924
    %v944 = vunpack.c.h.b16 %v924
    %v945 = vunpack.c.l.b16 %v925
    %v946 = vunpack.c.h.b16 %v925
    %v947 = vunpack.c.l.b16 %v926
    %v948 = vunpack.c.h.b16 %v926
    %v949 = vunpack.c.l.b16 %v927
    %v950 = vunpack.c.h.b16 %v927
    %v951 = vunpack.c.l.b16 %v928
    %v952 = vunpack.c.h.b16 %v928
    %v953 = vpack.c.b16 %v941, %v937
    %v954 = vpack.c.b16 %v942, %v938
    %v955 = vpack.c.b16 %v943, %v939
    %v956 = vpack.c.b16 %v944, %v940
    %v957 = vpack.c.b16 %v949, %v945
    %v958 = vpack.c.b16 %v950, %v946
    %v959 = vpack.c.b16 %v951, %v947
    %v960 = vpack.c.b16 %v952, %v948
    %v966 = vsel %vm116, %v957, 0
    %v969 = vsel %vm116, %v958, 0
    %v972 = vsel %vm116, %v959, 0
    %v975 = vsel %vm116, %v960, 0
    %977 = vmatprep.subr.bf16.mxu0 %v954
    %978 = vmatpush1.bf16.msra.mxu0 %v953
    %979 = vmatprep.subr.bf16.mxu0 %v969
    %980 = vmatpush1.bf16.msra.mxu0 %v966
    %981 = vmatprep.subr.bf16.mxu0 0
    %982 = vmatpush1.bf16.msra.mxu0 0
    %983 = vmatprep.subr.bf16.mxu0 0
    %984 = vmatpush1.bf16.msra.mxu0 0
    %985 = vmatprep.subr.bf16.mxu0 0
    %986 = vmatpush1.bf16.msra.mxu0 0
    %987 = vmatprep.subr.bf16.mxu0 0
    %988 = vmatpush1.bf16.msra.mxu0 0
    %989 = vmatprep.subr.bf16.mxu0 0
    %990 = vmatpush1.bf16.msra.mxu0 0
    %991 = vmatprep.subr.bf16.mxu0 0
    %992 = vmatpush1.bf16.msra.mxu0 0
    %993 = vmatprep.subr.bf16.mxu0 0
    %994 = vmatpush1.bf16.msra.mxu0 0
    %995 = vmatprep.subr.bf16.mxu0 0
    %996 = vmatpush1.bf16.msra.mxu0 0
    %997 = vmatprep.subr.bf16.mxu0 0
    %998 = vmatpush1.bf16.msra.mxu0 0
    %999 = vmatprep.subr.bf16.mxu0 0
    %1000 = vmatpush1.bf16.msra.mxu0 0
    %1001 = vmatprep.subr.bf16.mxu0 0
    %1002 = vmatpush1.bf16.msra.mxu0 0
    %1003 = vmatprep.subr.bf16.mxu0 0
    %1004 = vmatpush1.bf16.msra.mxu0 0
    %1005 = vmatprep.subr.bf16.mxu0 0
    %1006 = vmatpush1.bf16.msra.mxu0 0
    %1007 = vmatprep.subr.bf16.mxu0 0
    %1008 = vmatpush1.bf16.msra.mxu0 0
    %1009 = vmatprep.mubr.bf16.mxu0 0
    %1010 = vmatmul.mubr.bf16.gmra.mrb[0].mxu0 %v801
    %v1011 = vpop.f32.mrb[0].mxu0
    %v1012 = vadd.f32 0.0, %v1011
    %v1013 = vpop.f32.mrb[0].mxu0
    %v1014 = vadd.f32 0.0, %v1013
    %v1015 = vpop.f32.mrb[0].mxu0
    %v1016 = vadd.f32 0.0, %v1015
    %v1017 = vpop.f32.mrb[0].mxu0
    %v1018 = vadd.f32 0.0, %v1017
    %1019 = vmatprep.mubr.bf16.mxu0 0
    %1020 = vmatmul.mubr.bf16.gmra.mrb[0].mxu0 %v804
    %v1021 = vpop.f32.mrb[0].mxu0
    %v1022 = vadd.f32 0.0, %v1021
    %v1023 = vpop.f32.mrb[0].mxu0
    %v1024 = vadd.f32 0.0, %v1023
    %v1025 = vpop.f32.mrb[0].mxu0
    %v1026 = vpop.f32.mrb[0].mxu0
    %1027 = vdwg.mxu0
    %1028 = vmatprep.subr.bf16.mxu0 %v956
    %1029 = vmatpush1.bf16.msra.mxu0 %v955
    %1030 = vmatprep.subr.bf16.mxu0 %v975
    %1031 = vmatpush1.bf16.msra.mxu0 %v972
    %1032 = vmatprep.subr.bf16.mxu0 0
    %1033 = vmatpush1.bf16.msra.mxu0 0
    %1034 = vmatprep.subr.bf16.mxu0 0
    %1035 = vmatpush1.bf16.msra.mxu0 0
    %1036 = vmatprep.subr.bf16.mxu0 0
    %1037 = vmatpush1.bf16.msra.mxu0 0
    %1038 = vmatprep.subr.bf16.mxu0 0
    %1039 = vmatpush1.bf16.msra.mxu0 0
    %1040 = vmatprep.subr.bf16.mxu0 0
    %1041 = vmatpush1.bf16.msra.mxu0 0
    %1042 = vmatprep.subr.bf16.mxu0 0
    %1043 = vmatpush1.bf16.msra.mxu0 0
    %1044 = vmatprep.subr.bf16.mxu0 0
    %1045 = vmatpush1.bf16.msra.mxu0 0
    %1046 = vmatprep.subr.bf16.mxu0 0
    %1047 = vmatpush1.bf16.msra.mxu0 0
    %1048 = vmatprep.subr.bf16.mxu0 0
    %1049 = vmatpush1.bf16.msra.mxu0 0
    %1050 = vmatprep.subr.bf16.mxu0 0
    %1051 = vmatpush1.bf16.msra.mxu0 0
    %1052 = vmatprep.subr.bf16.mxu0 0
    %1053 = vmatpush1.bf16.msra.mxu0 0
    %1054 = vmatprep.subr.bf16.mxu0 0
    %1055 = vmatpush1.bf16.msra.mxu0 0
    %1056 = vmatprep.subr.bf16.mxu0 0
    %1057 = vmatpush1.bf16.msra.mxu0 0
    %1058 = vmatprep.subr.bf16.mxu0 0
    %1059 = vmatpush1.bf16.msra.mxu0 0
    %1060 = vmatprep.mubr.bf16.mxu0 0
    %1061 = vmatmul.mubr.bf16.gmra.mrb[0].mxu0 %v801
    %v1062 = vpop.f32.mrb[0].mxu0
    %v1063 = vadd.f32 0.0, %v1062
    %v1064 = vpop.f32.mrb[0].mxu0
    %v1065 = vadd.f32 0.0, %v1064
    %v1066 = vpop.f32.mrb[0].mxu0
    %v1067 = vadd.f32 0.0, %v1066
    %v1068 = vpop.f32.mrb[0].mxu0
    %v1069 = vadd.f32 0.0, %v1068
    %1070 = vmatprep.mubr.bf16.mxu0 0
    %1071 = vmatmul.mubr.bf16.gmra.mrb[0].mxu0 %v804
    %v1072 = vpop.f32.mrb[0].mxu0
    %v1073 = vadd.f32 0.0, %v1072
    %v1074 = vpop.f32.mrb[0].mxu0
    %v1075 = vadd.f32 0.0, %v1074
    %v1076 = vpop.f32.mrb[0].mxu0
    %v1077 = vpop.f32.mrb[0].mxu0
    %1078 = vdwg.mxu0
    %v1079 = vadd.f32 %v776, %v1012
    %v1080 = vadd.f32 %v777, %v1014
    %v1081 = vadd.f32 %v778, %v1063
    %v1082 = vadd.f32 %v779, %v1065
    %v1083 = vadd.f32 %v780, %v1016
    %v1084 = vadd.f32 %v781, %v1018
    %v1085 = vadd.f32 %v782, %v1067
    %v1086 = vadd.f32 %v783, %v1069
    %v1087 = vadd.f32 %v784, %v1022
    %v1088 = vadd.f32 %v785, %v1024
    %v1089 = vadd.f32 %v786, %v1073
    %v1090 = vadd.f32 %v787, %v1075
    %s1091 = scalar_lea.vmem %s0, 48
    %v1092 = vld [vmem:[%s1091] sm:$0xf]
    %v1093 = vld [vmem:[%s1091 + $0x4] sm:$0xf]
    %v1094 = vld [vmem:[%s1091 + $0x8] sm:$0xf]
    %v1098 = vunpack.c.l.b16 %v1092
    %v1099 = vunpack.c.l.b16 %v1093
    %v1100 = vunpack.c.l.b16 %v1094
    %v1101 = vpack.c.b16 %v1099, %v1098
    %v1102 = vpack.c.b16 %v1100, %v1100
    %v1104 = vsel %vm109, %v1101, 0
    %v1107 = vsel %vm109, %v1102, 0
    %1109 = vmatprep.subr.bf16.mxu0 %v954
    %1110 = vmatpush1.bf16.msra.mxu0 %v953
    %1111 = vmatprep.subr.bf16.mxu0 %v969
    %1112 = vmatpush1.bf16.msra.mxu0 %v966
    %1113 = vmatprep.subr.bf16.mxu0 0
    %1114 = vmatpush1.bf16.msra.mxu0 0
    %1115 = vmatprep.subr.bf16.mxu0 0
    %1116 = vmatpush1.bf16.msra.mxu0 0
    %1117 = vmatprep.subr.bf16.mxu0 0
    %1118 = vmatpush1.bf16.msra.mxu0 0
    %1119 = vmatprep.subr.bf16.mxu0 0
    %1120 = vmatpush1.bf16.msra.mxu0 0
    %1121 = vmatprep.subr.bf16.mxu0 0
    %1122 = vmatpush1.bf16.msra.mxu0 0
    %1123 = vmatprep.subr.bf16.mxu0 0
    %1124 = vmatpush1.bf16.msra.mxu0 0
    %1125 = vmatprep.subr.bf16.mxu0 0
    %1126 = vmatpush1.bf16.msra.mxu0 0
    %1127 = vmatprep.subr.bf16.mxu0 0
    %1128 = vmatpush1.bf16.msra.mxu0 0
    %1129 = vmatprep.subr.bf16.mxu0 0
    %1130 = vmatpush1.bf16.msra.mxu0 0
    %1131 = vmatprep.subr.bf16.mxu0 0
    %1132 = vmatpush1.bf16.msra.mxu0 0
    %1133 = vmatprep.subr.bf16.mxu0 0
    %1134 = vmatpush1.bf16.msra.mxu0 0
    %1135 = vmatprep.subr.bf16.mxu0 0
    %1136 = vmatpush1.bf16.msra.mxu0 0
    %1137 = vmatprep.subr.bf16.mxu0 0
    %1138 = vmatpush1.bf16.msra.mxu0 0
    %1139 = vmatprep.subr.bf16.mxu0 0
    %1140 = vmatpush1.bf16.msra.mxu0 0
    %1141 = vmatprep.mubr.bf16.mxu0 0
    %1142 = vmatmul.mubr.bf16.gmra.mrb[0].mxu0 %v1104
    %v1143 = vpop.f32.mrb[0].mxu0
    %v1144 = vadd.f32 0.0, %v1143
    %v1145 = vpop.f32.mrb[0].mxu0
    %v1146 = vadd.f32 0.0, %v1145
    %v1147 = vpop.f32.mrb[0].mxu0
    %v1148 = vadd.f32 0.0, %v1147
    %v1149 = vpop.f32.mrb[0].mxu0
    %v1150 = vadd.f32 0.0, %v1149
    %1151 = vmatprep.mubr.bf16.mxu0 0
    %1152 = vmatmul.mubr.bf16.gmra.mrb[0].mxu0 %v1107
    %v1153 = vpop.f32.mrb[0].mxu0
    %v1154 = vadd.f32 0.0, %v1153
    %v1155 = vpop.f32.mrb[0].mxu0
    %v1156 = vadd.f32 0.0, %v1155
    %v1157 = vpop.f32.mrb[0].mxu0
    %v1158 = vpop.f32.mrb[0].mxu0
    %1159 = vdwg.mxu0
    %1160 = vmatprep.subr.bf16.mxu0 %v956
    %1161 = vmatpush1.bf16.msra.mxu0 %v955
    %1162 = vmatprep.subr.bf16.mxu0 %v975
    %1163 = vmatpush1.bf16.msra.mxu0 %v972
    %1164 = vmatprep.subr.bf16.mxu0 0
    %1165 = vmatpush1.bf16.msra.mxu0 0
    %1166 = vmatprep.subr.bf16.mxu0 0
    %1167 = vmatpush1.bf16.msra.mxu0 0
    %1168 = vmatprep.subr.bf16.mxu0 0
    %1169 = vmatpush1.bf16.msra.mxu0 0
    %1170 = vmatprep.subr.bf16.mxu0 0
    %1171 = vmatpush1.bf16.msra.mxu0 0
    %1172 = vmatprep.subr.bf16.mxu0 0
    %1173 = vmatpush1.bf16.msra.mxu0 0
    %1174 = vmatprep.subr.bf16.mxu0 0
    %1175 = vmatpush1.bf16.msra.mxu0 0
    %1176 = vmatprep.subr.bf16.mxu0 0
    %1177 = vmatpush1.bf16.msra.mxu0 0
    %1178 = vmatprep.subr.bf16.mxu0 0
    %1179 = vmatpush1.bf16.msra.mxu0 0
    %1180 = vmatprep.subr.bf16.mxu0 0
    %1181 = vmatpush1.bf16.msra.mxu0 0
    %1182 = vmatprep.subr.bf16.mxu0 0
    %1183 = vmatpush1.bf16.msra.mxu0 0
    %1184 = vmatprep.subr.bf16.mxu0 0
    %1185 = vmatpush1.bf16.msra.mxu0 0
    %1186 = vmatprep.subr.bf16.mxu0 0
    %1187 = vmatpush1.bf16.msra.mxu0 0
    %1188 = vmatprep.subr.bf16.mxu0 0
    %1189 = vmatpush1.bf16.msra.mxu0 0
    %1190 = vmatprep.subr.bf16.mxu0 0
    %1191 = vmatpush1.bf16.msra.mxu0 0
    %1192 = vmatprep.mubr.bf16.mxu0 0
    %1193 = vmatmul.mubr.bf16.gmra.mrb[0].mxu0 %v1104
    %v1194 = vpop.f32.mrb[0].mxu0
    %v1195 = vadd.f32 0.0, %v1194
    %v1196 = vpop.f32.mrb[0].mxu0
    %v1197 = vadd.f32 0.0, %v1196
    %v1198 = vpop.f32.mrb[0].mxu0
    %v1199 = vadd.f32 0.0, %v1198
    %v1200 = vpop.f32.mrb[0].mxu0
    %v1201 = vadd.f32 0.0, %v1200
    %1202 = vmatprep.mubr.bf16.mxu0 0
    %1203 = vmatmul.mubr.bf16.gmra.mrb[0].mxu0 %v1107
    %v1204 = vpop.f32.mrb[0].mxu0
    %v1205 = vadd.f32 0.0, %v1204
    %v1206 = vpop.f32.mrb[0].mxu0
    %v1207 = vadd.f32 0.0, %v1206
    %v1208 = vpop.f32.mrb[0].mxu0
    %v1209 = vpop.f32.mrb[0].mxu0
    %1210 = vdwg.mxu0
    %v1211 = vadd.f32 %v908, %v1144
    %v1212 = vadd.f32 %v909, %v1146
    %v1213 = vadd.f32 %v910, %v1195
    %v1214 = vadd.f32 %v911, %v1197
    %v1215 = vadd.f32 %v912, %v1148
    %v1216 = vadd.f32 %v913, %v1150
    %v1217 = vadd.f32 %v914, %v1199
    %v1218 = vadd.f32 %v915, %v1201
    %v1219 = vadd.f32 %v916, %v1154
    %v1220 = vadd.f32 %v917, %v1156
    %v1221 = vadd.f32 %v918, %v1205
    %v1222 = vadd.f32 %v919, %v1207
    %s1223 = scalar_lea.vmem [#allocation2], 256
    %v1224 = vld [vmem:[%s1223] sm:$0xff]
    %v1225 = vld [vmem:[%s1223 + $0x8] sm:$0xff]
    %v1226 = vld [vmem:[%s1223 + $0x10] sm:$0xff]
    %v1227 = vld [vmem:[%s1223 + $0x18] sm:$0xff]
    %v1228 = vld [vmem:[%s1223 + $0x20] sm:$0xff]
    %v1229 = vld [vmem:[%s1223 + $0x28] sm:$0xff]
    %v1230 = vld [vmem:[%s1223 + $0x30] sm:$0x33]
    %v1231 = vld [vmem:[%s1223 + $0x38] sm:$0x33]
    %v1240 = vunpack.c.l.b16 %v1224
    %v1241 = vunpack.c.h.b16 %v1224
    %v1242 = vunpack.c.l.b16 %v1225
    %v1243 = vunpack.c.h.b16 %v1225
    %v1244 = vunpack.c.l.b16 %v1226
    %v1245 = vunpack.c.h.b16 %v1226
    %v1246 = vunpack.c.l.b16 %v1227
    %v1247 = vunpack.c.h.b16 %v1227
    %v1248 = vunpack.c.l.b16 %v1228
    %v1249 = vunpack.c.h.b16 %v1228
    %v1250 = vunpack.c.l.b16 %v1229
    %v1251 = vunpack.c.h.b16 %v1229
    %v1252 = vunpack.c.l.b16 %v1230
    %v1253 = vunpack.c.h.b16 %v1230
    %v1254 = vunpack.c.l.b16 %v1231
    %v1255 = vunpack.c.h.b16 %v1231
    %v1256 = vpack.c.b16 %v1244, %v1240
    %v1257 = vpack.c.b16 %v1245, %v1241
    %v1258 = vpack.c.b16 %v1246, %v1242
    %v1259 = vpack.c.b16 %v1247, %v1243
    %v1260 = vpack.c.b16 %v1252, %v1248
    %v1261 = vpack.c.b16 %v1253, %v1249
    %v1262 = vpack.c.b16 %v1254, %v1250
    %v1263 = vpack.c.b16 %v1255, %v1251
    %v1269 = vsel %vm116, %v1260, 0
    %v1272 = vsel %vm116, %v1261, 0
    %v1275 = vsel %vm116, %v1262, 0
    %v1278 = vsel %vm116, %v1263, 0
    %1280 = vmatprep.subr.bf16.mxu0 %v1257
    %1281 = vmatpush1.bf16.msra.mxu0 %v1256
    %1282 = vmatprep.subr.bf16.mxu0 %v1272
    %1283 = vmatpush1.bf16.msra.mxu0 %v1269
    %1284 = vmatprep.subr.bf16.mxu0 0
    %1285 = vmatpush1.bf16.msra.mxu0 0
    %1286 = vmatprep.subr.bf16.mxu0 0
    %1287 = vmatpush1.bf16.msra.mxu0 0
    %1288 = vmatprep.subr.bf16.mxu0 0
    %1289 = vmatpush1.bf16.msra.mxu0 0
    %1290 = vmatprep.subr.bf16.mxu0 0
    %1291 = vmatpush1.bf16.msra.mxu0 0
    %1292 = vmatprep.subr.bf16.mxu0 0
    %1293 = vmatpush1.bf16.msra.mxu0 0
    %1294 = vmatprep.subr.bf16.mxu0 0
    %1295 = vmatpush1.bf16.msra.mxu0 0
    %1296 = vmatprep.subr.bf16.mxu0 0
    %1297 = vmatpush1.bf16.msra.mxu0 0
    %1298 = vmatprep.subr.bf16.mxu0 0
    %1299 = vmatpush1.bf16.msra.mxu0 0
    %1300 = vmatprep.subr.bf16.mxu0 0
    %1301 = vmatpush1.bf16.msra.mxu0 0
    %1302 = vmatprep.subr.bf16.mxu0 0
    %1303 = vmatpush1.bf16.msra.mxu0 0
    %1304 = vmatprep.subr.bf16.mxu0 0
    %1305 = vmatpush1.bf16.msra.mxu0 0
    %1306 = vmatprep.subr.bf16.mxu0 0
    %1307 = vmatpush1.bf16.msra.mxu0 0
    %1308 = vmatprep.subr.bf16.mxu0 0
    %1309 = vmatpush1.bf16.msra.mxu0 0
    %1310 = vmatprep.subr.bf16.mxu0 0
    %1311 = vmatpush1.bf16.msra.mxu0 0
    %1312 = vmatprep.mubr.bf16.mxu0 0
    %1313 = vmatmul.mubr.bf16.gmra.mrb[0].mxu0 %v1104
    %v1314 = vpop.f32.mrb[0].mxu0
    %v1315 = vadd.f32 0.0, %v1314
    %v1316 = vpop.f32.mrb[0].mxu0
    %v1317 = vadd.f32 0.0, %v1316
    %v1318 = vpop.f32.mrb[0].mxu0
    %v1319 = vadd.f32 0.0, %v1318
    %v1320 = vpop.f32.mrb[0].mxu0
    %v1321 = vadd.f32 0.0, %v1320
    %1322 = vmatprep.mubr.bf16.mxu0 0
    %1323 = vmatmul.mubr.bf16.gmra.mrb[0].mxu0 %v1107
    %v1324 = vpop.f32.mrb[0].mxu0
    %v1325 = vadd.f32 0.0, %v1324
    %v1326 = vpop.f32.mrb[0].mxu0
    %v1327 = vadd.f32 0.0, %v1326
    %v1328 = vpop.f32.mrb[0].mxu0
    %v1329 = vpop.f32.mrb[0].mxu0
    %1330 = vdwg.mxu0
    %1331 = vmatprep.subr.bf16.mxu0 %v1259
    %1332 = vmatpush1.bf16.msra.mxu0 %v1258
    %1333 = vmatprep.subr.bf16.mxu0 %v1278
    %1334 = vmatpush1.bf16.msra.mxu0 %v1275
    %1335 = vmatprep.subr.bf16.mxu0 0
    %1336 = vmatpush1.bf16.msra.mxu0 0
    %1337 = vmatprep.subr.bf16.mxu0 0
    %1338 = vmatpush1.bf16.msra.mxu0 0
    %1339 = vmatprep.subr.bf16.mxu0 0
    %1340 = vmatpush1.bf16.msra.mxu0 0
    %1341 = vmatprep.subr.bf16.mxu0 0
    %1342 = vmatpush1.bf16.msra.mxu0 0
    %1343 = vmatprep.subr.bf16.mxu0 0
    %1344 = vmatpush1.bf16.msra.mxu0 0
    %1345 = vmatprep.subr.bf16.mxu0 0
    %1346 = vmatpush1.bf16.msra.mxu0 0
    %1347 = vmatprep.subr.bf16.mxu0 0
    %1348 = vmatpush1.bf16.msra.mxu0 0
    %1349 = vmatprep.subr.bf16.mxu0 0
    %1350 = vmatpush1.bf16.msra.mxu0 0
    %1351 = vmatprep.subr.bf16.mxu0 0
    %1352 = vmatpush1.bf16.msra.mxu0 0
    %1353 = vmatprep.subr.bf16.mxu0 0
    %1354 = vmatpush1.bf16.msra.mxu0 0
    %1355 = vmatprep.subr.bf16.mxu0 0
    %1356 = vmatpush1.bf16.msra.mxu0 0
    %1357 = vmatprep.subr.bf16.mxu0 0
    %1358 = vmatpush1.bf16.msra.mxu0 0
    %1359 = vmatprep.subr.bf16.mxu0 0
    %1360 = vmatpush1.bf16.msra.mxu0 0
    %1361 = vmatprep.subr.bf16.mxu0 0
    %1362 = vmatpush1.bf16.msra.mxu0 0
    %1363 = vmatprep.mubr.bf16.mxu0 0
    %1364 = vmatmul.mubr.bf16.gmra.mrb[0].mxu0 %v1104
    %v1365 = vpop.f32.mrb[0].mxu0
    %v1366 = vadd.f32 0.0, %v1365
    %v1367 = vpop.f32.mrb[0].mxu0
    %v1368 = vadd.f32 0.0, %v1367
    %v1369 = vpop.f32.mrb[0].mxu0
    %v1370 = vadd.f32 0.0, %v1369
    %v1371 = vpop.f32.mrb[0].mxu0
    %v1372 = vadd.f32 0.0, %v1371
    %1373 = vmatprep.mubr.bf16.mxu0 0
    %1374 = vmatmul.mubr.bf16.gmra.mrb[0].mxu0 %v1107
    %v1375 = vpop.f32.mrb[0].mxu0
    %v1376 = vadd.f32 0.0, %v1375
    %v1377 = vpop.f32.mrb[0].mxu0
    %v1378 = vadd.f32 0.0, %v1377
    %v1379 = vpop.f32.mrb[0].mxu0
    %v1380 = vpop.f32.mrb[0].mxu0
    %1381 = vdwg.mxu0
    %v1382 = vadd.f32 %v1079, %v1315
    %v1383 = vadd.f32 %v1080, %v1317
    %v1384 = vadd.f32 %v1081, %v1366
    %v1385 = vadd.f32 %v1082, %v1368
    %v1386 = vadd.f32 %v1083, %v1319
    %v1387 = vadd.f32 %v1084, %v1321
    %v1388 = vadd.f32 %v1085, %v1370
    %v1389 = vadd.f32 %v1086, %v1372
    %v1390 = vadd.f32 %v1087, %v1325
    %v1391 = vadd.f32 %v1088, %v1327
    %v1392 = vadd.f32 %v1089, %v1376
    %v1393 = vadd.f32 %v1090, %v1378
    %s1394 = scalar_lea.vmem %s0, 60
    %v1395 = vld [vmem:[%s1394] sm:$0xf]
    %v1396 = vld [vmem:[%s1394 + $0x4] sm:$0xf]
    %v1397 = vld [vmem:[%s1394 + $0x8] sm:$0xf]
    %v1401 = vunpack.c.l.b16 %v1395
    %v1402 = vunpack.c.l.b16 %v1396
    %v1403 = vunpack.c.l.b16 %v1397
    %v1404 = vpack.c.b16 %v1402, %v1401
    %v1405 = vpack.c.b16 %v1403, %v1403
    %v1407 = vsel %vm109, %v1404, 0
    %v1410 = vsel %vm109, %v1405, 0
    %1412 = vmatprep.subr.bf16.mxu0 %v1257
    %1413 = vmatpush1.bf16.msra.mxu0 %v1256
    %1414 = vmatprep.subr.bf16.mxu0 %v1272
    %1415 = vmatpush1.bf16.msra.mxu0 %v1269
    %1416 = vmatprep.subr.bf16.mxu0 0
    %1417 = vmatpush1.bf16.msra.mxu0 0
    %1418 = vmatprep.subr.bf16.mxu0 0
    %1419 = vmatpush1.bf16.msra.mxu0 0
    %1420 = vmatprep.subr.bf16.mxu0 0
    %1421 = vmatpush1.bf16.msra.mxu0 0
    %1422 = vmatprep.subr.bf16.mxu0 0
    %1423 = vmatpush1.bf16.msra.mxu0 0
    %1424 = vmatprep.subr.bf16.mxu0 0
    %1425 = vmatpush1.bf16.msra.mxu0 0
    %1426 = vmatprep.subr.bf16.mxu0 0
    %1427 = vmatpush1.bf16.msra.mxu0 0
    %1428 = vmatprep.subr.bf16.mxu0 0
    %1429 = vmatpush1.bf16.msra.mxu0 0
    %1430 = vmatprep.subr.bf16.mxu0 0
    %1431 = vmatpush1.bf16.msra.mxu0 0
    %1432 = vmatprep.subr.bf16.mxu0 0
    %1433 = vmatpush1.bf16.msra.mxu0 0
    %1434 = vmatprep.subr.bf16.mxu0 0
    %1435 = vmatpush1.bf16.msra.mxu0 0
    %1436 = vmatprep.subr.bf16.mxu0 0
    %1437 = vmatpush1.bf16.msra.mxu0 0
    %1438 = vmatprep.subr.bf16.mxu0 0
    %1439 = vmatpush1.bf16.msra.mxu0 0
    %1440 = vmatprep.subr.bf16.mxu0 0
    %1441 = vmatpush1.bf16.msra.mxu0 0
    %1442 = vmatprep.subr.bf16.mxu0 0
    %1443 = vmatpush1.bf16.msra.mxu0 0
    %1444 = vmatprep.mubr.bf16.mxu0 0
    %1445 = vmatmul.mubr.bf16.gmra.mrb[0].mxu0 %v1407
    %v1446 = vpop.f32.mrb[0].mxu0
    %v1447 = vadd.f32 0.0, %v1446
    %v1448 = vpop.f32.mrb[0].mxu0
    %v1449 = vadd.f32 0.0, %v1448
    %v1450 = vpop.f32.mrb[0].mxu0
    %v1451 = vadd.f32 0.0, %v1450
    %v1452 = vpop.f32.mrb[0].mxu0
    %v1453 = vadd.f32 0.0, %v1452
    %1454 = vmatprep.mubr.bf16.mxu0 0
    %1455 = vmatmul.mubr.bf16.gmra.mrb[0].mxu0 %v1410
    %v1456 = vpop.f32.mrb[0].mxu0
    %v1457 = vadd.f32 0.0, %v1456
    %v1458 = vpop.f32.mrb[0].mxu0
    %v1459 = vadd.f32 0.0, %v1458
    %v1460 = vpop.f32.mrb[0].mxu0
    %v1461 = vpop.f32.mrb[0].mxu0
    %1462 = vdwg.mxu0
    %1463 = vmatprep.subr.bf16.mxu0 %v1259
    %1464 = vmatpush1.bf16.msra.mxu0 %v1258
    %1465 = vmatprep.subr.bf16.mxu0 %v1278
    %1466 = vmatpush1.bf16.msra.mxu0 %v1275
    %1467 = vmatprep.subr.bf16.mxu0 0
    %1468 = vmatpush1.bf16.msra.mxu0 0
    %1469 = vmatprep.subr.bf16.mxu0 0
    %1470 = vmatpush1.bf16.msra.mxu0 0
    %1471 = vmatprep.subr.bf16.mxu0 0
    %1472 = vmatpush1.bf16.msra.mxu0 0
    %1473 = vmatprep.subr.bf16.mxu0 0
    %1474 = vmatpush1.bf16.msra.mxu0 0
    %1475 = vmatprep.subr.bf16.mxu0 0
    %1476 = vmatpush1.bf16.msra.mxu0 0
    %1477 = vmatprep.subr.bf16.mxu0 0
    %1478 = vmatpush1.bf16.msra.mxu0 0
    %1479 = vmatprep.subr.bf16.mxu0 0
    %1480 = vmatpush1.bf16.msra.mxu0 0
    %1481 = vmatprep.subr.bf16.mxu0 0
    %1482 = vmatpush1.bf16.msra.mxu0 0
    %1483 = vmatprep.subr.bf16.mxu0 0
    %1484 = vmatpush1.bf16.msra.mxu0 0
    %1485 = vmatprep.subr.bf16.mxu0 0
    %1486 = vmatpush1.bf16.msra.mxu0 0
    %1487 = vmatprep.subr.bf16.mxu0 0
    %1488 = vmatpush1.bf16.msra.mxu0 0
    %1489 = vmatprep.subr.bf16.mxu0 0
    %1490 = vmatpush1.bf16.msra.mxu0 0
    %1491 = vmatprep.subr.bf16.mxu0 0
    %1492 = vmatpush1.bf16.msra.mxu0 0
    %1493 = vmatprep.subr.bf16.mxu0 0
    %1494 = vmatpush1.bf16.msra.mxu0 0
    %1495 = vmatprep.mubr.bf16.mxu0 0
    %1496 = vmatmul.mubr.bf16.gmra.mrb[0].mxu0 %v1407
    %v1497 = vpop.f32.mrb[0].mxu0
    %v1498 = vadd.f32 0.0, %v1497
    %v1499 = vpop.f32.mrb[0].mxu0
    %v1500 = vadd.f32 0.0, %v1499
    %v1501 = vpop.f32.mrb[0].mxu0
    %v1502 = vadd.f32 0.0, %v1501
    %v1503 = vpop.f32.mrb[0].mxu0
    %v1504 = vadd.f32 0.0, %v1503
    %1505 = vmatprep.mubr.bf16.mxu0 0
    %1506 = vmatmul.mubr.bf16.gmra.mrb[0].mxu0 %v1410
    %v1507 = vpop.f32.mrb[0].mxu0
    %v1508 = vadd.f32 0.0, %v1507
    %v1509 = vpop.f32.mrb[0].mxu0
    %v1510 = vadd.f32 0.0, %v1509
    %v1511 = vpop.f32.mrb[0].mxu0
    %v1512 = vpop.f32.mrb[0].mxu0
    %1513 = vdwg.mxu0
    %v1514 = vadd.f32 %v1211, %v1447
    %v1515 = vadd.f32 %v1212, %v1449
    %v1516 = vadd.f32 %v1213, %v1498
    %v1517 = vadd.f32 %v1214, %v1500
    %v1518 = vadd.f32 %v1215, %v1451
    %v1519 = vadd.f32 %v1216, %v1453
    %v1520 = vadd.f32 %v1217, %v1502
    %v1521 = vadd.f32 %v1218, %v1504
    %v1522 = vadd.f32 %v1219, %v1457
    %v1523 = vadd.f32 %v1220, %v1459
    %v1524 = vadd.f32 %v1221, %v1508
    %v1525 = vadd.f32 %v1222, %v1510
    %v1526 = vmax.f32 %v1382, %v1514
    %v1527 = vmax.f32 %v1383, %v1515
    %v1528 = vmax.f32 %v1384, %v1516
    %v1529 = vmax.f32 %v1385, %v1517
    %v1530 = vmax.f32 %v1386, %v1518
    %v1531 = vmax.f32 %v1387, %v1519
    %v1532 = vmax.f32 %v1388, %v1520
    %v1533 = vmax.f32 %v1389, %v1521
    %v1534 = vmax.f32 %v1390, %v1522
    %v1535 = vmax.f32 %v1391, %v1523
    %v1536 = vmax.f32 %v1392, %v1524
    %v1537 = vmax.f32 %v1393, %v1525
    %1547 = vrot.lane.b32.xlu0 %v1527, 16
    %v1548 = vpop.permute.xlu0 %1547
    %1549 = vrot.lane.b32.xlu0 %v1528, 16
    %v1550 = vpop.permute.xlu0 %1549
    %1551 = vrot.lane.b32.xlu0 %v1529, 16
    %v1552 = vpop.permute.xlu0 %1551
    %1553 = vrot.lane.b32.xlu0 %v1531, 16
    %v1554 = vpop.permute.xlu0 %1553
    %1555 = vrot.lane.b32.xlu0 %v1532, 16
    %v1556 = vpop.permute.xlu0 %1555
    %1557 = vrot.lane.b32.xlu0 %v1533, 16
    %v1558 = vpop.permute.xlu0 %1557
    %1559 = vrot.lane.b32.xlu0 %v1535, 16
    %v1560 = vpop.permute.xlu0 %1559
    %1561 = vrot.lane.b32.xlu0 %v1536, 16
    %v1562 = vpop.permute.xlu0 %1561
    %1563 = vrot.lane.b32.xlu0 %v1537, 16
    %v1564 = vpop.permute.xlu0 %1563
    %vm1565 = vcmask 130048
    %v1566 = vsel %vm1565, %v1548, %v1550
    %v1567 = vsel %vm1565, %v1550, %v1552
    %v1568 = vsel %vm1565, %v1554, %v1556
    %v1569 = vsel %vm1565, %v1556, %v1558
    %v1570 = vsel %vm1565, %v1560, %v1562
    %v1571 = vsel %vm1565, %v1562, %v1564
    %v1578 = vmax.f32 %v1526, %v1566
    %v1579 = vmax.f32 %v1527, %v1567
    %v1580 = vmax.f32 %v1530, %v1568
    %v1581 = vmax.f32 %v1531, %v1569
    %v1582 = vmax.f32 %v1534, %v1570
    %v1583 = vmax.f32 %v1535, %v1571
    %v1584 = vld [vmem:[#allocation4] sm:$0x3]
    %v1586 = vlaneseq
    %v1587 = vshrl.u32 %v1586, 7
    %v1588 = vsub.s32 0, %v1587
    %v1589 = vrot.slane %v1584, %v1588
    %v1590 = vlaneseq
    %v1591 = vshrl.u32 %v1590, 7
    %v1592 = vsub.s32 1, %v1591
    %v1593 = vrot.slane %v1584, %v1592
    %v1596 = vadd.f32 %v1578, %v1589
    %v1597 = vadd.f32 %v1579, %v1593
    %v1598 = vadd.f32 %v1580, %v1589
    %v1599 = vadd.f32 %v1581, %v1593
    %v1600 = vadd.f32 %v1582, %v1589
    %v1601 = vadd.f32 %v1583, %v1593
    %v1602 = vmax.f32 %v1596, 0.0
    %v1603 = vmax.f32 %v1597, 0.0
    %v1604 = vmax.f32 %v1598, 0.0
    %v1605 = vmax.f32 %v1599, 0.0
    %v1606 = vmax.f32 %v1600, 0.0
    %v1607 = vmax.f32 %v1601, 0.0
    %v1608 = vpack.c.bf16 %v1604, %v1602
    %v1609 = vpack.c.bf16 %v1605, %v1603
    %v1610 = vpack.c.bf16 %v1606, %v1606
    %v1611 = vpack.c.bf16 %v1607, %v1607
    %v1616 = vunpack.c.l.b16 %v1608
    %v1617 = vunpack.c.l.b16 %v1609
    %v1618 = vunpack.c.h.b16 %v1608
    %v1619 = vunpack.c.h.b16 %v1609
    %v1620 = vunpack.c.l.b16 %v1610
    %v1621 = vunpack.c.l.b16 %v1611
    %v1622 = vpack.c.b16 %v1617, %v1616
    %v1623 = vpack.c.b16 %v1619, %v1618
    %v1624 = vpack.c.b16 %v1621, %v1620
    %vm1628 = vcmask 1043456
    %vm1629 = vcmask 916484
    %vm1630 = vmor %vm1629, %vm1628
    %1631 = vst.msk [vmem:[%s3] sm:$0xff] %vm1630, %v1622
    %1632 = vst.msk [vmem:[%s3 + $0x8] sm:$0xff] %vm1630, %v1623
    %1633 = vst.msk [vmem:[%s3 + $0x10] sm:$0xff] %vm1630, %v1624
    // Predicated region
    $region22: #{net_forward.3} parent=1 // pred_check
      _
    $region23: #{net_forward.3} parent=1 // pred_check_branch
      %1635 = sbr.rel (0) target = $region25
    $region24: #{net_forward.3} parent=1 // pred_region
      _
    $region25: #{net_forward.3} parent=1 // pred_fallthru
      _
    // Predicated region
    $region26: #{net_forward.3} parent=1 // pred_check
      _
    $region27: #{net_forward.3} parent=1 // pred_check_branch
      %1637 = sbr.rel (0) target = $region29
    $region28: #{net_forward.3} parent=1 // pred_region
      _
    $region29: #{net_forward.3} parent=1 // pred_fallthru
      _
    %1638 = vsyncpa [#allocation3], 1
    %1639 = vsyncpa [#allocation5], 1

// kernel: net_forward.5
$region0: #{net_forward.5}
  #allocation0 [shape = 'u32[]', space=smem, size = 0x4, offset = 0x4, fixed_abs, tag = 'smem constant byte address 0x4 - core index']
  #allocation1 [shape = 'u32[144,128]{1,0:T(1,128)}', space=vmem, size = 0x12000, scoped, tag = 'internal scratch']
  %s0 = inlined_call_operand.vmem [shape: bf16[2,800], index: 0, kind: input, shape index: {}]
  %s1 = inlined_call_operand.vmem [shape: bf16[800,512], index: 1, kind: input, shape index: {}]
  %s2 = inlined_call_operand.vmem [shape: f32[1,512], index: 2, kind: input, shape index: {}]
  %s3 = inlined_call_operand.vmem [shape: bf16[512,10], index: 3, kind: input, shape index: {}]
  %s4 = inlined_call_operand.vmem [shape: f32[1,10], index: 4, kind: input, shape index: {}]
  %s5 = inlined_call_operand.hbm [shape: f32[2,10], index: 5, kind: output, shape index: {}]
  %s6 = sld [smem:[#allocation0]]
  $region30: #{net_forward.5} parent=0
    _
  %s8 = ssub.s32 1, %s6
  %s9 = scalar_select 0, %s8, %s6
  $region1: #{net_forward.5} parent=0
    #allocation2 [shape = 'u8[1024]{0}', space=vmem, size = 0x400, scoped, tag = 'output window, operand 0, single buffered']
    #allocation3 [shape = 's32[1]{0}', space=sflag, size = 0x4, scoped, tag = 'scoped memory for net_forward.5']
    %10 = vsyncpa [#allocation3], 0
    // Predicated region
    $region2: #{net_forward.5} parent=1 // pred_check
      _
    $region3: #{net_forward.5} parent=1 // pred_check_branch
      %12 = sbr.rel (0) target = $region5
    $region4: #{net_forward.5} parent=1 // pred_region
      _
    $region5: #{net_forward.5} parent=1 // pred_fallthru
      _
    // Predicated region
    $region6: #{net_forward.5} parent=1 // pred_check
      _
    $region7: #{net_forward.5} parent=1 // pred_check_branch
      %14 = sbr.rel (0) target = $region9
    $region8: #{net_forward.5} parent=1 // pred_region
      _
    $region9: #{net_forward.5} parent=1 // pred_fallthru
      _
    // Predicated region
    $region10: #{net_forward.5} parent=1 // pred_check
      _
    $region11: #{net_forward.5} parent=1 // pred_check_branch
      %16 = sbr.rel (0) target = $region13
    $region12: #{net_forward.5} parent=1 // pred_region
      _
    $region13: #{net_forward.5} parent=1 // pred_fallthru
      _
    // Predicated region
    $region14: #{net_forward.5} parent=1 // pred_check
      _
    $region15: #{net_forward.5} parent=1 // pred_check_branch
      %18 = sbr.rel (0) target = $region17
    $region16: #{net_forward.5} parent=1 // pred_region
      _
    $region17: #{net_forward.5} parent=1 // pred_fallthru
      _
    // Predicated region
    $region18: #{net_forward.5} parent=1 // pred_check
      _
    $region19: #{net_forward.5} parent=1 // pred_check_branch
      %20 = sbr.rel (0) target = $region21
    $region20: #{net_forward.5} parent=1 // pred_region
      _
    $region21: #{net_forward.5} parent=1 // pred_fallthru
      _
    %v22 = vld [vmem:[%s0] sm:$0x7f]
    %v23 = vld [vmem:[%s1] sm:$0xff]
    %v24 = vld [vmem:[%s1 + $0x8] sm:$0xff]
    %v25 = vld [vmem:[%s1 + $0x10] sm:$0xff]
    %v26 = vld [vmem:[%s1 + $0x18] sm:$0xff]
    %v27 = vld [vmem:[%s1 + $0x20] sm:$0xff]
    %v28 = vld [vmem:[%s1 + $0x28] sm:$0xff]
    %v29 = vld [vmem:[%s1 + $0x30] sm:$0xff]
    %v30 = vld [vmem:[%s1 + $0x38] sm:$0xff]
    %v31 = vld [vmem:[%s1 + $0x40] sm:$0xff]
    %v32 = vld [vmem:[%s1 + $0x48] sm:$0xff]
    %v33 = vld [vmem:[%s1 + $0x50] sm:$0xff]
    %v34 = vld [vmem:[%s1 + $0x58] sm:$0xff]
    %v35 = vld [vmem:[%s1 + $0x60] sm:$0xff]
    %v36 = vld [vmem:[%s1 + $0x68] sm:$0xff]
    %v37 = vld [vmem:[%s1 + $0x70] sm:$0xff]
    %v38 = vld [vmem:[%s1 + $0x78] sm:$0xff]
    %v39 = vld [vmem:[%s1 + $0x80] sm:$0xff]
    %v40 = vld [vmem:[%s1 + $0x88] sm:$0xff]
    %v41 = vld [vmem:[%s1 + $0x90] sm:$0xff]
    %v42 = vld [vmem:[%s1 + $0x98] sm:$0xff]
    %v43 = vld [vmem:[%s1 + $0xa0] sm:$0xff]
    %v44 = vld [vmem:[%s1 + $0xa8] sm:$0xff]
    %v45 = vld [vmem:[%s1 + $0xb0] sm:$0xff]
    %v46 = vld [vmem:[%s1 + $0xb8] sm:$0xff]
    %v47 = vld [vmem:[%s1 + $0xc0] sm:$0xff]
    %v48 = vld [vmem:[%s1 + $0xc8] sm:$0xff]
    %v49 = vld [vmem:[%s1 + $0xd0] sm:$0xff]
    %v50 = vld [vmem:[%s1 + $0xd8] sm:$0xff]
    %v51 = vld [vmem:[%s1 + $0xe0] sm:$0xff]
    %v52 = vld [vmem:[%s1 + $0xe8] sm:$0xff]
    %v53 = vld [vmem:[%s1 + $0xf0] sm:$0xff]
    %v54 = vld [vmem:[%s1 + $0xf8] sm:$0xff]
    %v55 = vld [vmem:[%s1 + $0x100] sm:$0xff]
    %v56 = vld [vmem:[%s1 + $0x108] sm:$0xff]
    %v57 = vld [vmem:[%s1 + $0x110] sm:$0xff]
    %v58 = vld [vmem:[%s1 + $0x118] sm:$0xff]
    %v59 = vld [vmem:[%s1 + $0x120] sm:$0xff]
    %v60 = vld [vmem:[%s1 + $0x128] sm:$0xff]
    %v61 = vld [vmem:[%s1 + $0x130] sm:$0xff]
    %v62 = vld [vmem:[%s1 + $0x138] sm:$0xff]
    %v63 = vld [vmem:[%s1 + $0x140] sm:$0xff]
    %v64 = vld [vmem:[%s1 + $0x148] sm:$0xff]
    %v65 = vld [vmem:[%s1 + $0x150] sm:$0xff]
    %v66 = vld [vmem:[%s1 + $0x158] sm:$0xff]
    %v67 = vld [vmem:[%s1 + $0x160] sm:$0xff]
    %v68 = vld [vmem:[%s1 + $0x168] sm:$0xff]
    %v69 = vld [vmem:[%s1 + $0x170] sm:$0xff]
    %v70 = vld [vmem:[%s1 + $0x178] sm:$0xff]
    %v71 = vld [vmem:[%s1 + $0x180] sm:$0xff]
    %v72 = vld [vmem:[%s1 + $0x188] sm:$0xff]
    %v73 = vld [vmem:[%s1 + $0x190] sm:$0xff]
    %v74 = vld [vmem:[%s1 + $0x198] sm:$0xff]
    %v75 = vld [vmem:[%s1 + $0x1a0] sm:$0xff]
    %v76 = vld [vmem:[%s1 + $0x1a8] sm:$0xff]
    %v77 = vld [vmem:[%s1 + $0x1b0] sm:$0xff]
    %v78 = vld [vmem:[%s1 + $0x1b8] sm:$0xff]
    %v79 = vld [vmem:[%s1 + $0x1c0] sm:$0xff]
    %v80 = vld [vmem:[%s1 + $0x1c8] sm:$0xff]
    %v81 = vld [vmem:[%s1 + $0x1d0] sm:$0xff]
    %v82 = vld [vmem:[%s1 + $0x1d8] sm:$0xff]
    %v83 = vld [vmem:[%s1 + $0x1e0] sm:$0xff]
    %v84 = vld [vmem:[%s1 + $0x1e8] sm:$0xff]
    %v85 = vld [vmem:[%s1 + $0x1f0] sm:$0xff]
    %v86 = vld [vmem:[%s1 + $0x1f8] sm:$0xff]
    %v87 = vld [vmem:[%s1 + $0x200] sm:$0xff]
    %v88 = vld [vmem:[%s1 + $0x208] sm:$0xff]
    %v89 = vld [vmem:[%s1 + $0x210] sm:$0xff]
    %v90 = vld [vmem:[%s1 + $0x218] sm:$0xff]
    %v91 = vld [vmem:[%s1 + $0x220] sm:$0xff]
    %v92 = vld [vmem:[%s1 + $0x228] sm:$0xff]
    %v93 = vld [vmem:[%s1 + $0x230] sm:$0xff]
    %v94 = vld [vmem:[%s1 + $0x238] sm:$0xff]
    %v95 = vld [vmem:[%s1 + $0x240] sm:$0xff]
    %v96 = vld [vmem:[%s1 + $0x248] sm:$0xff]
    %v97 = vld [vmem:[%s1 + $0x250] sm:$0xff]
    %v98 = vld [vmem:[%s1 + $0x258] sm:$0xff]
    %v99 = vld [vmem:[%s1 + $0x260] sm:$0xff]
    %v100 = vld [vmem:[%s1 + $0x268] sm:$0xff]
    %v101 = vld [vmem:[%s1 + $0x270] sm:$0xff]
    %v102 = vld [vmem:[%s1 + $0x278] sm:$0xff]
    %v103 = vld [vmem:[%s1 + $0x280] sm:$0xff]
    %v104 = vld [vmem:[%s1 + $0x288] sm:$0xff]
    %v105 = vld [vmem:[%s1 + $0x290] sm:$0xff]
    %v106 = vld [vmem:[%s1 + $0x298] sm:$0xff]
    %v107 = vld [vmem:[%s1 + $0x2a0] sm:$0xff]
    %v108 = vld [vmem:[%s1 + $0x2a8] sm:$0xff]
    %v109 = vld [vmem:[%s1 + $0x2b0] sm:$0xff]
    %v110 = vld [vmem:[%s1 + $0x2b8] sm:$0xff]
    %v111 = vld [vmem:[%s1 + $0x2c0] sm:$0xff]
    %v112 = vld [vmem:[%s1 + $0x2c8] sm:$0xff]
    %v113 = vld [vmem:[%s1 + $0x2d0] sm:$0xff]
    %v114 = vld [vmem:[%s1 + $0x2d8] sm:$0xff]
    %v115 = vld [vmem:[%s1 + $0x2e0] sm:$0xff]
    %v116 = vld [vmem:[%s1 + $0x2e8] sm:$0xff]
    %v117 = vld [vmem:[%s1 + $0x2f0] sm:$0xff]
    %v118 = vld [vmem:[%s1 + $0x2f8] sm:$0xff]
    %v119 = vld [vmem:[%s1 + $0x300] sm:$0xff]
    %v120 = vld [vmem:[%s1 + $0x308] sm:$0xff]
    %v121 = vld [vmem:[%s1 + $0x310] sm:$0xff]
    %v122 = vld [vmem:[%s1 + $0x318] sm:$0xff]
    %v123 = vld [vmem:[%s1 + $0x320] sm:$0xff]
    %v124 = vld [vmem:[%s1 + $0x328] sm:$0xff]
    %v125 = vld [vmem:[%s1 + $0x330] sm:$0xff]
    %v126 = vld [vmem:[%s1 + $0x338] sm:$0xff]
    %v127 = vld [vmem:[%s1 + $0x340] sm:$0xff]
    %v128 = vld [vmem:[%s1 + $0x348] sm:$0xff]
    %v129 = vld [vmem:[%s1 + $0x350] sm:$0xff]
    %v130 = vld [vmem:[%s1 + $0x358] sm:$0xff]
    %v131 = vld [vmem:[%s1 + $0x360] sm:$0xff]
    %v132 = vld [vmem:[%s1 + $0x368] sm:$0xff]
    %v133 = vld [vmem:[%s1 + $0x370] sm:$0xff]
    %v134 = vld [vmem:[%s1 + $0x378] sm:$0xff]
    %v135 = vld [vmem:[%s1 + $0x380] sm:$0xff]
    %v136 = vld [vmem:[%s1 + $0x388] sm:$0xff]
    %v137 = vld [vmem:[%s1 + $0x390] sm:$0xff]
    %v138 = vld [vmem:[%s1 + $0x398] sm:$0xff]
    %v139 = vld [vmem:[%s1 + $0x3a0] sm:$0xff]
    %v140 = vld [vmem:[%s1 + $0x3a8] sm:$0xff]
    %v141 = vld [vmem:[%s1 + $0x3b0] sm:$0xff]
    %v142 = vld [vmem:[%s1 + $0x3b8] sm:$0xff]
    %v143 = vld [vmem:[%s1 + $0x3c0] sm:$0xff]
    %v144 = vld [vmem:[%s1 + $0x3c8] sm:$0xff]
    %v145 = vld [vmem:[%s1 + $0x3d0] sm:$0xff]
    %v146 = vld [vmem:[%s1 + $0x3d8] sm:$0xff]
    %v147 = vld [vmem:[%s1 + $0x3e0] sm:$0xff]
    %v148 = vld [vmem:[%s1 + $0x3e8] sm:$0xff]
    %v149 = vld [vmem:[%s1 + $0x3f0] sm:$0xff]
    %v150 = vld [vmem:[%s1 + $0x3f8] sm:$0xff]
    %v151 = vld [vmem:[%s1 + $0x400] sm:$0xff]
    %v152 = vld [vmem:[%s1 + $0x408] sm:$0xff]
    %v153 = vld [vmem:[%s1 + $0x410] sm:$0xff]
    %v154 = vld [vmem:[%s1 + $0x418] sm:$0xff]
    %v155 = vld [vmem:[%s1 + $0x420] sm:$0xff]
    %v156 = vld [vmem:[%s1 + $0x428] sm:$0xff]
    %v157 = vld [vmem:[%s1 + $0x430] sm:$0xff]
    %v158 = vld [vmem:[%s1 + $0x438] sm:$0xff]
    %v159 = vld [vmem:[%s1 + $0x440] sm:$0xff]
    %v160 = vld [vmem:[%s1 + $0x448] sm:$0xff]
    %v161 = vld [vmem:[%s1 + $0x450] sm:$0xff]
    %v162 = vld [vmem:[%s1 + $0x458] sm:$0xff]
    %v163 = vld [vmem:[%s1 + $0x460] sm:$0xff]
    %v164 = vld [vmem:[%s1 + $0x468] sm:$0xff]
    %v165 = vld [vmem:[%s1 + $0x470] sm:$0xff]
    %v166 = vld [vmem:[%s1 + $0x478] sm:$0xff]
    %v167 = vld [vmem:[%s1 + $0x480] sm:$0xff]
    %v168 = vld [vmem:[%s1 + $0x488] sm:$0xff]
    %v169 = vld [vmem:[%s1 + $0x490] sm:$0xff]
    %v170 = vld [vmem:[%s1 + $0x498] sm:$0xff]
    %v171 = vld [vmem:[%s1 + $0x4a0] sm:$0xff]
    %v172 = vld [vmem:[%s1 + $0x4a8] sm:$0xff]
    %v173 = vld [vmem:[%s1 + $0x4b0] sm:$0xff]
    %v174 = vld [vmem:[%s1 + $0x4b8] sm:$0xff]
    %v175 = vld [vmem:[%s1 + $0x4c0] sm:$0xff]
    %v176 = vld [vmem:[%s1 + $0x4c8] sm:$0xff]
    %v177 = vld [vmem:[%s1 + $0x4d0] sm:$0xff]
    %v178 = vld [vmem:[%s1 + $0x4d8] sm:$0xff]
    %v179 = vld [vmem:[%s1 + $0x4e0] sm:$0xff]
    %v180 = vld [vmem:[%s1 + $0x4e8] sm:$0xff]
    %v181 = vld [vmem:[%s1 + $0x4f0] sm:$0xff]
    %v182 = vld [vmem:[%s1 + $0x4f8] sm:$0xff]
    %v183 = vld [vmem:[%s1 + $0x500] sm:$0xff]
    %v184 = vld [vmem:[%s1 + $0x508] sm:$0xff]
    %v185 = vld [vmem:[%s1 + $0x510] sm:$0xff]
    %v186 = vld [vmem:[%s1 + $0x518] sm:$0xff]
    %v187 = vld [vmem:[%s1 + $0x520] sm:$0xff]
    %v188 = vld [vmem:[%s1 + $0x528] sm:$0xff]
    %v189 = vld [vmem:[%s1 + $0x530] sm:$0xff]
    %v190 = vld [vmem:[%s1 + $0x538] sm:$0xff]
    %v191 = vld [vmem:[%s1 + $0x540] sm:$0xff]
    %v192 = vld [vmem:[%s1 + $0x548] sm:$0xff]
    %v193 = vld [vmem:[%s1 + $0x550] sm:$0xff]
    %v194 = vld [vmem:[%s1 + $0x558] sm:$0xff]
    %v195 = vld [vmem:[%s1 + $0x560] sm:$0xff]
    %v196 = vld [vmem:[%s1 + $0x568] sm:$0xff]
    %v197 = vld [vmem:[%s1 + $0x570] sm:$0xff]
    %v198 = vld [vmem:[%s1 + $0x578] sm:$0xff]
    %v199 = vld [vmem:[%s1 + $0x580] sm:$0xff]
    %v200 = vld [vmem:[%s1 + $0x588] sm:$0xff]
    %v201 = vld [vmem:[%s1 + $0x590] sm:$0xff]
    %v202 = vld [vmem:[%s1 + $0x598] sm:$0xff]
    %v203 = vld [vmem:[%s1 + $0x5a0] sm:$0xff]
    %v204 = vld [vmem:[%s1 + $0x5a8] sm:$0xff]
    %v205 = vld [vmem:[%s1 + $0x5b0] sm:$0xff]
    %v206 = vld [vmem:[%s1 + $0x5b8] sm:$0xff]
    %v207 = vld [vmem:[%s1 + $0x5c0] sm:$0xff]
    %v208 = vld [vmem:[%s1 + $0x5c8] sm:$0xff]
    %v209 = vld [vmem:[%s1 + $0x5d0] sm:$0xff]
    %v210 = vld [vmem:[%s1 + $0x5d8] sm:$0xff]
    %v211 = vld [vmem:[%s1 + $0x5e0] sm:$0xff]
    %v212 = vld [vmem:[%s1 + $0x5e8] sm:$0xff]
    %v213 = vld [vmem:[%s1 + $0x5f0] sm:$0xff]
    %v214 = vld [vmem:[%s1 + $0x5f8] sm:$0xff]
    %v215 = vld [vmem:[%s1 + $0x600] sm:$0xff]
    %v216 = vld [vmem:[%s1 + $0x608] sm:$0xff]
    %v217 = vld [vmem:[%s1 + $0x610] sm:$0xff]
    %v218 = vld [vmem:[%s1 + $0x618] sm:$0xff]
    %v219 = vld [vmem:[%s1 + $0x620] sm:$0xff]
    %v220 = vld [vmem:[%s1 + $0x628] sm:$0xff]
    %v221 = vld [vmem:[%s1 + $0x630] sm:$0xff]
    %v222 = vld [vmem:[%s1 + $0x638] sm:$0xff]
    %v223 = vld [vmem:[%s2] sm:$0xf]
    %v225 = vlaneseq
    %v226 = vshrl.u32 %v225, 7
    %v227 = vsub.s32 0, %v226
    %v228 = vrot.slane %v223, %v227
    %v229 = vlaneseq
    %v230 = vshrl.u32 %v229, 7
    %v231 = vsub.s32 1, %v230
    %v232 = vrot.slane %v223, %v231
    %v233 = vlaneseq
    %v234 = vshrl.u32 %v233, 7
    %v235 = vsub.s32 2, %v234
    %v236 = vrot.slane %v223, %v235
    %v237 = vlaneseq
    %v238 = vshrl.u32 %v237, 7
    %v239 = vsub.s32 3, %v238
    %v240 = vrot.slane %v223, %v239
    %v246 = vcombine.high %v22, %v22
    %v248 = vunpack.c.l.s4 1966171168
    %v249 = vunpack.c.0.s8 %v248
    %v250 = vlaneseq
    %v251 = vshrl.u32 %v250, 7
    %v252 = vsub.s32 %v249, %v251
    %v253 = vrot.slane %v22, %v252
    %v255 = vunpack.c.l.s4 1966171168
    %v256 = vunpack.c.0.s8 %v255
    %v257 = vlaneseq
    %v258 = vshrl.u32 %v257, 7
    %v259 = vsub.s32 %v256, %v258
    %v260 = vrot.slane %v246, %v259
    %v261 = vcombine.high %v253, %v253
    %v262 = vcombine.high %v260, %v260
    %v264 = vunpack.c.l.s4 1966171168
    %v265 = vunpack.c.0.s8 %v264
    %v266 = vlaneseq
    %v267 = vshrl.u32 %v266, 7
    %v268 = vsub.s32 %v265, %v267
    %v269 = vrot.slane %v253, %v268
    %v271 = vunpack.c.l.s4 1966171168
    %v272 = vunpack.c.0.s8 %v271
    %v273 = vlaneseq
    %v274 = vshrl.u32 %v273, 7
    %v275 = vsub.s32 %v272, %v274
    %v276 = vrot.slane %v260, %v275
    %v278 = vunpack.c.l.s4 1966171168
    %v279 = vunpack.c.0.s8 %v278
    %v280 = vlaneseq
    %v281 = vshrl.u32 %v280, 7
    %v282 = vsub.s32 %v279, %v281
    %v283 = vrot.slane %v261, %v282
    %v285 = vunpack.c.l.s4 1966171168
    %v286 = vunpack.c.0.s8 %v285
    %v287 = vlaneseq
    %v288 = vshrl.u32 %v287, 7
    %v289 = vsub.s32 %v286, %v288
    %v290 = vrot.slane %v262, %v289
    %v291 = vcombine.high %v269, %v269
    %v292 = vcombine.high %v276, %v276
    %v293 = vcombine.high %v283, %v283
    %v500 = vunpack.c.l.b16 %v23
    %v501 = vunpack.c.h.b16 %v23
    %v502 = vunpack.c.l.b16 %v24
    %v503 = vunpack.c.h.b16 %v24
    %v504 = vunpack.c.l.b16 %v25
    %v505 = vunpack.c.h.b16 %v25
    %v506 = vunpack.c.l.b16 %v26
    %v507 = vunpack.c.h.b16 %v26
    %v508 = vunpack.c.l.b16 %v27
    %v509 = vunpack.c.h.b16 %v27
    %v510 = vunpack.c.l.b16 %v28
    %v511 = vunpack.c.h.b16 %v28
    %v512 = vunpack.c.l.b16 %v29
    %v513 = vunpack.c.h.b16 %v29
    %v514 = vunpack.c.l.b16 %v30
    %v515 = vunpack.c.h.b16 %v30
    %v516 = vunpack.c.l.b16 %v31
    %v517 = vunpack.c.h.b16 %v31
    %v518 = vunpack.c.l.b16 %v32
    %v519 = vunpack.c.h.b16 %v32
    %v520 = vunpack.c.l.b16 %v33
    %v521 = vunpack.c.h.b16 %v33
    %v522 = vunpack.c.l.b16 %v34
    %v523 = vunpack.c.h.b16 %v34
    %v524 = vunpack.c.l.b16 %v35
    %v525 = vunpack.c.h.b16 %v35
    %v526 = vunpack.c.l.b16 %v36
    %v527 = vunpack.c.h.b16 %v36
    %v528 = vunpack.c.l.b16 %v37
    %v529 = vunpack.c.h.b16 %v37
    %v530 = vunpack.c.l.b16 %v38
    %v531 = vunpack.c.h.b16 %v38
    %v532 = vunpack.c.l.b16 %v39
    %v533 = vunpack.c.h.b16 %v39
    %v534 = vunpack.c.l.b16 %v40
    %v535 = vunpack.c.h.b16 %v40
    %v536 = vunpack.c.l.b16 %v41
    %v537 = vunpack.c.h.b16 %v41
    %v538 = vunpack.c.l.b16 %v42
    %v539 = vunpack.c.h.b16 %v42
    %v540 = vunpack.c.l.b16 %v43
    %v541 = vunpack.c.h.b16 %v43
    %v542 = vunpack.c.l.b16 %v44
    %v543 = vunpack.c.h.b16 %v44
    %v544 = vunpack.c.l.b16 %v45
    %v545 = vunpack.c.h.b16 %v45
    %v546 = vunpack.c.l.b16 %v46
    %v547 = vunpack.c.h.b16 %v46
    %v548 = vunpack.c.l.b16 %v47
    %v549 = vunpack.c.h.b16 %v47
    %v550 = vunpack.c.l.b16 %v48
    %v551 = vunpack.c.h.b16 %v48
    %v552 = vunpack.c.l.b16 %v49
    %v553 = vunpack.c.h.b16 %v49
    %v554 = vunpack.c.l.b16 %v50
    %v555 = vunpack.c.h.b16 %v50
    %v556 = vunpack.c.l.b16 %v51
    %v557 = vunpack.c.h.b16 %v51
    %v558 = vunpack.c.l.b16 %v52
    %v559 = vunpack.c.h.b16 %v52
    %v560 = vunpack.c.l.b16 %v53
    %v561 = vunpack.c.h.b16 %v53
    %v562 = vunpack.c.l.b16 %v54
    %v563 = vunpack.c.h.b16 %v54
    %v564 = vunpack.c.l.b16 %v55
    %v565 = vunpack.c.h.b16 %v55
    %v566 = vunpack.c.l.b16 %v56
    %v567 = vunpack.c.h.b16 %v56
    %v568 = vunpack.c.l.b16 %v57
    %v569 = vunpack.c.h.b16 %v57
    %v570 = vunpack.c.l.b16 %v58
    %v571 = vunpack.c.h.b16 %v58
    %v572 = vunpack.c.l.b16 %v59
    %v573 = vunpack.c.h.b16 %v59
    %v574 = vunpack.c.l.b16 %v60
    %v575 = vunpack.c.h.b16 %v60
    %v576 = vunpack.c.l.b16 %v61
    %v577 = vunpack.c.h.b16 %v61
    %v578 = vunpack.c.l.b16 %v62
    %v579 = vunpack.c.h.b16 %v62
    %v580 = vunpack.c.l.b16 %v63
    %v581 = vunpack.c.h.b16 %v63
    %v582 = vunpack.c.l.b16 %v64
    %v583 = vunpack.c.h.b16 %v64
    %v584 = vunpack.c.l.b16 %v65
    %v585 = vunpack.c.h.b16 %v65
    %v586 = vunpack.c.l.b16 %v66
    %v587 = vunpack.c.h.b16 %v66
    %v588 = vunpack.c.l.b16 %v67
    %v589 = vunpack.c.h.b16 %v67
    %v590 = vunpack.c.l.b16 %v68
    %v591 = vunpack.c.h.b16 %v68
    %v592 = vunpack.c.l.b16 %v69
    %v593 = vunpack.c.h.b16 %v69
    %v594 = vunpack.c.l.b16 %v70
    %v595 = vunpack.c.h.b16 %v70
    %v596 = vunpack.c.l.b16 %v71
    %v597 = vunpack.c.h.b16 %v71
    %v598 = vunpack.c.l.b16 %v72
    %v599 = vunpack.c.h.b16 %v72
    %v600 = vunpack.c.l.b16 %v73
    %v601 = vunpack.c.h.b16 %v73
    %v602 = vunpack.c.l.b16 %v74
    %v603 = vunpack.c.h.b16 %v74
    %v604 = vunpack.c.l.b16 %v75
    %v605 = vunpack.c.h.b16 %v75
    %v606 = vunpack.c.l.b16 %v76
    %v607 = vunpack.c.h.b16 %v76
    %v608 = vunpack.c.l.b16 %v77
    %v609 = vunpack.c.h.b16 %v77
    %v610 = vunpack.c.l.b16 %v78
    %v611 = vunpack.c.h.b16 %v78
    %v612 = vunpack.c.l.b16 %v79
    %v613 = vunpack.c.h.b16 %v79
    %v614 = vunpack.c.l.b16 %v80
    %v615 = vunpack.c.h.b16 %v80
    %v616 = vunpack.c.l.b16 %v81
    %v617 = vunpack.c.h.b16 %v81
    %v618 = vunpack.c.l.b16 %v82
    %v619 = vunpack.c.h.b16 %v82
    %v620 = vunpack.c.l.b16 %v83
    %v621 = vunpack.c.h.b16 %v83
    %v622 = vunpack.c.l.b16 %v84
    %v623 = vunpack.c.h.b16 %v84
    %v624 = vunpack.c.l.b16 %v85
    %v625 = vunpack.c.h.b16 %v85
    %v626 = vunpack.c.l.b16 %v86
    %v627 = vunpack.c.h.b16 %v86
    %v628 = vunpack.c.l.b16 %v87
    %v629 = vunpack.c.h.b16 %v87
    %v630 = vunpack.c.l.b16 %v88
    %v631 = vunpack.c.h.b16 %v88
    %v632 = vunpack.c.l.b16 %v89
    %v633 = vunpack.c.h.b16 %v89
    %v634 = vunpack.c.l.b16 %v90
    %v635 = vunpack.c.h.b16 %v90
    %v636 = vunpack.c.l.b16 %v91
    %v637 = vunpack.c.h.b16 %v91
    %v638 = vunpack.c.l.b16 %v92
    %v639 = vunpack.c.h.b16 %v92
    %v640 = vunpack.c.l.b16 %v93
    %v641 = vunpack.c.h.b16 %v93
    %v642 = vunpack.c.l.b16 %v94
    %v643 = vunpack.c.h.b16 %v94
    %v644 = vunpack.c.l.b16 %v95
    %v645 = vunpack.c.h.b16 %v95
    %v646 = vunpack.c.l.b16 %v96
    %v647 = vunpack.c.h.b16 %v96
    %v648 = vunpack.c.l.b16 %v97
    %v649 = vunpack.c.h.b16 %v97
    %v650 = vunpack.c.l.b16 %v98
    %v651 = vunpack.c.h.b16 %v98
    %v652 = vunpack.c.l.b16 %v99
    %v653 = vunpack.c.h.b16 %v99
    %v654 = vunpack.c.l.b16 %v100
    %v655 = vunpack.c.h.b16 %v100
    %v656 = vunpack.c.l.b16 %v101
    %v657 = vunpack.c.h.b16 %v101
    %v658 = vunpack.c.l.b16 %v102
    %v659 = vunpack.c.h.b16 %v102
    %v660 = vunpack.c.l.b16 %v103
    %v661 = vunpack.c.h.b16 %v103
    %v662 = vunpack.c.l.b16 %v104
    %v663 = vunpack.c.h.b16 %v104
    %v664 = vunpack.c.l.b16 %v105
    %v665 = vunpack.c.h.b16 %v105
    %v666 = vunpack.c.l.b16 %v106
    %v667 = vunpack.c.h.b16 %v106
    %v668 = vunpack.c.l.b16 %v107
    %v669 = vunpack.c.h.b16 %v107
    %v670 = vunpack.c.l.b16 %v108
    %v671 = vunpack.c.h.b16 %v108
    %v672 = vunpack.c.l.b16 %v109
    %v673 = vunpack.c.h.b16 %v109
    %v674 = vunpack.c.l.b16 %v110
    %v675 = vunpack.c.h.b16 %v110
    %v676 = vunpack.c.l.b16 %v111
    %v677 = vunpack.c.h.b16 %v111
    %v678 = vunpack.c.l.b16 %v112
    %v679 = vunpack.c.h.b16 %v112
    %v680 = vunpack.c.l.b16 %v113
    %v681 = vunpack.c.h.b16 %v113
    %v682 = vunpack.c.l.b16 %v114
    %v683 = vunpack.c.h.b16 %v114
    %v684 = vunpack.c.l.b16 %v115
    %v685 = vunpack.c.h.b16 %v115
    %v686 = vunpack.c.l.b16 %v116
    %v687 = vunpack.c.h.b16 %v116
    %v688 = vunpack.c.l.b16 %v117
    %v689 = vunpack.c.h.b16 %v117
    %v690 = vunpack.c.l.b16 %v118
    %v691 = vunpack.c.h.b16 %v118
    %v692 = vunpack.c.l.b16 %v119
    %v693 = vunpack.c.h.b16 %v119
    %v694 = vunpack.c.l.b16 %v120
    %v695 = vunpack.c.h.b16 %v120
    %v696 = vunpack.c.l.b16 %v121
    %v697 = vunpack.c.h.b16 %v121
    %v698 = vunpack.c.l.b16 %v122
    %v699 = vunpack.c.h.b16 %v122
    %v700 = vunpack.c.l.b16 %v123
    %v701 = vunpack.c.h.b16 %v123
    %v702 = vunpack.c.l.b16 %v124
    %v703 = vunpack.c.h.b16 %v124
    %v704 = vunpack.c.l.b16 %v125
    %v705 = vunpack.c.h.b16 %v125
    %v706 = vunpack.c.l.b16 %v126
    %v707 = vunpack.c.h.b16 %v126
    %v708 = vunpack.c.l.b16 %v127
    %v709 = vunpack.c.h.b16 %v127
    %v710 = vunpack.c.l.b16 %v128
    %v711 = vunpack.c.h.b16 %v128
    %v712 = vunpack.c.l.b16 %v129
    %v713 = vunpack.c.h.b16 %v129
    %v714 = vunpack.c.l.b16 %v130
    %v715 = vunpack.c.h.b16 %v130
    %v716 = vunpack.c.l.b16 %v131
    %v717 = vunpack.c.h.b16 %v131
    %v718 = vunpack.c.l.b16 %v132
    %v719 = vunpack.c.h.b16 %v132
    %v720 = vunpack.c.l.b16 %v133
    %v721 = vunpack.c.h.b16 %v133
    %v722 = vunpack.c.l.b16 %v134
    %v723 = vunpack.c.h.b16 %v134
    %v724 = vunpack.c.l.b16 %v135
    %v725 = vunpack.c.h.b16 %v135
    %v726 = vunpack.c.l.b16 %v136
    %v727 = vunpack.c.h.b16 %v136
    %v728 = vunpack.c.l.b16 %v137
    %v729 = vunpack.c.h.b16 %v137
    %v730 = vunpack.c.l.b16 %v138
    %v731 = vunpack.c.h.b16 %v138
    %v732 = vunpack.c.l.b16 %v139
    %v733 = vunpack.c.h.b16 %v139
    %v734 = vunpack.c.l.b16 %v140
    %v735 = vunpack.c.h.b16 %v140
    %v736 = vunpack.c.l.b16 %v141
    %v737 = vunpack.c.h.b16 %v141
    %v738 = vunpack.c.l.b16 %v142
    %v739 = vunpack.c.h.b16 %v142
    %v740 = vunpack.c.l.b16 %v143
    %v741 = vunpack.c.h.b16 %v143
    %v742 = vunpack.c.l.b16 %v144
    %v743 = vunpack.c.h.b16 %v144
    %v744 = vunpack.c.l.b16 %v145
    %v745 = vunpack.c.h.b16 %v145
    %v746 = vunpack.c.l.b16 %v146
    %v747 = vunpack.c.h.b16 %v146
    %v748 = vunpack.c.l.b16 %v147
    %v749 = vunpack.c.h.b16 %v147
    %v750 = vunpack.c.l.b16 %v148
    %v751 = vunpack.c.h.b16 %v148
    %v752 = vunpack.c.l.b16 %v149
    %v753 = vunpack.c.h.b16 %v149
    %v754 = vunpack.c.l.b16 %v150
    %v755 = vunpack.c.h.b16 %v150
    %v756 = vunpack.c.l.b16 %v151
    %v757 = vunpack.c.h.b16 %v151
    %v758 = vunpack.c.l.b16 %v152
    %v759 = vunpack.c.h.b16 %v152
    %v760 = vunpack.c.l.b16 %v153
    %v761 = vunpack.c.h.b16 %v153
    %v762 = vunpack.c.l.b16 %v154
    %v763 = vunpack.c.h.b16 %v154
    %v764 = vunpack.c.l.b16 %v155
    %v765 = vunpack.c.h.b16 %v155
    %v766 = vunpack.c.l.b16 %v156
    %v767 = vunpack.c.h.b16 %v156
    %v768 = vunpack.c.l.b16 %v157
    %v769 = vunpack.c.h.b16 %v157
    %v770 = vunpack.c.l.b16 %v158
    %v771 = vunpack.c.h.b16 %v158
    %v772 = vunpack.c.l.b16 %v159
    %v773 = vunpack.c.h.b16 %v159
    %v774 = vunpack.c.l.b16 %v160
    %v775 = vunpack.c.h.b16 %v160
    %v776 = vunpack.c.l.b16 %v161
    %v777 = vunpack.c.h.b16 %v161
    %v778 = vunpack.c.l.b16 %v162
    %v779 = vunpack.c.h.b16 %v162
    %v780 = vunpack.c.l.b16 %v163
    %v781 = vunpack.c.h.b16 %v163
    %v782 = vunpack.c.l.b16 %v164
    %v783 = vunpack.c.h.b16 %v164
    %v784 = vunpack.c.l.b16 %v165
    %v785 = vunpack.c.h.b16 %v165
    %v786 = vunpack.c.l.b16 %v166
    %v787 = vunpack.c.h.b16 %v166
    %v788 = vunpack.c.l.b16 %v167
    %v789 = vunpack.c.h.b16 %v167
    %v790 = vunpack.c.l.b16 %v168
    %v791 = vunpack.c.h.b16 %v168
    %v792 = vunpack.c.l.b16 %v169
    %v793 = vunpack.c.h.b16 %v169
    %v794 = vunpack.c.l.b16 %v170
    %v795 = vunpack.c.h.b16 %v170
    %v796 = vunpack.c.l.b16 %v171
    %v797 = vunpack.c.h.b16 %v171
    %v798 = vunpack.c.l.b16 %v172
    %v799 = vunpack.c.h.b16 %v172
    %v800 = vunpack.c.l.b16 %v173
    %v801 = vunpack.c.h.b16 %v173
    %v802 = vunpack.c.l.b16 %v174
    %v803 = vunpack.c.h.b16 %v174
    %v804 = vunpack.c.l.b16 %v175
    %v805 = vunpack.c.h.b16 %v175
    %v806 = vunpack.c.l.b16 %v176
    %v807 = vunpack.c.h.b16 %v176
    %v808 = vunpack.c.l.b16 %v177
    %v809 = vunpack.c.h.b16 %v177
    %v810 = vunpack.c.l.b16 %v178
    %v811 = vunpack.c.h.b16 %v178
    %v812 = vunpack.c.l.b16 %v179
    %v813 = vunpack.c.h.b16 %v179
    %v814 = vunpack.c.l.b16 %v180
    %v815 = vunpack.c.h.b16 %v180
    %v816 = vunpack.c.l.b16 %v181
    %v817 = vunpack.c.h.b16 %v181
    %v818 = vunpack.c.l.b16 %v182
    %v819 = vunpack.c.h.b16 %v182
    %v820 = vunpack.c.l.b16 %v183
    %v821 = vunpack.c.h.b16 %v183
    %v822 = vunpack.c.l.b16 %v184
    %v823 = vunpack.c.h.b16 %v184
    %v824 = vunpack.c.l.b16 %v185
    %v825 = vunpack.c.h.b16 %v185
    %v826 = vunpack.c.l.b16 %v186
    %v827 = vunpack.c.h.b16 %v186
    %v828 = vunpack.c.l.b16 %v187
    %v829 = vunpack.c.h.b16 %v187
    %v830 = vunpack.c.l.b16 %v188
    %v831 = vunpack.c.h.b16 %v188
    %v832 = vunpack.c.l.b16 %v189
    %v833 = vunpack.c.h.b16 %v189
    %v834 = vunpack.c.l.b16 %v190
    %v835 = vunpack.c.h.b16 %v190
    %v836 = vunpack.c.l.b16 %v191
    %v837 = vunpack.c.h.b16 %v191
    %v838 = vunpack.c.l.b16 %v192
    %v839 = vunpack.c.h.b16 %v192
    %v840 = vunpack.c.l.b16 %v193
    %v841 = vunpack.c.h.b16 %v193
    %v842 = vunpack.c.l.b16 %v194
    %v843 = vunpack.c.h.b16 %v194
    %v844 = vunpack.c.l.b16 %v195
    %v845 = vunpack.c.h.b16 %v195
    %v846 = vunpack.c.l.b16 %v196
    %v847 = vunpack.c.h.b16 %v196
    %v848 = vunpack.c.l.b16 %v197
    %v849 = vunpack.c.h.b16 %v197
    %v850 = vunpack.c.l.b16 %v198
    %v851 = vunpack.c.h.b16 %v198
    %v852 = vunpack.c.l.b16 %v199
    %v853 = vunpack.c.h.b16 %v199
    %v854 = vunpack.c.l.b16 %v200
    %v855 = vunpack.c.h.b16 %v200
    %v856 = vunpack.c.l.b16 %v201
    %v857 = vunpack.c.h.b16 %v201
    %v858 = vunpack.c.l.b16 %v202
    %v859 = vunpack.c.h.b16 %v202
    %v860 = vunpack.c.l.b16 %v203
    %v861 = vunpack.c.h.b16 %v203
    %v862 = vunpack.c.l.b16 %v204
    %v863 = vunpack.c.h.b16 %v204
    %v864 = vunpack.c.l.b16 %v205
    %v865 = vunpack.c.h.b16 %v205
    %v866 = vunpack.c.l.b16 %v206
    %v867 = vunpack.c.h.b16 %v206
    %v868 = vunpack.c.l.b16 %v207
    %v869 = vunpack.c.h.b16 %v207
    %v870 = vunpack.c.l.b16 %v208
    %v871 = vunpack.c.h.b16 %v208
    %v872 = vunpack.c.l.b16 %v209
    %v873 = vunpack.c.h.b16 %v209
    %v874 = vunpack.c.l.b16 %v210
    %v875 = vunpack.c.h.b16 %v210
    %v876 = vunpack.c.l.b16 %v211
    %v877 = vunpack.c.h.b16 %v211
    %v878 = vunpack.c.l.b16 %v212
    %v879 = vunpack.c.h.b16 %v212
    %v880 = vunpack.c.l.b16 %v213
    %v881 = vunpack.c.h.b16 %v213
    %v882 = vunpack.c.l.b16 %v214
    %v883 = vunpack.c.h.b16 %v214
    %v884 = vunpack.c.l.b16 %v215
    %v885 = vunpack.c.h.b16 %v215
    %v886 = vunpack.c.l.b16 %v216
    %v887 = vunpack.c.h.b16 %v216
    %v888 = vunpack.c.l.b16 %v217
    %v889 = vunpack.c.h.b16 %v217
    %v890 = vunpack.c.l.b16 %v218
    %v891 = vunpack.c.h.b16 %v218
    %v892 = vunpack.c.l.b16 %v219
    %v893 = vunpack.c.h.b16 %v219
    %v894 = vunpack.c.l.b16 %v220
    %v895 = vunpack.c.h.b16 %v220
    %v896 = vunpack.c.l.b16 %v221
    %v897 = vunpack.c.h.b16 %v221
    %v898 = vunpack.c.l.b16 %v222
    %v899 = vunpack.c.h.b16 %v222
    %v900 = vpack.c.b16 %v504, %v500
    %v901 = vpack.c.b16 %v505, %v501
    %v902 = vpack.c.b16 %v506, %v502
    %v903 = vpack.c.b16 %v507, %v503
    %v904 = vpack.c.b16 %v512, %v508
    %v905 = vpack.c.b16 %v513, %v509
    %v906 = vpack.c.b16 %v514, %v510
    %v907 = vpack.c.b16 %v515, %v511
    %v908 = vpack.c.b16 %v520, %v516
    %v909 = vpack.c.b16 %v521, %v517
    %v910 = vpack.c.b16 %v522, %v518
    %v911 = vpack.c.b16 %v523, %v519
    %v912 = vpack.c.b16 %v528, %v524
    %v913 = vpack.c.b16 %v529, %v525
    %v914 = vpack.c.b16 %v530, %v526
    %v915 = vpack.c.b16 %v531, %v527
    %v916 = vpack.c.b16 %v536, %v532
    %v917 = vpack.c.b16 %v537, %v533
    %v918 = vpack.c.b16 %v538, %v534
    %v919 = vpack.c.b16 %v539, %v535
    %v920 = vpack.c.b16 %v544, %v540
    %v921 = vpack.c.b16 %v545, %v541
    %v922 = vpack.c.b16 %v546, %v542
    %v923 = vpack.c.b16 %v547, %v543
    %v924 = vpack.c.b16 %v552, %v548
    %v925 = vpack.c.b16 %v553, %v549
    %v926 = vpack.c.b16 %v554, %v550
    %v927 = vpack.c.b16 %v555, %v551
    %v928 = vpack.c.b16 %v560, %v556
    %v929 = vpack.c.b16 %v561, %v557
    %v930 = vpack.c.b16 %v562, %v558
    %v931 = vpack.c.b16 %v563, %v559
    %v932 = vpack.c.b16 %v568, %v564
    %v933 = vpack.c.b16 %v569, %v565
    %v934 = vpack.c.b16 %v570, %v566
    %v935 = vpack.c.b16 %v571, %v567
    %v936 = vpack.c.b16 %v576, %v572
    %v937 = vpack.c.b16 %v577, %v573
    %v938 = vpack.c.b16 %v578, %v574
    %v939 = vpack.c.b16 %v579, %v575
    %v940 = vpack.c.b16 %v584, %v580
    %v941 = vpack.c.b16 %v585, %v581
    %v942 = vpack.c.b16 %v586, %v582
    %v943 = vpack.c.b16 %v587, %v583
    %v944 = vpack.c.b16 %v592, %v588
    %v945 = vpack.c.b16 %v593, %v589
    %v946 = vpack.c.b16 %v594, %v590
    %v947 = vpack.c.b16 %v595, %v591
    %v948 = vpack.c.b16 %v600, %v596
    %v949 = vpack.c.b16 %v601, %v597
    %v950 = vpack.c.b16 %v602, %v598
    %v951 = vpack.c.b16 %v603, %v599
    %v952 = vpack.c.b16 %v608, %v604
    %v953 = vpack.c.b16 %v609, %v605
    %v954 = vpack.c.b16 %v610, %v606
    %v955 = vpack.c.b16 %v611, %v607
    %v956 = vpack.c.b16 %v616, %v612
    %v957 = vpack.c.b16 %v617, %v613
    %v958 = vpack.c.b16 %v618, %v614
    %v959 = vpack.c.b16 %v619, %v615
    %v960 = vpack.c.b16 %v624, %v620
    %v961 = vpack.c.b16 %v625, %v621
    %v962 = vpack.c.b16 %v626, %v622
    %v963 = vpack.c.b16 %v627, %v623
    %v964 = vpack.c.b16 %v632, %v628
    %v965 = vpack.c.b16 %v633, %v629
    %v966 = vpack.c.b16 %v634, %v630
    %v967 = vpack.c.b16 %v635, %v631
    %v968 = vpack.c.b16 %v640, %v636
    %v969 = vpack.c.b16 %v641, %v637
    %v970 = vpack.c.b16 %v642, %v638
    %v971 = vpack.c.b16 %v643, %v639
    %v972 = vpack.c.b16 %v648, %v644
    %v973 = vpack.c.b16 %v649, %v645
    %v974 = vpack.c.b16 %v650, %v646
    %v975 = vpack.c.b16 %v651, %v647
    %v976 = vpack.c.b16 %v656, %v652
    %v977 = vpack.c.b16 %v657, %v653
    %v978 = vpack.c.b16 %v658, %v654
    %v979 = vpack.c.b16 %v659, %v655
    %v980 = vpack.c.b16 %v664, %v660
    %v981 = vpack.c.b16 %v665, %v661
    %v982 = vpack.c.b16 %v666, %v662
    %v983 = vpack.c.b16 %v667, %v663
    %v984 = vpack.c.b16 %v672, %v668
    %v985 = vpack.c.b16 %v673, %v669
    %v986 = vpack.c.b16 %v674, %v670
    %v987 = vpack.c.b16 %v675, %v671
    %v988 = vpack.c.b16 %v680, %v676
    %v989 = vpack.c.b16 %v681, %v677
    %v990 = vpack.c.b16 %v682, %v678
    %v991 = vpack.c.b16 %v683, %v679
    %v992 = vpack.c.b16 %v688, %v684
    %v993 = vpack.c.b16 %v689, %v685
    %v994 = vpack.c.b16 %v690, %v686
    %v995 = vpack.c.b16 %v691, %v687
    %v996 = vpack.c.b16 %v696, %v692
    %v997 = vpack.c.b16 %v697, %v693
    %v998 = vpack.c.b16 %v698, %v694
    %v999 = vpack.c.b16 %v699, %v695
    %v1000 = vpack.c.b16 %v704, %v700
    %v1001 = vpack.c.b16 %v705, %v701
    %v1002 = vpack.c.b16 %v706, %v702
    %v1003 = vpack.c.b16 %v707, %v703
    %v1004 = vpack.c.b16 %v712, %v708
    %v1005 = vpack.c.b16 %v713, %v709
    %v1006 = vpack.c.b16 %v714, %v710
    %v1007 = vpack.c.b16 %v715, %v711
    %v1008 = vpack.c.b16 %v720, %v716
    %v1009 = vpack.c.b16 %v721, %v717
    %v1010 = vpack.c.b16 %v722, %v718
    %v1011 = vpack.c.b16 %v723, %v719
    %v1012 = vpack.c.b16 %v728, %v724
    %v1013 = vpack.c.b16 %v729, %v725
    %v1014 = vpack.c.b16 %v730, %v726
    %v1015 = vpack.c.b16 %v731, %v727
    %v1016 = vpack.c.b16 %v736, %v732
    %v1017 = vpack.c.b16 %v737, %v733
    %v1018 = vpack.c.b16 %v738, %v734
    %v1019 = vpack.c.b16 %v739, %v735
    %v1020 = vpack.c.b16 %v744, %v740
    %v1021 = vpack.c.b16 %v745, %v741
    %v1022 = vpack.c.b16 %v746, %v742
    %v1023 = vpack.c.b16 %v747, %v743
    %v1024 = vpack.c.b16 %v752, %v748
    %v1025 = vpack.c.b16 %v753, %v749
    %v1026 = vpack.c.b16 %v754, %v750
    %v1027 = vpack.c.b16 %v755, %v751
    %v1028 = vpack.c.b16 %v760, %v756
    %v1029 = vpack.c.b16 %v761, %v757
    %v1030 = vpack.c.b16 %v762, %v758
    %v1031 = vpack.c.b16 %v763, %v759
    %v1032 = vpack.c.b16 %v768, %v764
    %v1033 = vpack.c.b16 %v769, %v765
    %v1034 = vpack.c.b16 %v770, %v766
    %v1035 = vpack.c.b16 %v771, %v767
    %v1036 = vpack.c.b16 %v776, %v772
    %v1037 = vpack.c.b16 %v777, %v773
    %v1038 = vpack.c.b16 %v778, %v774
    %v1039 = vpack.c.b16 %v779, %v775
    %v1040 = vpack.c.b16 %v784, %v780
    %v1041 = vpack.c.b16 %v785, %v781
    %v1042 = vpack.c.b16 %v786, %v782
    %v1043 = vpack.c.b16 %v787, %v783
    %v1044 = vpack.c.b16 %v792, %v788
    %v1045 = vpack.c.b16 %v793, %v789
    %v1046 = vpack.c.b16 %v794, %v790
    %v1047 = vpack.c.b16 %v795, %v791
    %v1048 = vpack.c.b16 %v800, %v796
    %v1049 = vpack.c.b16 %v801, %v797
    %v1050 = vpack.c.b16 %v802, %v798
    %v1051 = vpack.c.b16 %v803, %v799
    %v1052 = vpack.c.b16 %v808, %v804
    %v1053 = vpack.c.b16 %v809, %v805
    %v1054 = vpack.c.b16 %v810, %v806
    %v1055 = vpack.c.b16 %v811, %v807
    %v1056 = vpack.c.b16 %v816, %v812
    %v1057 = vpack.c.b16 %v817, %v813
    %v1058 = vpack.c.b16 %v818, %v814
    %v1059 = vpack.c.b16 %v819, %v815
    %v1060 = vpack.c.b16 %v824, %v820
    %v1061 = vpack.c.b16 %v825, %v821
    %v1062 = vpack.c.b16 %v826, %v822
    %v1063 = vpack.c.b16 %v827, %v823
    %v1064 = vpack.c.b16 %v832, %v828
    %v1065 = vpack.c.b16 %v833, %v829
    %v1066 = vpack.c.b16 %v834, %v830
    %v1067 = vpack.c.b16 %v835, %v831
    %v1068 = vpack.c.b16 %v840, %v836
    %v1069 = vpack.c.b16 %v841, %v837
    %v1070 = vpack.c.b16 %v842, %v838
    %v1071 = vpack.c.b16 %v843, %v839
    %v1072 = vpack.c.b16 %v848, %v844
    %v1073 = vpack.c.b16 %v849, %v845
    %v1074 = vpack.c.b16 %v850, %v846
    %v1075 = vpack.c.b16 %v851, %v847
    %v1076 = vpack.c.b16 %v856, %v852
    %v1077 = vpack.c.b16 %v857, %v853
    %v1078 = vpack.c.b16 %v858, %v854
    %v1079 = vpack.c.b16 %v859, %v855
    %v1080 = vpack.c.b16 %v864, %v860
    %v1081 = vpack.c.b16 %v865, %v861
    %v1082 = vpack.c.b16 %v866, %v862
    %v1083 = vpack.c.b16 %v867, %v863
    %v1084 = vpack.c.b16 %v872, %v868
    %v1085 = vpack.c.b16 %v873, %v869
    %v1086 = vpack.c.b16 %v874, %v870
    %v1087 = vpack.c.b16 %v875, %v871
    %v1088 = vpack.c.b16 %v880, %v876
    %v1089 = vpack.c.b16 %v881, %v877
    %v1090 = vpack.c.b16 %v882, %v878
    %v1091 = vpack.c.b16 %v883, %v879
    %v1092 = vpack.c.b16 %v888, %v884
    %v1093 = vpack.c.b16 %v889, %v885
    %v1094 = vpack.c.b16 %v890, %v886
    %v1095 = vpack.c.b16 %v891, %v887
    %v1096 = vpack.c.b16 %v896, %v892
    %v1097 = vpack.c.b16 %v897, %v893
    %v1098 = vpack.c.b16 %v898, %v894
    %v1099 = vpack.c.b16 %v899, %v895
    %vm1300 = vcmask 261120
    %v1302 = vsel %vm1300, %v292, 0
    %1304 = vmatprep.subr.bf16.mxu0 %v901
    %1305 = vmatpush1.bf16.msra.mxu0 %v900
    %1306 = vmatprep.subr.bf16.mxu0 %v905
    %1307 = vmatpush1.bf16.msra.mxu0 %v904
    %1308 = vmatprep.subr.bf16.mxu0 %v909
    %1309 = vmatpush1.bf16.msra.mxu0 %v908
    %1310 = vmatprep.subr.bf16.mxu0 %v913
    %1311 = vmatpush1.bf16.msra.mxu0 %v912
    %1312 = vmatprep.subr.bf16.mxu0 %v917
    %1313 = vmatpush1.bf16.msra.mxu0 %v916
    %1314 = vmatprep.subr.bf16.mxu0 %v921
    %1315 = vmatpush1.bf16.msra.mxu0 %v920
    %1316 = vmatprep.subr.bf16.mxu0 %v925
    %1317 = vmatpush1.bf16.msra.mxu0 %v924
    %1318 = vmatprep.subr.bf16.mxu0 %v929
    %1319 = vmatpush1.bf16.msra.mxu0 %v928
    %1320 = vmatprep.subr.bf16.mxu0 %v933
    %1321 = vmatpush1.bf16.msra.mxu0 %v932
    %1322 = vmatprep.subr.bf16.mxu0 %v937
    %1323 = vmatpush1.bf16.msra.mxu0 %v936
    %1324 = vmatprep.subr.bf16.mxu0 %v941
    %1325 = vmatpush1.bf16.msra.mxu0 %v940
    %1326 = vmatprep.subr.bf16.mxu0 %v945
    %1327 = vmatpush1.bf16.msra.mxu0 %v944
    %1328 = vmatprep.subr.bf16.mxu0 %v949
    %1329 = vmatpush1.bf16.msra.mxu0 %v948
    %1330 = vmatprep.subr.bf16.mxu0 %v953
    %1331 = vmatpush1.bf16.msra.mxu0 %v952
    %1332 = vmatprep.subr.bf16.mxu0 %v957
    %1333 = vmatpush1.bf16.msra.mxu0 %v956
    %1334 = vmatprep.subr.bf16.mxu0 %v961
    %1335 = vmatpush1.bf16.msra.mxu0 %v960
    %1336 = vmatprep.mubr.bf16.mxu0 %v283
    %1337 = vmatmul.mubr.bf16.gmra.mrb[0].mxu0 %v269
    %v1338 = vpop.f32.mrb[0].mxu0
    %v1339 = vadd.f32 %v228, %v1338
    %v1340 = vpop.f32.mrb[0].mxu0
    %v1341 = vadd.f32 %v232, %v1340
    %v1342 = vpop.f32.mrb[0].mxu0
    %v1343 = vpop.f32.mrb[0].mxu0
    %1344 = vdwg.mxu0
    %1345 = vmatprep.subr.bf16.mxu0 %v965
    %1346 = vmatpush1.bf16.msra.mxu0 %v964
    %1347 = vmatprep.subr.bf16.mxu0 %v969
    %1348 = vmatpush1.bf16.msra.mxu0 %v968
    %1349 = vmatprep.subr.bf16.mxu0 %v973
    %1350 = vmatpush1.bf16.msra.mxu0 %v972
    %1351 = vmatprep.subr.bf16.mxu0 %v977
    %1352 = vmatpush1.bf16.msra.mxu0 %v976
    %1353 = vmatprep.subr.bf16.mxu0 %v981
    %1354 = vmatpush1.bf16.msra.mxu0 %v980
    %1355 = vmatprep.subr.bf16.mxu0 %v985
    %1356 = vmatpush1.bf16.msra.mxu0 %v984
    %1357 = vmatprep.subr.bf16.mxu0 %v989
    %1358 = vmatpush1.bf16.msra.mxu0 %v988
    %1359 = vmatprep.subr.bf16.mxu0 %v993
    %1360 = vmatpush1.bf16.msra.mxu0 %v992
    %1361 = vmatprep.subr.bf16.mxu0 %v997
    %1362 = vmatpush1.bf16.msra.mxu0 %v996
    %1363 = vmatprep.subr.bf16.mxu0 %v1001
    %1364 = vmatpush1.bf16.msra.mxu0 %v1000
    %1365 = vmatprep.subr.bf16.mxu0 %v1005
    %1366 = vmatpush1.bf16.msra.mxu0 %v1004
    %1367 = vmatprep.subr.bf16.mxu0 %v1009
    %1368 = vmatpush1.bf16.msra.mxu0 %v1008
    %1369 = vmatprep.subr.bf16.mxu0 %v1013
    %1370 = vmatpush1.bf16.msra.mxu0 %v1012
    %1371 = vmatprep.subr.bf16.mxu0 %v1017
    %1372 = vmatpush1.bf16.msra.mxu0 %v1016
    %1373 = vmatprep.subr.bf16.mxu0 %v1021
    %1374 = vmatpush1.bf16.msra.mxu0 %v1020
    %1375 = vmatprep.subr.bf16.mxu0 %v1025
    %1376 = vmatpush1.bf16.msra.mxu0 %v1024
    %1377 = vmatprep.mubr.bf16.mxu0 %v293
    %1378 = vmatmul.mubr.bf16.gmra.mrb[0].mxu0 %v291
    %v1379 = vpop.f32.mrb[0].mxu0
    %v1380 = vadd.f32 %v1339, %v1379
    %v1381 = vpop.f32.mrb[0].mxu0
    %v1382 = vadd.f32 %v1341, %v1381
    %v1383 = vpop.f32.mrb[0].mxu0
    %v1384 = vpop.f32.mrb[0].mxu0
    %1385 = vdwg.mxu0
    %1386 = vmatprep.subr.bf16.mxu0 %v1029
    %1387 = vmatpush1.bf16.msra.mxu0 %v1028
    %1388 = vmatprep.subr.bf16.mxu0 %v1033
    %1389 = vmatpush1.bf16.msra.mxu0 %v1032
    %1390 = vmatprep.subr.bf16.mxu0 %v1037
    %1391 = vmatpush1.bf16.msra.mxu0 %v1036
    %1392 = vmatprep.subr.bf16.mxu0 %v1041
    %1393 = vmatpush1.bf16.msra.mxu0 %v1040
    %1394 = vmatprep.subr.bf16.mxu0 %v1045
    %1395 = vmatpush1.bf16.msra.mxu0 %v1044
    %1396 = vmatprep.subr.bf16.mxu0 %v1049
    %1397 = vmatpush1.bf16.msra.mxu0 %v1048
    %1398 = vmatprep.subr.bf16.mxu0 %v1053
    %1399 = vmatpush1.bf16.msra.mxu0 %v1052
    %1400 = vmatprep.subr.bf16.mxu0 %v1057
    %1401 = vmatpush1.bf16.msra.mxu0 %v1056
    %1402 = vmatprep.subr.bf16.mxu0 %v1061
    %1403 = vmatpush1.bf16.msra.mxu0 %v1060
    %1404 = vmatprep.subr.bf16.mxu0 %v1065
    %1405 = vmatpush1.bf16.msra.mxu0 %v1064
    %1406 = vmatprep.subr.bf16.mxu0 %v1069
    %1407 = vmatpush1.bf16.msra.mxu0 %v1068
    %1408 = vmatprep.subr.bf16.mxu0 %v1073
    %1409 = vmatpush1.bf16.msra.mxu0 %v1072
    %1410 = vmatprep.subr.bf16.mxu0 %v1077
    %1411 = vmatpush1.bf16.msra.mxu0 %v1076
    %1412 = vmatprep.subr.bf16.mxu0 %v1081
    %1413 = vmatpush1.bf16.msra.mxu0 %v1080
    %1414 = vmatprep.subr.bf16.mxu0 %v1085
    %1415 = vmatpush1.bf16.msra.mxu0 %v1084
    %1416 = vmatprep.subr.bf16.mxu0 %v1089
    %1417 = vmatpush1.bf16.msra.mxu0 %v1088
    %1418 = vmatprep.mubr.bf16.mxu0 %v290
    %1419 = vmatmul.mubr.bf16.gmra.mrb[0].mxu0 %v276
    %v1420 = vpop.f32.mrb[0].mxu0
    %v1421 = vadd.f32 %v1380, %v1420
    %v1422 = vpop.f32.mrb[0].mxu0
    %v1423 = vadd.f32 %v1382, %v1422
    %v1424 = vpop.f32.mrb[0].mxu0
    %v1425 = vpop.f32.mrb[0].mxu0
    %1426 = vdwg.mxu0
    %1427 = vmatprep.subr.bf16.mxu0 %v1093
    %1428 = vmatpush1.bf16.msra.mxu0 %v1092
    %1429 = vmatprep.subr.bf16.mxu0 %v1097
    %1430 = vmatpush1.bf16.msra.mxu0 %v1096
    %1431 = vmatprep.subr.bf16.mxu0 0
    %1432 = vmatpush1.bf16.msra.mxu0 0
    %1433 = vmatprep.subr.bf16.mxu0 0
    %1434 = vmatpush1.bf16.msra.mxu0 0
    %1435 = vmatprep.subr.bf16.mxu0 0
    %1436 = vmatpush1.bf16.msra.mxu0 0
    %1437 = vmatprep.subr.bf16.mxu0 0
    %1438 = vmatpush1.bf16.msra.mxu0 0
    %1439 = vmatprep.subr.bf16.mxu0 0
    %1440 = vmatpush1.bf16.msra.mxu0 0
    %1441 = vmatprep.subr.bf16.mxu0 0
    %1442 = vmatpush1.bf16.msra.mxu0 0
    %1443 = vmatprep.subr.bf16.mxu0 0
    %1444 = vmatpush1.bf16.msra.mxu0 0
    %1445 = vmatprep.subr.bf16.mxu0 0
    %1446 = vmatpush1.bf16.msra.mxu0 0
    %1447 = vmatprep.subr.bf16.mxu0 0
    %1448 = vmatpush1.bf16.msra.mxu0 0
    %1449 = vmatprep.subr.bf16.mxu0 0
    %1450 = vmatpush1.bf16.msra.mxu0 0
    %1451 = vmatprep.subr.bf16.mxu0 0
    %1452 = vmatpush1.bf16.msra.mxu0 0
    %1453 = vmatprep.subr.bf16.mxu0 0
    %1454 = vmatpush1.bf16.msra.mxu0 0
    %1455 = vmatprep.subr.bf16.mxu0 0
    %1456 = vmatpush1.bf16.msra.mxu0 0
    %1457 = vmatprep.subr.bf16.mxu0 0
    %1458 = vmatpush1.bf16.msra.mxu0 0
    %1459 = vmatprep.mubr.bf16.mxu0 0
    %1460 = vmatmul.mubr.bf16.gmra.mrb[0].mxu0 %v1302
    %v1461 = vpop.f32.mrb[0].mxu0
    %v1462 = vadd.f32 %v1421, %v1461
    %v1463 = vpop.f32.mrb[0].mxu0
    %v1464 = vadd.f32 %v1423, %v1463
    %v1465 = vpop.f32.mrb[0].mxu0
    %v1466 = vpop.f32.mrb[0].mxu0
    %1467 = vdwg.mxu0
    %1468 = vmatprep.subr.bf16.mxu0 %v903
    %1469 = vmatpush1.bf16.msra.mxu0 %v902
    %1470 = vmatprep.subr.bf16.mxu0 %v907
    %1471 = vmatpush1.bf16.msra.mxu0 %v906
    %1472 = vmatprep.subr.bf16.mxu0 %v911
    %1473 = vmatpush1.bf16.msra.mxu0 %v910
    %1474 = vmatprep.subr.bf16.mxu0 %v915
    %1475 = vmatpush1.bf16.msra.mxu0 %v914
    %1476 = vmatprep.subr.bf16.mxu0 %v919
    %1477 = vmatpush1.bf16.msra.mxu0 %v918
    %1478 = vmatprep.subr.bf16.mxu0 %v923
    %1479 = vmatpush1.bf16.msra.mxu0 %v922
    %1480 = vmatprep.subr.bf16.mxu0 %v927
    %1481 = vmatpush1.bf16.msra.mxu0 %v926
    %1482 = vmatprep.subr.bf16.mxu0 %v931
    %1483 = vmatpush1.bf16.msra.mxu0 %v930
    %1484 = vmatprep.subr.bf16.mxu0 %v935
    %1485 = vmatpush1.bf16.msra.mxu0 %v934
    %1486 = vmatprep.subr.bf16.mxu0 %v939
    %1487 = vmatpush1.bf16.msra.mxu0 %v938
    %1488 = vmatprep.subr.bf16.mxu0 %v943
    %1489 = vmatpush1.bf16.msra.mxu0 %v942
    %1490 = vmatprep.subr.bf16.mxu0 %v947
    %1491 = vmatpush1.bf16.msra.mxu0 %v946
    %1492 = vmatprep.subr.bf16.mxu0 %v951
    %1493 = vmatpush1.bf16.msra.mxu0 %v950
    %1494 = vmatprep.subr.bf16.mxu0 %v955
    %1495 = vmatpush1.bf16.msra.mxu0 %v954
    %1496 = vmatprep.subr.bf16.mxu0 %v959
    %1497 = vmatpush1.bf16.msra.mxu0 %v958
    %1498 = vmatprep.subr.bf16.mxu0 %v963
    %1499 = vmatpush1.bf16.msra.mxu0 %v962
    %1500 = vmatprep.mubr.bf16.mxu0 %v283
    %1501 = vmatmul.mubr.bf16.gmra.mrb[0].mxu0 %v269
    %v1502 = vpop.f32.mrb[0].mxu0
    %v1503 = vadd.f32 %v236, %v1502
    %v1504 = vpop.f32.mrb[0].mxu0
    %v1505 = vadd.f32 %v240, %v1504
    %v1506 = vpop.f32.mrb[0].mxu0
    %v1507 = vpop.f32.mrb[0].mxu0
    %1508 = vdwg.mxu0
    %1509 = vmatprep.subr.bf16.mxu0 %v967
    %1510 = vmatpush1.bf16.msra.mxu0 %v966
    %1511 = vmatprep.subr.bf16.mxu0 %v971
    %1512 = vmatpush1.bf16.msra.mxu0 %v970
    %1513 = vmatprep.subr.bf16.mxu0 %v975
    %1514 = vmatpush1.bf16.msra.mxu0 %v974
    %1515 = vmatprep.subr.bf16.mxu0 %v979
    %1516 = vmatpush1.bf16.msra.mxu0 %v978
    %1517 = vmatprep.subr.bf16.mxu0 %v983
    %1518 = vmatpush1.bf16.msra.mxu0 %v982
    %1519 = vmatprep.subr.bf16.mxu0 %v987
    %1520 = vmatpush1.bf16.msra.mxu0 %v986
    %1521 = vmatprep.subr.bf16.mxu0 %v991
    %1522 = vmatpush1.bf16.msra.mxu0 %v990
    %1523 = vmatprep.subr.bf16.mxu0 %v995
    %1524 = vmatpush1.bf16.msra.mxu0 %v994
    %1525 = vmatprep.subr.bf16.mxu0 %v999
    %1526 = vmatpush1.bf16.msra.mxu0 %v998
    %1527 = vmatprep.subr.bf16.mxu0 %v1003
    %1528 = vmatpush1.bf16.msra.mxu0 %v1002
    %1529 = vmatprep.subr.bf16.mxu0 %v1007
    %1530 = vmatpush1.bf16.msra.mxu0 %v1006
    %1531 = vmatprep.subr.bf16.mxu0 %v1011
    %1532 = vmatpush1.bf16.msra.mxu0 %v1010
    %1533 = vmatprep.subr.bf16.mxu0 %v1015
    %1534 = vmatpush1.bf16.msra.mxu0 %v1014
    %1535 = vmatprep.subr.bf16.mxu0 %v1019
    %1536 = vmatpush1.bf16.msra.mxu0 %v1018
    %1537 = vmatprep.subr.bf16.mxu0 %v1023
    %1538 = vmatpush1.bf16.msra.mxu0 %v1022
    %1539 = vmatprep.subr.bf16.mxu0 %v1027
    %1540 = vmatpush1.bf16.msra.mxu0 %v1026
    %1541 = vmatprep.mubr.bf16.mxu0 %v293
    %1542 = vmatmul.mubr.bf16.gmra.mrb[0].mxu0 %v291
    %v1543 = vpop.f32.mrb[0].mxu0
    %v1544 = vadd.f32 %v1503, %v1543
    %v1545 = vpop.f32.mrb[0].mxu0
    %v1546 = vadd.f32 %v1505, %v1545
    %v1547 = vpop.f32.mrb[0].mxu0
    %v1548 = vpop.f32.mrb[0].mxu0
    %1549 = vdwg.mxu0
    %1550 = vmatprep.subr.bf16.mxu0 %v1031
    %1551 = vmatpush1.bf16.msra.mxu0 %v1030
    %1552 = vmatprep.subr.bf16.mxu0 %v1035
    %1553 = vmatpush1.bf16.msra.mxu0 %v1034
    %1554 = vmatprep.subr.bf16.mxu0 %v1039
    %1555 = vmatpush1.bf16.msra.mxu0 %v1038
    %1556 = vmatprep.subr.bf16.mxu0 %v1043
    %1557 = vmatpush1.bf16.msra.mxu0 %v1042
    %1558 = vmatprep.subr.bf16.mxu0 %v1047
    %1559 = vmatpush1.bf16.msra.mxu0 %v1046
    %1560 = vmatprep.subr.bf16.mxu0 %v1051
    %1561 = vmatpush1.bf16.msra.mxu0 %v1050
    %1562 = vmatprep.subr.bf16.mxu0 %v1055
    %1563 = vmatpush1.bf16.msra.mxu0 %v1054
    %1564 = vmatprep.subr.bf16.mxu0 %v1059
    %1565 = vmatpush1.bf16.msra.mxu0 %v1058
    %1566 = vmatprep.subr.bf16.mxu0 %v1063
    %1567 = vmatpush1.bf16.msra.mxu0 %v1062
    %1568 = vmatprep.subr.bf16.mxu0 %v1067
    %1569 = vmatpush1.bf16.msra.mxu0 %v1066
    %1570 = vmatprep.subr.bf16.mxu0 %v1071
    %1571 = vmatpush1.bf16.msra.mxu0 %v1070
    %1572 = vmatprep.subr.bf16.mxu0 %v1075
    %1573 = vmatpush1.bf16.msra.mxu0 %v1074
    %1574 = vmatprep.subr.bf16.mxu0 %v1079
    %1575 = vmatpush1.bf16.msra.mxu0 %v1078
    %1576 = vmatprep.subr.bf16.mxu0 %v1083
    %1577 = vmatpush1.bf16.msra.mxu0 %v1082
    %1578 = vmatprep.subr.bf16.mxu0 %v1087
    %1579 = vmatpush1.bf16.msra.mxu0 %v1086
    %1580 = vmatprep.subr.bf16.mxu0 %v1091
    %1581 = vmatpush1.bf16.msra.mxu0 %v1090
    %1582 = vmatprep.mubr.bf16.mxu0 %v290
    %1583 = vmatmul.mubr.bf16.gmra.mrb[0].mxu0 %v276
    %v1584 = vpop.f32.mrb[0].mxu0
    %v1585 = vadd.f32 %v1544, %v1584
    %v1586 = vpop.f32.mrb[0].mxu0
    %v1587 = vadd.f32 %v1546, %v1586
    %v1588 = vpop.f32.mrb[0].mxu0
    %v1589 = vpop.f32.mrb[0].mxu0
    %1590 = vdwg.mxu0
    %1591 = vmatprep.subr.bf16.mxu0 %v1095
    %1592 = vmatpush1.bf16.msra.mxu0 %v1094
    %1593 = vmatprep.subr.bf16.mxu0 %v1099
    %1594 = vmatpush1.bf16.msra.mxu0 %v1098
    %1595 = vmatprep.subr.bf16.mxu0 0
    %1596 = vmatpush1.bf16.msra.mxu0 0
    %1597 = vmatprep.subr.bf16.mxu0 0
    %1598 = vmatpush1.bf16.msra.mxu0 0
    %1599 = vmatprep.subr.bf16.mxu0 0
    %1600 = vmatpush1.bf16.msra.mxu0 0
    %1601 = vmatprep.subr.bf16.mxu0 0
    %1602 = vmatpush1.bf16.msra.mxu0 0
    %1603 = vmatprep.subr.bf16.mxu0 0
    %1604 = vmatpush1.bf16.msra.mxu0 0
    %1605 = vmatprep.subr.bf16.mxu0 0
    %1606 = vmatpush1.bf16.msra.mxu0 0
    %1607 = vmatprep.subr.bf16.mxu0 0
    %1608 = vmatpush1.bf16.msra.mxu0 0
    %1609 = vmatprep.subr.bf16.mxu0 0
    %1610 = vmatpush1.bf16.msra.mxu0 0
    %1611 = vmatprep.subr.bf16.mxu0 0
    %1612 = vmatpush1.bf16.msra.mxu0 0
    %1613 = vmatprep.subr.bf16.mxu0 0
    %1614 = vmatpush1.bf16.msra.mxu0 0
    %1615 = vmatprep.subr.bf16.mxu0 0
    %1616 = vmatpush1.bf16.msra.mxu0 0
    %1617 = vmatprep.subr.bf16.mxu0 0
    %1618 = vmatpush1.bf16.msra.mxu0 0
    %1619 = vmatprep.subr.bf16.mxu0 0
    %1620 = vmatpush1.bf16.msra.mxu0 0
    %1621 = vmatprep.subr.bf16.mxu0 0
    %1622 = vmatpush1.bf16.msra.mxu0 0
    %1623 = vmatprep.mubr.bf16.mxu0 0
    %1624 = vmatmul.mubr.bf16.gmra.mrb[0].mxu0 %v1302
    %v1625 = vpop.f32.mrb[0].mxu0
    %v1626 = vadd.f32 %v1585, %v1625
    %v1627 = vpop.f32.mrb[0].mxu0
    %v1628 = vadd.f32 %v1587, %v1627
    %v1629 = vpop.f32.mrb[0].mxu0
    %v1630 = vpop.f32.mrb[0].mxu0
    %1631 = vdwg.mxu0
    %v1632 = vmax.f32 %v1462, 0.0
    %v1633 = vmax.f32 %v1464, 0.0
    %v1634 = vmax.f32 %v1626, 0.0
    %v1635 = vmax.f32 %v1628, 0.0
    %v1636 = vpack.c.bf16 %v1632, %v1632
    %v1637 = vpack.c.bf16 %v1633, %v1633
    %v1638 = vpack.c.bf16 %v1634, %v1634
    %v1639 = vpack.c.bf16 %v1635, %v1635
    %v1640 = vld [vmem:[%s3] sm:$0xf]
    %v1641 = vld [vmem:[%s3 + $0x4] sm:$0xf]
    %v1642 = vld [vmem:[%s3 + $0x8] sm:$0xf]
    %v1643 = vld [vmem:[%s3 + $0xc] sm:$0xf]
    %v1644 = vld [vmem:[%s3 + $0x10] sm:$0xf]
    %v1645 = vld [vmem:[%s3 + $0x14] sm:$0xf]
    %v1646 = vld [vmem:[%s3 + $0x18] sm:$0xf]
    %v1647 = vld [vmem:[%s3 + $0x1c] sm:$0xf]
    %v1648 = vld [vmem:[%s3 + $0x20] sm:$0xf]
    %v1649 = vld [vmem:[%s3 + $0x24] sm:$0xf]
    %v1650 = vld [vmem:[%s3 + $0x28] sm:$0xf]
    %v1651 = vld [vmem:[%s3 + $0x2c] sm:$0xf]
    %v1652 = vld [vmem:[%s3 + $0x30] sm:$0xf]
    %v1653 = vld [vmem:[%s3 + $0x34] sm:$0xf]
    %v1654 = vld [vmem:[%s3 + $0x38] sm:$0xf]
    %v1655 = vld [vmem:[%s3 + $0x3c] sm:$0xf]
    %v1656 = vld [vmem:[%s3 + $0x40] sm:$0xf]
    %v1657 = vld [vmem:[%s3 + $0x44] sm:$0xf]
    %v1658 = vld [vmem:[%s3 + $0x48] sm:$0xf]
    %v1659 = vld [vmem:[%s3 + $0x4c] sm:$0xf]
    %v1660 = vld [vmem:[%s3 + $0x50] sm:$0xf]
    %v1661 = vld [vmem:[%s3 + $0x54] sm:$0xf]
    %v1662 = vld [vmem:[%s3 + $0x58] sm:$0xf]
    %v1663 = vld [vmem:[%s3 + $0x5c] sm:$0xf]
    %v1664 = vld [vmem:[%s3 + $0x60] sm:$0xf]
    %v1665 = vld [vmem:[%s3 + $0x64] sm:$0xf]
    %v1666 = vld [vmem:[%s3 + $0x68] sm:$0xf]
    %v1667 = vld [vmem:[%s3 + $0x6c] sm:$0xf]
    %v1668 = vld [vmem:[%s3 + $0x70] sm:$0xf]
    %v1669 = vld [vmem:[%s3 + $0x74] sm:$0xf]
    %v1670 = vld [vmem:[%s3 + $0x78] sm:$0xf]
    %v1671 = vld [vmem:[%s3 + $0x7c] sm:$0xf]
    %v1672 = vld [vmem:[%s3 + $0x80] sm:$0xf]
    %v1673 = vld [vmem:[%s3 + $0x84] sm:$0xf]
    %v1674 = vld [vmem:[%s3 + $0x88] sm:$0xf]
    %v1675 = vld [vmem:[%s3 + $0x8c] sm:$0xf]
    %v1676 = vld [vmem:[%s3 + $0x90] sm:$0xf]
    %v1677 = vld [vmem:[%s3 + $0x94] sm:$0xf]
    %v1678 = vld [vmem:[%s3 + $0x98] sm:$0xf]
    %v1679 = vld [vmem:[%s3 + $0x9c] sm:$0xf]
    %v1680 = vld [vmem:[%s3 + $0xa0] sm:$0xf]
    %v1681 = vld [vmem:[%s3 + $0xa4] sm:$0xf]
    %v1682 = vld [vmem:[%s3 + $0xa8] sm:$0xf]
    %v1683 = vld [vmem:[%s3 + $0xac] sm:$0xf]
    %v1684 = vld [vmem:[%s3 + $0xb0] sm:$0xf]
    %v1685 = vld [vmem:[%s3 + $0xb4] sm:$0xf]
    %v1686 = vld [vmem:[%s3 + $0xb8] sm:$0xf]
    %v1687 = vld [vmem:[%s3 + $0xbc] sm:$0xf]
    %v1688 = vld [vmem:[%s3 + $0xc0] sm:$0xf]
    %v1689 = vld [vmem:[%s3 + $0xc4] sm:$0xf]
    %v1690 = vld [vmem:[%s3 + $0xc8] sm:$0xf]
    %v1691 = vld [vmem:[%s3 + $0xcc] sm:$0xf]
    %v1692 = vld [vmem:[%s3 + $0xd0] sm:$0xf]
    %v1693 = vld [vmem:[%s3 + $0xd4] sm:$0xf]
    %v1694 = vld [vmem:[%s3 + $0xd8] sm:$0xf]
    %v1695 = vld [vmem:[%s3 + $0xdc] sm:$0xf]
    %v1696 = vld [vmem:[%s3 + $0xe0] sm:$0xf]
    %v1697 = vld [vmem:[%s3 + $0xe4] sm:$0xf]
    %v1698 = vld [vmem:[%s3 + $0xe8] sm:$0xf]
    %v1699 = vld [vmem:[%s3 + $0xec] sm:$0xf]
    %v1700 = vld [vmem:[%s3 + $0xf0] sm:$0xf]
    %v1701 = vld [vmem:[%s3 + $0xf4] sm:$0xf]
    %v1702 = vld [vmem:[%s3 + $0xf8] sm:$0xf]
    %v1703 = vld [vmem:[%s3 + $0xfc] sm:$0xf]
    %v1704 = vld [vmem:[%s4] sm:$0x1]
    %v1706 = vlaneseq
    %v1707 = vshrl.u32 %v1706, 7
    %v1708 = vsub.s32 0, %v1707
    %v1709 = vrot.slane %v1704, %v1708
    %v1775 = vunpack.c.l.b16 %v1640
    %v1776 = vunpack.c.l.b16 %v1641
    %v1777 = vunpack.c.l.b16 %v1642
    %v1778 = vunpack.c.l.b16 %v1643
    %v1779 = vunpack.c.l.b16 %v1644
    %v1780 = vunpack.c.l.b16 %v1645
    %v1781 = vunpack.c.l.b16 %v1646
    %v1782 = vunpack.c.l.b16 %v1647
    %v1783 = vunpack.c.l.b16 %v1648
    %v1784 = vunpack.c.l.b16 %v1649
    %v1785 = vunpack.c.l.b16 %v1650
    %v1786 = vunpack.c.l.b16 %v1651
    %v1787 = vunpack.c.l.b16 %v1652
    %v1788 = vunpack.c.l.b16 %v1653
    %v1789 = vunpack.c.l.b16 %v1654
    %v1790 = vunpack.c.l.b16 %v1655
    %v1791 = vunpack.c.l.b16 %v1656
    %v1792 = vunpack.c.l.b16 %v1657
    %v1793 = vunpack.c.l.b16 %v1658
    %v1794 = vunpack.c.l.b16 %v1659
    %v1795 = vunpack.c.l.b16 %v1660
    %v1796 = vunpack.c.l.b16 %v1661
    %v1797 = vunpack.c.l.b16 %v1662
    %v1798 = vunpack.c.l.b16 %v1663
    %v1799 = vunpack.c.l.b16 %v1664
    %v1800 = vunpack.c.l.b16 %v1665
    %v1801 = vunpack.c.l.b16 %v1666
    %v1802 = vunpack.c.l.b16 %v1667
    %v1803 = vunpack.c.l.b16 %v1668
    %v1804 = vunpack.c.l.b16 %v1669
    %v1805 = vunpack.c.l.b16 %v1670
    %v1806 = vunpack.c.l.b16 %v1671
    %v1807 = vunpack.c.l.b16 %v1672
    %v1808 = vunpack.c.l.b16 %v1673
    %v1809 = vunpack.c.l.b16 %v1674
    %v1810 = vunpack.c.l.b16 %v1675
    %v1811 = vunpack.c.l.b16 %v1676
    %v1812 = vunpack.c.l.b16 %v1677
    %v1813 = vunpack.c.l.b16 %v1678
    %v1814 = vunpack.c.l.b16 %v1679
    %v1815 = vunpack.c.l.b16 %v1680
    %v1816 = vunpack.c.l.b16 %v1681
    %v1817 = vunpack.c.l.b16 %v1682
    %v1818 = vunpack.c.l.b16 %v1683
    %v1819 = vunpack.c.l.b16 %v1684
    %v1820 = vunpack.c.l.b16 %v1685
    %v1821 = vunpack.c.l.b16 %v1686
    %v1822 = vunpack.c.l.b16 %v1687
    %v1823 = vunpack.c.l.b16 %v1688
    %v1824 = vunpack.c.l.b16 %v1689
    %v1825 = vunpack.c.l.b16 %v1690
    %v1826 = vunpack.c.l.b16 %v1691
    %v1827 = vunpack.c.l.b16 %v1692
    %v1828 = vunpack.c.l.b16 %v1693
    %v1829 = vunpack.c.l.b16 %v1694
    %v1830 = vunpack.c.l.b16 %v1695
    %v1831 = vunpack.c.l.b16 %v1696
    %v1832 = vunpack.c.l.b16 %v1697
    %v1833 = vunpack.c.l.b16 %v1698
    %v1834 = vunpack.c.l.b16 %v1699
    %v1835 = vunpack.c.l.b16 %v1700
    %v1836 = vunpack.c.l.b16 %v1701
    %v1837 = vunpack.c.l.b16 %v1702
    %v1838 = vunpack.c.l.b16 %v1703
    %v1839 = vpack.c.b16 %v1776, %v1775
    %v1840 = vpack.c.b16 %v1778, %v1777
    %v1841 = vpack.c.b16 %v1780, %v1779
    %v1842 = vpack.c.b16 %v1782, %v1781
    %v1843 = vpack.c.b16 %v1784, %v1783
    %v1844 = vpack.c.b16 %v1786, %v1785
    %v1845 = vpack.c.b16 %v1788, %v1787
    %v1846 = vpack.c.b16 %v1790, %v1789
    %v1847 = vpack.c.b16 %v1792, %v1791
    %v1848 = vpack.c.b16 %v1794, %v1793
    %v1849 = vpack.c.b16 %v1796, %v1795
    %v1850 = vpack.c.b16 %v1798, %v1797
    %v1851 = vpack.c.b16 %v1800, %v1799
    %v1852 = vpack.c.b16 %v1802, %v1801
    %v1853 = vpack.c.b16 %v1804, %v1803
    %v1854 = vpack.c.b16 %v1806, %v1805
    %v1855 = vpack.c.b16 %v1808, %v1807
    %v1856 = vpack.c.b16 %v1810, %v1809
    %v1857 = vpack.c.b16 %v1812, %v1811
    %v1858 = vpack.c.b16 %v1814, %v1813
    %v1859 = vpack.c.b16 %v1816, %v1815
    %v1860 = vpack.c.b16 %v1818, %v1817
    %v1861 = vpack.c.b16 %v1820, %v1819
    %v1862 = vpack.c.b16 %v1822, %v1821
    %v1863 = vpack.c.b16 %v1824, %v1823
    %v1864 = vpack.c.b16 %v1826, %v1825
    %v1865 = vpack.c.b16 %v1828, %v1827
    %v1866 = vpack.c.b16 %v1830, %v1829
    %v1867 = vpack.c.b16 %v1832, %v1831
    %v1868 = vpack.c.b16 %v1834, %v1833
    %v1869 = vpack.c.b16 %v1836, %v1835
    %v1870 = vpack.c.b16 %v1838, %v1837
    %1903 = vmatprep.subr.bf16.mxu0 0
    %1904 = vmatpush1.bf16.msra.mxu0 %v1839
    %1905 = vmatprep.subr.bf16.mxu0 0
    %1906 = vmatpush1.bf16.msra.mxu0 %v1840
    %1907 = vmatprep.subr.bf16.mxu0 0
    %1908 = vmatpush1.bf16.msra.mxu0 %v1841
    %1909 = vmatprep.subr.bf16.mxu0 0
    %1910 = vmatpush1.bf16.msra.mxu0 %v1842
    %1911 = vmatprep.subr.bf16.mxu0 0
    %1912 = vmatpush1.bf16.msra.mxu0 %v1843
    %1913 = vmatprep.subr.bf16.mxu0 0
    %1914 = vmatpush1.bf16.msra.mxu0 %v1844
    %1915 = vmatprep.subr.bf16.mxu0 0
    %1916 = vmatpush1.bf16.msra.mxu0 %v1845
    %1917 = vmatprep.subr.bf16.mxu0 0
    %1918 = vmatpush1.bf16.msra.mxu0 %v1846
    %1919 = vmatprep.subr.bf16.mxu0 0
    %1920 = vmatpush1.bf16.msra.mxu0 %v1847
    %1921 = vmatprep.subr.bf16.mxu0 0
    %1922 = vmatpush1.bf16.msra.mxu0 %v1848
    %1923 = vmatprep.subr.bf16.mxu0 0
    %1924 = vmatpush1.bf16.msra.mxu0 %v1849
    %1925 = vmatprep.subr.bf16.mxu0 0
    %1926 = vmatpush1.bf16.msra.mxu0 %v1850
    %1927 = vmatprep.subr.bf16.mxu0 0
    %1928 = vmatpush1.bf16.msra.mxu0 %v1851
    %1929 = vmatprep.subr.bf16.mxu0 0
    %1930 = vmatpush1.bf16.msra.mxu0 %v1852
    %1931 = vmatprep.subr.bf16.mxu0 0
    %1932 = vmatpush1.bf16.msra.mxu0 %v1853
    %1933 = vmatprep.subr.bf16.mxu0 0
    %1934 = vmatpush1.bf16.msra.mxu0 %v1854
    %1935 = vmatprep.mubr.bf16.mxu0 %v1637
    %1936 = vmatmul.mubr.bf16.gmra.mrb[0].mxu0 %v1636
    %v1937 = vpop.f32.mrb[0].mxu0
    %v1938 = vadd.f32 %v1709, %v1937
    %v1939 = vpop.f32.mrb[0].mxu0
    %v1940 = vpop.f32.mrb[0].mxu0
    %v1941 = vpop.f32.mrb[0].mxu0
    %1942 = vdwg.mxu0
    %1943 = vmatprep.subr.bf16.mxu0 0
    %1944 = vmatpush1.bf16.msra.mxu0 %v1855
    %1945 = vmatprep.subr.bf16.mxu0 0
    %1946 = vmatpush1.bf16.msra.mxu0 %v1856
    %1947 = vmatprep.subr.bf16.mxu0 0
    %1948 = vmatpush1.bf16.msra.mxu0 %v1857
    %1949 = vmatprep.subr.bf16.mxu0 0
    %1950 = vmatpush1.bf16.msra.mxu0 %v1858
    %1951 = vmatprep.subr.bf16.mxu0 0
    %1952 = vmatpush1.bf16.msra.mxu0 %v1859
    %1953 = vmatprep.subr.bf16.mxu0 0
    %1954 = vmatpush1.bf16.msra.mxu0 %v1860
    %1955 = vmatprep.subr.bf16.mxu0 0
    %1956 = vmatpush1.bf16.msra.mxu0 %v1861
    %1957 = vmatprep.subr.bf16.mxu0 0
    %1958 = vmatpush1.bf16.msra.mxu0 %v1862
    %1959 = vmatprep.subr.bf16.mxu0 0
    %1960 = vmatpush1.bf16.msra.mxu0 %v1863
    %1961 = vmatprep.subr.bf16.mxu0 0
    %1962 = vmatpush1.bf16.msra.mxu0 %v1864
    %1963 = vmatprep.subr.bf16.mxu0 0
    %1964 = vmatpush1.bf16.msra.mxu0 %v1865
    %1965 = vmatprep.subr.bf16.mxu0 0
    %1966 = vmatpush1.bf16.msra.mxu0 %v1866
    %1967 = vmatprep.subr.bf16.mxu0 0
    %1968 = vmatpush1.bf16.msra.mxu0 %v1867
    %1969 = vmatprep.subr.bf16.mxu0 0
    %1970 = vmatpush1.bf16.msra.mxu0 %v1868
    %1971 = vmatprep.subr.bf16.mxu0 0
    %1972 = vmatpush1.bf16.msra.mxu0 %v1869
    %1973 = vmatprep.subr.bf16.mxu0 0
    %1974 = vmatpush1.bf16.msra.mxu0 %v1870
    %1975 = vmatprep.mubr.bf16.mxu0 %v1639
    %1976 = vmatmul.mubr.bf16.gmra.mrb[0].mxu0 %v1638
    %v1977 = vpop.f32.mrb[0].mxu0
    %v1978 = vadd.f32 %v1938, %v1977
    %v1979 = vpop.f32.mrb[0].mxu0
    %v1980 = vpop.f32.mrb[0].mxu0
    %v1981 = vpop.f32.mrb[0].mxu0
    %1982 = vdwg.mxu0
    %vm1983 = vcmask 74752
    %1984 = vst.msk [vmem:[#allocation2] sm:$0x3] %vm1983, %v1978
    // Predicated region
    $region22: #{net_forward.5} parent=1 // pred_check
      _
    $region23: #{net_forward.5} parent=1 // pred_check_branch
      %1986 = sbr.rel (0) target = $region25
    $region24: #{net_forward.5} parent=1 // pred_region
      %s1988 = ssub.s32 32, 32
      %1989 = vsyncadd [#allocation3], %s1988
      %s1991 = sshll.u32 [#allocation2], 4
      %s1992 = int_to_ptr.vmem [resolvable:$true] %s1991
      %1994 = dma.vmem_to_hbm [thread:$0]  %s1992, 32, %s5, [#allocation3]
    $region25: #{net_forward.5} parent=1 // pred_fallthru
      _
    // Predicated region
    $region26: #{net_forward.5} parent=1 // pred_check
      _
    $region27: #{net_forward.5} parent=1 // pred_check_branch
      %1996 = sbr.rel (0) target = $region29
    $region28: #{net_forward.5} parent=1 // pred_region
      %1997 = dma.done [#allocation3], 32
    $region29: #{net_forward.5} parent=1 // pred_fallthru
      _
    %1998 = vsyncpa [#allocation3], 1

// kernel: net_forward.4
$region0: #{net_forward.4}
  #allocation0 [shape = 'u32[]', space=smem, size = 0x4, offset = 0x4, fixed_abs, tag = 'smem constant byte address 0x4 - core index']
  #allocation1 [shape = 'u32[144,128]{1,0:T(1,128)}', space=vmem, size = 0x12000, scoped, tag = 'internal scratch']
  %s0 = inlined_call_operand.vmem [shape: bf16[6,8,240], index: 0, kind: input, shape index: {}]
  %s1 = inlined_call_operand.vmem [shape: bf16[5,240,400], index: 1, kind: input, shape index: {}]
  %s2 = inlined_call_operand.vmem [shape: f32[1,200], index: 2, kind: input, shape index: {}]
  %s3 = inlined_call_operand.vmem [shape: bf16[8,200], index: 3, kind: output, shape index: {}]
  %s4 = sld [smem:[#allocation0]]
  $region22: #{net_forward.4} parent=0
    _
  %s6 = ssub.s32 1, %s4
  %s7 = scalar_select 0, %s6, %s4
  // Predicated region
  $region2: #{net_forward.4} parent=0 // pred_check
    _
  $region3: #{net_forward.4} parent=0 // pred_check_branch
    %9 = sbr.rel (0) target = $region5
  $region4: #{net_forward.4} parent=0 // pred_region
    _
  $region5: #{net_forward.4} parent=0 // pred_fallthru
    _
  // Predicated region
  $region6: #{net_forward.4} parent=0 // pred_check
    _
  $region7: #{net_forward.4} parent=0 // pred_check_branch
    %11 = sbr.rel (0) target = $region9
  $region8: #{net_forward.4} parent=0 // pred_region
    _
  $region9: #{net_forward.4} parent=0 // pred_fallthru
    _
  // Predicated region
  $region10: #{net_forward.4} parent=0 // pred_check
    _
  $region11: #{net_forward.4} parent=0 // pred_check_branch
    %13 = sbr.rel (0) target = $region13
  $region12: #{net_forward.4} parent=0 // pred_region
    _
  $region13: #{net_forward.4} parent=0 // pred_fallthru
    _
  %v15 = vld [vmem:[%s0] sm:$0xff]
  %v16 = vld [vmem:[%s1] sm:$0xff]
  %v17 = vld [vmem:[%s1 + $0x8] sm:$0xff]
  %v18 = vld [vmem:[%s1 + $0x10] sm:$0xff]
  %v19 = vld [vmem:[%s1 + $0x18] sm:$0xff]
  %v20 = vld [vmem:[%s1 + $0x20] sm:$0xff]
  %v21 = vld [vmem:[%s1 + $0x28] sm:$0xff]
  %v22 = vld [vmem:[%s1 + $0x30] sm:$0xff]
  %v23 = vld [vmem:[%s1 + $0x38] sm:$0xff]
  %v24 = vld [vmem:[%s1 + $0x40] sm:$0xff]
  %v25 = vld [vmem:[%s1 + $0x48] sm:$0xff]
  %v26 = vld [vmem:[%s1 + $0x50] sm:$0xff]
  %v27 = vld [vmem:[%s1 + $0x58] sm:$0xff]
  %v28 = vld [vmem:[%s1 + $0x60] sm:$0xff]
  %v29 = vld [vmem:[%s1 + $0x68] sm:$0xff]
  %v30 = vld [vmem:[%s1 + $0x70] sm:$0xff]
  %v31 = vld [vmem:[%s1 + $0x78] sm:$0xff]
  %v32 = vld [vmem:[%s1 + $0x80] sm:$0xff]
  %v33 = vld [vmem:[%s1 + $0x88] sm:$0xff]
  %v34 = vld [vmem:[%s1 + $0x90] sm:$0xff]
  %v35 = vld [vmem:[%s1 + $0x98] sm:$0xff]
  %v36 = vld [vmem:[%s1 + $0xa0] sm:$0xff]
  %v37 = vld [vmem:[%s1 + $0xa8] sm:$0xff]
  %v38 = vld [vmem:[%s1 + $0xb0] sm:$0xff]
  %v39 = vld [vmem:[%s1 + $0xb8] sm:$0xff]
  %v40 = vld [vmem:[%s1 + $0xc0] sm:$0xff]
  %v41 = vld [vmem:[%s1 + $0xc8] sm:$0xff]
  %v42 = vld [vmem:[%s1 + $0xd0] sm:$0xff]
  %v43 = vld [vmem:[%s1 + $0xd8] sm:$0xff]
  %v44 = vld [vmem:[%s1 + $0xe0] sm:$0xff]
  %v45 = vld [vmem:[%s1 + $0xe8] sm:$0xff]
  %v46 = vld [vmem:[%s1 + $0xf0] sm:$0xff]
  %v47 = vld [vmem:[%s1 + $0xf8] sm:$0xff]
  %v48 = vld [vmem:[%s1 + $0x100] sm:$0xff]
  %v49 = vld [vmem:[%s1 + $0x108] sm:$0xff]
  %v50 = vld [vmem:[%s1 + $0x110] sm:$0xff]
  %v51 = vld [vmem:[%s1 + $0x118] sm:$0xff]
  %v52 = vld [vmem:[%s1 + $0x120] sm:$0xff]
  %v53 = vld [vmem:[%s1 + $0x128] sm:$0xff]
  %v54 = vld [vmem:[%s1 + $0x130] sm:$0xff]
  %v55 = vld [vmem:[%s1 + $0x138] sm:$0xff]
  %v56 = vld [vmem:[%s1 + $0x140] sm:$0xff]
  %v57 = vld [vmem:[%s1 + $0x148] sm:$0xff]
  %v58 = vld [vmem:[%s1 + $0x150] sm:$0xff]
  %v59 = vld [vmem:[%s1 + $0x158] sm:$0xff]
  %v60 = vld [vmem:[%s1 + $0x160] sm:$0xff]
  %v61 = vld [vmem:[%s1 + $0x168] sm:$0xff]
  %v62 = vld [vmem:[%s1 + $0x170] sm:$0xff]
  %v63 = vld [vmem:[%s1 + $0x178] sm:$0xff]
  %v64 = vld [vmem:[%s1 + $0x180] sm:$0xff]
  %v65 = vld [vmem:[%s1 + $0x188] sm:$0xff]
  %v66 = vld [vmem:[%s1 + $0x190] sm:$0xff]
  %v67 = vld [vmem:[%s1 + $0x198] sm:$0xff]
  %v68 = vld [vmem:[%s1 + $0x1a0] sm:$0xff]
  %v69 = vld [vmem:[%s1 + $0x1a8] sm:$0xff]
  %v70 = vld [vmem:[%s1 + $0x1b0] sm:$0xff]
  %v71 = vld [vmem:[%s1 + $0x1b8] sm:$0xff]
  %v72 = vld [vmem:[%s1 + $0x1c0] sm:$0xff]
  %v73 = vld [vmem:[%s1 + $0x1c8] sm:$0xff]
  %v74 = vld [vmem:[%s1 + $0x1d0] sm:$0xff]
  %v75 = vld [vmem:[%s1 + $0x1d8] sm:$0xff]
  %s76 = scalar_lea.vmem %s0, 8
  %v77 = vld [vmem:[%s76] sm:$0xff]
  %s78 = scalar_lea.vmem %s1, 480
  %v79 = vld [vmem:[%s78] sm:$0xff]
  %v80 = vld [vmem:[%s78 + $0x8] sm:$0xff]
  %v81 = vld [vmem:[%s78 + $0x10] sm:$0xff]
  %v82 = vld [vmem:[%s78 + $0x18] sm:$0xff]
  %v83 = vld [vmem:[%s78 + $0x20] sm:$0xff]
  %v84 = vld [vmem:[%s78 + $0x28] sm:$0xff]
  %v85 = vld [vmem:[%s78 + $0x30] sm:$0xff]
  %v86 = vld [vmem:[%s78 + $0x38] sm:$0xff]
  %v87 = vld [vmem:[%s78 + $0x40] sm:$0xff]
  %v88 = vld [vmem:[%s78 + $0x48] sm:$0xff]
  %v89 = vld [vmem:[%s78 + $0x50] sm:$0xff]
  %v90 = vld [vmem:[%s78 + $0x58] sm:$0xff]
  %v91 = vld [vmem:[%s78 + $0x60] sm:$0xff]
  %v92 = vld [vmem:[%s78 + $0x68] sm:$0xff]
  %v93 = vld [vmem:[%s78 + $0x70] sm:$0xff]
  %v94 = vld [vmem:[%s78 + $0x78] sm:$0xff]
  %v95 = vld [vmem:[%s78 + $0x80] sm:$0xff]
  %v96 = vld [vmem:[%s78 + $0x88] sm:$0xff]
  %v97 = vld [vmem:[%s78 + $0x90] sm:$0xff]
  %v98 = vld [vmem:[%s78 + $0x98] sm:$0xff]
  %v99 = vld [vmem:[%s78 + $0xa0] sm:$0xff]
  %v100 = vld [vmem:[%s78 + $0xa8] sm:$0xff]
  %v101 = vld [vmem:[%s78 + $0xb0] sm:$0xff]
  %v102 = vld [vmem:[%s78 + $0xb8] sm:$0xff]
  %v103 = vld [vmem:[%s78 + $0xc0] sm:$0xff]
  %v104 = vld [vmem:[%s78 + $0xc8] sm:$0xff]
  %v105 = vld [vmem:[%s78 + $0xd0] sm:$0xff]
  %v106 = vld [vmem:[%s78 + $0xd8] sm:$0xff]
  %v107 = vld [vmem:[%s78 + $0xe0] sm:$0xff]
  %v108 = vld [vmem:[%s78 + $0xe8] sm:$0xff]
  %v109 = vld [vmem:[%s78 + $0xf0] sm:$0xff]
  %v110 = vld [vmem:[%s78 + $0xf8] sm:$0xff]
  %v111 = vld [vmem:[%s78 + $0x100] sm:$0xff]
  %v112 = vld [vmem:[%s78 + $0x108] sm:$0xff]
  %v113 = vld [vmem:[%s78 + $0x110] sm:$0xff]
  %v114 = vld [vmem:[%s78 + $0x118] sm:$0xff]
  %v115 = vld [vmem:[%s78 + $0x120] sm:$0xff]
  %v116 = vld [vmem:[%s78 + $0x128] sm:$0xff]
  %v117 = vld [vmem:[%s78 + $0x130] sm:$0xff]
  %v118 = vld [vmem:[%s78 + $0x138] sm:$0xff]
  %v119 = vld [vmem:[%s78 + $0x140] sm:$0xff]
  %v120 = vld [vmem:[%s78 + $0x148] sm:$0xff]
  %v121 = vld [vmem:[%s78 + $0x150] sm:$0xff]
  %v122 = vld [vmem:[%s78 + $0x158] sm:$0xff]
  %v123 = vld [vmem:[%s78 + $0x160] sm:$0xff]
  %v124 = vld [vmem:[%s78 + $0x168] sm:$0xff]
  %v125 = vld [vmem:[%s78 + $0x170] sm:$0xff]
  %v126 = vld [vmem:[%s78 + $0x178] sm:$0xff]
  %v127 = vld [vmem:[%s78 + $0x180] sm:$0xff]
  %v128 = vld [vmem:[%s78 + $0x188] sm:$0xff]
  %v129 = vld [vmem:[%s78 + $0x190] sm:$0xff]
  %v130 = vld [vmem:[%s78 + $0x198] sm:$0xff]
  %v131 = vld [vmem:[%s78 + $0x1a0] sm:$0xff]
  %v132 = vld [vmem:[%s78 + $0x1a8] sm:$0xff]
  %v133 = vld [vmem:[%s78 + $0x1b0] sm:$0xff]
  %v134 = vld [vmem:[%s78 + $0x1b8] sm:$0xff]
  %v135 = vld [vmem:[%s78 + $0x1c0] sm:$0xff]
  %v136 = vld [vmem:[%s78 + $0x1c8] sm:$0xff]
  %v137 = vld [vmem:[%s78 + $0x1d0] sm:$0xff]
  %v138 = vld [vmem:[%s78 + $0x1d8] sm:$0xff]
  %v140 = vunpack.c.l.b16 %v77
  %v141 = vunpack.c.h.b16 %v77
  %v142 = vpack.c.b16 %v140, %v140
  %v143 = vpack.c.b16 %v141, %v141
  %v205 = vunpack.c.l.b16 %v79
  %v206 = vunpack.c.h.b16 %v79
  %v207 = vunpack.c.l.b16 %v80
  %v208 = vunpack.c.h.b16 %v80
  %v209 = vunpack.c.l.b16 %v81
  %v210 = vunpack.c.h.b16 %v81
  %v211 = vunpack.c.l.b16 %v82
  %v212 = vunpack.c.h.b16 %v82
  %v213 = vunpack.c.l.b16 %v83
  %v214 = vunpack.c.h.b16 %v83
  %v215 = vunpack.c.l.b16 %v84
  %v216 = vunpack.c.h.b16 %v84
  %v217 = vunpack.c.l.b16 %v85
  %v218 = vunpack.c.h.b16 %v85
  %v219 = vunpack.c.l.b16 %v86
  %v220 = vunpack.c.h.b16 %v86
  %v221 = vunpack.c.l.b16 %v87
  %v222 = vunpack.c.h.b16 %v87
  %v223 = vunpack.c.l.b16 %v88
  %v224 = vunpack.c.h.b16 %v88
  %v225 = vunpack.c.l.b16 %v89
  %v226 = vunpack.c.h.b16 %v89
  %v227 = vunpack.c.l.b16 %v90
  %v228 = vunpack.c.h.b16 %v90
  %v229 = vunpack.c.l.b16 %v91
  %v230 = vunpack.c.h.b16 %v91
  %v231 = vunpack.c.l.b16 %v92
  %v232 = vunpack.c.h.b16 %v92
  %v233 = vunpack.c.l.b16 %v93
  %v234 = vunpack.c.h.b16 %v93
  %v235 = vunpack.c.l.b16 %v94
  %v236 = vunpack.c.h.b16 %v94
  %v237 = vunpack.c.l.b16 %v95
  %v238 = vunpack.c.h.b16 %v95
  %v239 = vunpack.c.l.b16 %v96
  %v240 = vunpack.c.h.b16 %v96
  %v241 = vunpack.c.l.b16 %v97
  %v242 = vunpack.c.h.b16 %v97
  %v243 = vunpack.c.l.b16 %v98
  %v244 = vunpack.c.h.b16 %v98
  %v245 = vunpack.c.l.b16 %v99
  %v246 = vunpack.c.h.b16 %v99
  %v247 = vunpack.c.l.b16 %v100
  %v248 = vunpack.c.h.b16 %v100
  %v249 = vunpack.c.l.b16 %v101
  %v250 = vunpack.c.h.b16 %v101
  %v251 = vunpack.c.l.b16 %v102
  %v252 = vunpack.c.h.b16 %v102
  %v253 = vunpack.c.l.b16 %v103
  %v254 = vunpack.c.h.b16 %v103
  %v255 = vunpack.c.l.b16 %v104
  %v256 = vunpack.c.h.b16 %v104
  %v257 = vunpack.c.l.b16 %v105
  %v258 = vunpack.c.h.b16 %v105
  %v259 = vunpack.c.l.b16 %v106
  %v260 = vunpack.c.h.b16 %v106
  %v261 = vunpack.c.l.b16 %v107
  %v262 = vunpack.c.h.b16 %v107
  %v263 = vunpack.c.l.b16 %v108
  %v264 = vunpack.c.h.b16 %v108
  %v265 = vunpack.c.l.b16 %v109
  %v266 = vunpack.c.h.b16 %v109
  %v267 = vunpack.c.l.b16 %v110
  %v268 = vunpack.c.h.b16 %v110
  %v269 = vunpack.c.l.b16 %v111
  %v270 = vunpack.c.h.b16 %v111
  %v271 = vunpack.c.l.b16 %v112
  %v272 = vunpack.c.h.b16 %v112
  %v273 = vunpack.c.l.b16 %v113
  %v274 = vunpack.c.h.b16 %v113
  %v275 = vunpack.c.l.b16 %v114
  %v276 = vunpack.c.h.b16 %v114
  %v277 = vunpack.c.l.b16 %v115
  %v278 = vunpack.c.h.b16 %v115
  %v279 = vunpack.c.l.b16 %v116
  %v280 = vunpack.c.h.b16 %v116
  %v281 = vunpack.c.l.b16 %v117
  %v282 = vunpack.c.h.b16 %v117
  %v283 = vunpack.c.l.b16 %v118
  %v284 = vunpack.c.h.b16 %v118
  %v285 = vunpack.c.l.b16 %v119
  %v286 = vunpack.c.h.b16 %v119
  %v287 = vunpack.c.l.b16 %v120
  %v288 = vunpack.c.h.b16 %v120
  %v289 = vunpack.c.l.b16 %v121
  %v290 = vunpack.c.h.b16 %v121
  %v291 = vunpack.c.l.b16 %v122
  %v292 = vunpack.c.h.b16 %v122
  %v293 = vunpack.c.l.b16 %v123
  %v294 = vunpack.c.h.b16 %v123
  %v295 = vunpack.c.l.b16 %v124
  %v296 = vunpack.c.h.b16 %v124
  %v297 = vunpack.c.l.b16 %v125
  %v298 = vunpack.c.h.b16 %v125
  %v299 = vunpack.c.l.b16 %v126
  %v300 = vunpack.c.h.b16 %v126
  %v301 = vunpack.c.l.b16 %v127
  %v302 = vunpack.c.h.b16 %v127
  %v303 = vunpack.c.l.b16 %v128
  %v304 = vunpack.c.h.b16 %v128
  %v305 = vunpack.c.l.b16 %v129
  %v306 = vunpack.c.h.b16 %v129
  %v307 = vunpack.c.l.b16 %v130
  %v308 = vunpack.c.h.b16 %v130
  %v309 = vunpack.c.l.b16 %v131
  %v310 = vunpack.c.h.b16 %v131
  %v311 = vunpack.c.l.b16 %v132
  %v312 = vunpack.c.h.b16 %v132
  %v313 = vunpack.c.l.b16 %v133
  %v314 = vunpack.c.h.b16 %v133
  %v315 = vunpack.c.l.b16 %v134
  %v316 = vunpack.c.h.b16 %v134
  %v317 = vunpack.c.l.b16 %v135
  %v318 = vunpack.c.h.b16 %v135
  %v319 = vunpack.c.l.b16 %v136
  %v320 = vunpack.c.h.b16 %v136
  %v321 = vunpack.c.l.b16 %v137
  %v322 = vunpack.c.h.b16 %v137
  %v323 = vunpack.c.l.b16 %v138
  %v324 = vunpack.c.h.b16 %v138
  %v325 = vpack.c.b16 %v209, %v205
  %v326 = vpack.c.b16 %v210, %v206
  %v327 = vpack.c.b16 %v211, %v207
  %v328 = vpack.c.b16 %v212, %v208
  %v329 = vpack.c.b16 %v217, %v213
  %v330 = vpack.c.b16 %v218, %v214
  %v331 = vpack.c.b16 %v219, %v215
  %v332 = vpack.c.b16 %v220, %v216
  %v333 = vpack.c.b16 %v225, %v221
  %v334 = vpack.c.b16 %v226, %v222
  %v335 = vpack.c.b16 %v227, %v223
  %v336 = vpack.c.b16 %v228, %v224
  %v337 = vpack.c.b16 %v233, %v229
  %v338 = vpack.c.b16 %v234, %v230
  %v339 = vpack.c.b16 %v235, %v231
  %v340 = vpack.c.b16 %v236, %v232
  %v341 = vpack.c.b16 %v241, %v237
  %v342 = vpack.c.b16 %v242, %v238
  %v343 = vpack.c.b16 %v243, %v239
  %v344 = vpack.c.b16 %v244, %v240
  %v345 = vpack.c.b16 %v249, %v245
  %v346 = vpack.c.b16 %v250, %v246
  %v347 = vpack.c.b16 %v251, %v247
  %v348 = vpack.c.b16 %v252, %v248
  %v349 = vpack.c.b16 %v257, %v253
  %v350 = vpack.c.b16 %v258, %v254
  %v351 = vpack.c.b16 %v259, %v255
  %v352 = vpack.c.b16 %v260, %v256
  %v353 = vpack.c.b16 %v265, %v261
  %v354 = vpack.c.b16 %v266, %v262
  %v355 = vpack.c.b16 %v267, %v263
  %v356 = vpack.c.b16 %v268, %v264
  %v357 = vpack.c.b16 %v273, %v269
  %v358 = vpack.c.b16 %v274, %v270
  %v359 = vpack.c.b16 %v275, %v271
  %v360 = vpack.c.b16 %v276, %v272
  %v361 = vpack.c.b16 %v281, %v277
  %v362 = vpack.c.b16 %v282, %v278
  %v363 = vpack.c.b16 %v283, %v279
  %v364 = vpack.c.b16 %v284, %v280
  %v365 = vpack.c.b16 %v289, %v285
  %v366 = vpack.c.b16 %v290, %v286
  %v367 = vpack.c.b16 %v291, %v287
  %v368 = vpack.c.b16 %v292, %v288
  %v369 = vpack.c.b16 %v297, %v293
  %v370 = vpack.c.b16 %v298, %v294
  %v371 = vpack.c.b16 %v299, %v295
  %v372 = vpack.c.b16 %v300, %v296
  %v373 = vpack.c.b16 %v305, %v301
  %v374 = vpack.c.b16 %v306, %v302
  %v375 = vpack.c.b16 %v307, %v303
  %v376 = vpack.c.b16 %v308, %v304
  %v377 = vpack.c.b16 %v313, %v309
  %v378 = vpack.c.b16 %v314, %v310
  %v379 = vpack.c.b16 %v315, %v311
  %v380 = vpack.c.b16 %v316, %v312
  %v381 = vpack.c.b16 %v321, %v317
  %v382 = vpack.c.b16 %v322, %v318
  %v383 = vpack.c.b16 %v323, %v319
  %v384 = vpack.c.b16 %v324, %v320
  %vm445 = vcmask 916480
  %v447 = vsel %vm445, %v143, 0
  %449 = vmatprep.subr.bf16.mxu0 %v326
  %450 = vmatpush1.bf16.msra.mxu0 %v325
  %451 = vmatprep.subr.bf16.mxu0 %v330
  %452 = vmatpush1.bf16.msra.mxu0 %v329
  %453 = vmatprep.subr.bf16.mxu0 %v334
  %454 = vmatpush1.bf16.msra.mxu0 %v333
  %455 = vmatprep.subr.bf16.mxu0 %v338
  %456 = vmatpush1.bf16.msra.mxu0 %v337
  %457 = vmatprep.subr.bf16.mxu0 %v342
  %458 = vmatpush1.bf16.msra.mxu0 %v341
  %459 = vmatprep.subr.bf16.mxu0 %v346
  %460 = vmatpush1.bf16.msra.mxu0 %v345
  %461 = vmatprep.subr.bf16.mxu0 %v350
  %462 = vmatpush1.bf16.msra.mxu0 %v349
  %463 = vmatprep.subr.bf16.mxu0 %v354
  %464 = vmatpush1.bf16.msra.mxu0 %v353
  %465 = vmatprep.subr.bf16.mxu0 %v358
  %466 = vmatpush1.bf16.msra.mxu0 %v357
  %467 = vmatprep.subr.bf16.mxu0 %v362
  %468 = vmatpush1.bf16.msra.mxu0 %v361
  %469 = vmatprep.subr.bf16.mxu0 %v366
  %470 = vmatpush1.bf16.msra.mxu0 %v365
  %471 = vmatprep.subr.bf16.mxu0 %v370
  %472 = vmatpush1.bf16.msra.mxu0 %v369
  %473 = vmatprep.subr.bf16.mxu0 %v374
  %474 = vmatpush1.bf16.msra.mxu0 %v373
  %475 = vmatprep.subr.bf16.mxu0 %v378
  %476 = vmatpush1.bf16.msra.mxu0 %v377
  %477 = vmatprep.subr.bf16.mxu0 %v382
  %478 = vmatpush1.bf16.msra.mxu0 %v381
  %479 = vmatprep.subr.bf16.mxu0 0
  %480 = vmatpush1.bf16.msra.mxu0 0
  %481 = vmatprep.mubr.bf16.mxu0 %v447
  %482 = vmatmul.mubr.bf16.gmra.mrb[0].mxu0 %v142
  %v483 = vpop.f32.mrb[0].mxu0
  %v484 = vadd.f32 0.0, %v483
  %v485 = vpop.f32.mrb[0].mxu0
  %v486 = vadd.f32 0.0, %v485
  %v487 = vpop.f32.mrb[0].mxu0
  %v488 = vpop.f32.mrb[0].mxu0
  %489 = vdwg.mxu0
  %490 = vmatprep.subr.bf16.mxu0 %v328
  %491 = vmatpush1.bf16.msra.mxu0 %v327
  %492 = vmatprep.subr.bf16.mxu0 %v332
  %493 = vmatpush1.bf16.msra.mxu0 %v331
  %494 = vmatprep.subr.bf16.mxu0 %v336
  %495 = vmatpush1.bf16.msra.mxu0 %v335
  %496 = vmatprep.subr.bf16.mxu0 %v340
  %497 = vmatpush1.bf16.msra.mxu0 %v339
  %498 = vmatprep.subr.bf16.mxu0 %v344
  %499 = vmatpush1.bf16.msra.mxu0 %v343
  %500 = vmatprep.subr.bf16.mxu0 %v348
  %501 = vmatpush1.bf16.msra.mxu0 %v347
  %502 = vmatprep.subr.bf16.mxu0 %v352
  %503 = vmatpush1.bf16.msra.mxu0 %v351
  %504 = vmatprep.subr.bf16.mxu0 %v356
  %505 = vmatpush1.bf16.msra.mxu0 %v355
  %506 = vmatprep.subr.bf16.mxu0 %v360
  %507 = vmatpush1.bf16.msra.mxu0 %v359
  %508 = vmatprep.subr.bf16.mxu0 %v364
  %509 = vmatpush1.bf16.msra.mxu0 %v363
  %510 = vmatprep.subr.bf16.mxu0 %v368
  %511 = vmatpush1.bf16.msra.mxu0 %v367
  %512 = vmatprep.subr.bf16.mxu0 %v372
  %513 = vmatpush1.bf16.msra.mxu0 %v371
  %514 = vmatprep.subr.bf16.mxu0 %v376
  %515 = vmatpush1.bf16.msra.mxu0 %v375
  %516 = vmatprep.subr.bf16.mxu0 %v380
  %517 = vmatpush1.bf16.msra.mxu0 %v379
  %518 = vmatprep.subr.bf16.mxu0 %v384
  %519 = vmatpush1.bf16.msra.mxu0 %v383
  %520 = vmatprep.subr.bf16.mxu0 0
  %521 = vmatpush1.bf16.msra.mxu0 0
  %522 = vmatprep.mubr.bf16.mxu0 %v447
  %523 = vmatmul.mubr.bf16.gmra.mrb[0].mxu0 %v142
  %v524 = vpop.f32.mrb[0].mxu0
  %v525 = vadd.f32 0.0, %v524
  %v526 = vpop.f32.mrb[0].mxu0
  %v527 = vadd.f32 0.0, %v526
  %v528 = vpop.f32.mrb[0].mxu0
  %v529 = vpop.f32.mrb[0].mxu0
  %530 = vdwg.mxu0
  %v532 = vunpack.c.l.b16 %v15
  %v533 = vunpack.c.h.b16 %v15
  %v534 = vpack.c.b16 %v532, %v532
  %v535 = vpack.c.b16 %v533, %v533
  %v597 = vunpack.c.l.b16 %v16
  %v598 = vunpack.c.h.b16 %v16
  %v599 = vunpack.c.l.b16 %v17
  %v600 = vunpack.c.h.b16 %v17
  %v601 = vunpack.c.l.b16 %v18
  %v602 = vunpack.c.h.b16 %v18
  %v603 = vunpack.c.l.b16 %v19
  %v604 = vunpack.c.h.b16 %v19
  %v605 = vunpack.c.l.b16 %v20
  %v606 = vunpack.c.h.b16 %v20
  %v607 = vunpack.c.l.b16 %v21
  %v608 = vunpack.c.h.b16 %v21
  %v609 = vunpack.c.l.b16 %v22
  %v610 = vunpack.c.h.b16 %v22
  %v611 = vunpack.c.l.b16 %v23
  %v612 = vunpack.c.h.b16 %v23
  %v613 = vunpack.c.l.b16 %v24
  %v614 = vunpack.c.h.b16 %v24
  %v615 = vunpack.c.l.b16 %v25
  %v616 = vunpack.c.h.b16 %v25
  %v617 = vunpack.c.l.b16 %v26
  %v618 = vunpack.c.h.b16 %v26
  %v619 = vunpack.c.l.b16 %v27
  %v620 = vunpack.c.h.b16 %v27
  %v621 = vunpack.c.l.b16 %v28
  %v622 = vunpack.c.h.b16 %v28
  %v623 = vunpack.c.l.b16 %v29
  %v624 = vunpack.c.h.b16 %v29
  %v625 = vunpack.c.l.b16 %v30
  %v626 = vunpack.c.h.b16 %v30
  %v627 = vunpack.c.l.b16 %v31
  %v628 = vunpack.c.h.b16 %v31
  %v629 = vunpack.c.l.b16 %v32
  %v630 = vunpack.c.h.b16 %v32
  %v631 = vunpack.c.l.b16 %v33
  %v632 = vunpack.c.h.b16 %v33
  %v633 = vunpack.c.l.b16 %v34
  %v634 = vunpack.c.h.b16 %v34
  %v635 = vunpack.c.l.b16 %v35
  %v636 = vunpack.c.h.b16 %v35
  %v637 = vunpack.c.l.b16 %v36
  %v638 = vunpack.c.h.b16 %v36
  %v639 = vunpack.c.l.b16 %v37
  %v640 = vunpack.c.h.b16 %v37
  %v641 = vunpack.c.l.b16 %v38
  %v642 = vunpack.c.h.b16 %v38
  %v643 = vunpack.c.l.b16 %v39
  %v644 = vunpack.c.h.b16 %v39
  %v645 = vunpack.c.l.b16 %v40
  %v646 = vunpack.c.h.b16 %v40
  %v647 = vunpack.c.l.b16 %v41
  %v648 = vunpack.c.h.b16 %v41
  %v649 = vunpack.c.l.b16 %v42
  %v650 = vunpack.c.h.b16 %v42
  %v651 = vunpack.c.l.b16 %v43
  %v652 = vunpack.c.h.b16 %v43
  %v653 = vunpack.c.l.b16 %v44
  %v654 = vunpack.c.h.b16 %v44
  %v655 = vunpack.c.l.b16 %v45
  %v656 = vunpack.c.h.b16 %v45
  %v657 = vunpack.c.l.b16 %v46
  %v658 = vunpack.c.h.b16 %v46
  %v659 = vunpack.c.l.b16 %v47
  %v660 = vunpack.c.h.b16 %v47
  %v661 = vunpack.c.l.b16 %v48
  %v662 = vunpack.c.h.b16 %v48
  %v663 = vunpack.c.l.b16 %v49
  %v664 = vunpack.c.h.b16 %v49
  %v665 = vunpack.c.l.b16 %v50
  %v666 = vunpack.c.h.b16 %v50
  %v667 = vunpack.c.l.b16 %v51
  %v668 = vunpack.c.h.b16 %v51
  %v669 = vunpack.c.l.b16 %v52
  %v670 = vunpack.c.h.b16 %v52
  %v671 = vunpack.c.l.b16 %v53
  %v672 = vunpack.c.h.b16 %v53
  %v673 = vunpack.c.l.b16 %v54
  %v674 = vunpack.c.h.b16 %v54
  %v675 = vunpack.c.l.b16 %v55
  %v676 = vunpack.c.h.b16 %v55
  %v677 = vunpack.c.l.b16 %v56
  %v678 = vunpack.c.h.b16 %v56
  %v679 = vunpack.c.l.b16 %v57
  %v680 = vunpack.c.h.b16 %v57
  %v681 = vunpack.c.l.b16 %v58
  %v682 = vunpack.c.h.b16 %v58
  %v683 = vunpack.c.l.b16 %v59
  %v684 = vunpack.c.h.b16 %v59
  %v685 = vunpack.c.l.b16 %v60
  %v686 = vunpack.c.h.b16 %v60
  %v687 = vunpack.c.l.b16 %v61
  %v688 = vunpack.c.h.b16 %v61
  %v689 = vunpack.c.l.b16 %v62
  %v690 = vunpack.c.h.b16 %v62
  %v691 = vunpack.c.l.b16 %v63
  %v692 = vunpack.c.h.b16 %v63
  %v693 = vunpack.c.l.b16 %v64
  %v694 = vunpack.c.h.b16 %v64
  %v695 = vunpack.c.l.b16 %v65
  %v696 = vunpack.c.h.b16 %v65
  %v697 = vunpack.c.l.b16 %v66
  %v698 = vunpack.c.h.b16 %v66
  %v699 = vunpack.c.l.b16 %v67
  %v700 = vunpack.c.h.b16 %v67
  %v701 = vunpack.c.l.b16 %v68
  %v702 = vunpack.c.h.b16 %v68
  %v703 = vunpack.c.l.b16 %v69
  %v704 = vunpack.c.h.b16 %v69
  %v705 = vunpack.c.l.b16 %v70
  %v706 = vunpack.c.h.b16 %v70
  %v707 = vunpack.c.l.b16 %v71
  %v708 = vunpack.c.h.b16 %v71
  %v709 = vunpack.c.l.b16 %v72
  %v710 = vunpack.c.h.b16 %v72
  %v711 = vunpack.c.l.b16 %v73
  %v712 = vunpack.c.h.b16 %v73
  %v713 = vunpack.c.l.b16 %v74
  %v714 = vunpack.c.h.b16 %v74
  %v715 = vunpack.c.l.b16 %v75
  %v716 = vunpack.c.h.b16 %v75
  %v717 = vpack.c.b16 %v601, %v597
  %v718 = vpack.c.b16 %v602, %v598
  %v719 = vpack.c.b16 %v603, %v599
  %v720 = vpack.c.b16 %v604, %v600
  %v721 = vpack.c.b16 %v609, %v605
  %v722 = vpack.c.b16 %v610, %v606
  %v723 = vpack.c.b16 %v611, %v607
  %v724 = vpack.c.b16 %v612, %v608
  %v725 = vpack.c.b16 %v617, %v613
  %v726 = vpack.c.b16 %v618, %v614
  %v727 = vpack.c.b16 %v619, %v615
  %v728 = vpack.c.b16 %v620, %v616
  %v729 = vpack.c.b16 %v625, %v621
  %v730 = vpack.c.b16 %v626, %v622
  %v731 = vpack.c.b16 %v627, %v623
  %v732 = vpack.c.b16 %v628, %v624
  %v733 = vpack.c.b16 %v633, %v629
  %v734 = vpack.c.b16 %v634, %v630
  %v735 = vpack.c.b16 %v635, %v631
  %v736 = vpack.c.b16 %v636, %v632
  %v737 = vpack.c.b16 %v641, %v637
  %v738 = vpack.c.b16 %v642, %v638
  %v739 = vpack.c.b16 %v643, %v639
  %v740 = vpack.c.b16 %v644, %v640
  %v741 = vpack.c.b16 %v649, %v645
  %v742 = vpack.c.b16 %v650, %v646
  %v743 = vpack.c.b16 %v651, %v647
  %v744 = vpack.c.b16 %v652, %v648
  %v745 = vpack.c.b16 %v657, %v653
  %v746 = vpack.c.b16 %v658, %v654
  %v747 = vpack.c.b16 %v659, %v655
  %v748 = vpack.c.b16 %v660, %v656
  %v749 = vpack.c.b16 %v665, %v661
  %v750 = vpack.c.b16 %v666, %v662
  %v751 = vpack.c.b16 %v667, %v663
  %v752 = vpack.c.b16 %v668, %v664
  %v753 = vpack.c.b16 %v673, %v669
  %v754 = vpack.c.b16 %v674, %v670
  %v755 = vpack.c.b16 %v675, %v671
  %v756 = vpack.c.b16 %v676, %v672
  %v757 = vpack.c.b16 %v681, %v677
  %v758 = vpack.c.b16 %v682, %v678
  %v759 = vpack.c.b16 %v683, %v679
  %v760 = vpack.c.b16 %v684, %v680
  %v761 = vpack.c.b16 %v689, %v685
  %v762 = vpack.c.b16 %v690, %v686
  %v763 = vpack.c.b16 %v691, %v687
  %v764 = vpack.c.b16 %v692, %v688
  %v765 = vpack.c.b16 %v697, %v693
  %v766 = vpack.c.b16 %v698, %v694
  %v767 = vpack.c.b16 %v699, %v695
  %v768 = vpack.c.b16 %v700, %v696
  %v769 = vpack.c.b16 %v705, %v701
  %v770 = vpack.c.b16 %v706, %v702
  %v771 = vpack.c.b16 %v707, %v703
  %v772 = vpack.c.b16 %v708, %v704
  %v773 = vpack.c.b16 %v713, %v709
  %v774 = vpack.c.b16 %v714, %v710
  %v775 = vpack.c.b16 %v715, %v711
  %v776 = vpack.c.b16 %v716, %v712
  %v838 = vsel %vm445, %v535, 0
  %840 = vmatprep.subr.bf16.mxu0 %v718
  %841 = vmatpush1.bf16.msra.mxu0 %v717
  %842 = vmatprep.subr.bf16.mxu0 %v722
  %843 = vmatpush1.bf16.msra.mxu0 %v721
  %844 = vmatprep.subr.bf16.mxu0 %v726
  %845 = vmatpush1.bf16.msra.mxu0 %v725
  %846 = vmatprep.subr.bf16.mxu0 %v730
  %847 = vmatpush1.bf16.msra.mxu0 %v729
  %848 = vmatprep.subr.bf16.mxu0 %v734
  %849 = vmatpush1.bf16.msra.mxu0 %v733
  %850 = vmatprep.subr.bf16.mxu0 %v738
  %851 = vmatpush1.bf16.msra.mxu0 %v737
  %852 = vmatprep.subr.bf16.mxu0 %v742
  %853 = vmatpush1.bf16.msra.mxu0 %v741
  %854 = vmatprep.subr.bf16.mxu0 %v746
  %855 = vmatpush1.bf16.msra.mxu0 %v745
  %856 = vmatprep.subr.bf16.mxu0 %v750
  %857 = vmatpush1.bf16.msra.mxu0 %v749
  %858 = vmatprep.subr.bf16.mxu0 %v754
  %859 = vmatpush1.bf16.msra.mxu0 %v753
  %860 = vmatprep.subr.bf16.mxu0 %v758
  %861 = vmatpush1.bf16.msra.mxu0 %v757
  %862 = vmatprep.subr.bf16.mxu0 %v762
  %863 = vmatpush1.bf16.msra.mxu0 %v761
  %864 = vmatprep.subr.bf16.mxu0 %v766
  %865 = vmatpush1.bf16.msra.mxu0 %v765
  %866 = vmatprep.subr.bf16.mxu0 %v770
  %867 = vmatpush1.bf16.msra.mxu0 %v769
  %868 = vmatprep.subr.bf16.mxu0 %v774
  %869 = vmatpush1.bf16.msra.mxu0 %v773
  %870 = vmatprep.subr.bf16.mxu0 0
  %871 = vmatpush1.bf16.msra.mxu0 0
  %872 = vmatprep.mubr.bf16.mxu0 %v838
  %873 = vmatmul.mubr.bf16.gmra.mrb[0].mxu0 %v534
  %v874 = vpop.f32.mrb[0].mxu0
  %v875 = vadd.f32 %v484, %v874
  %v876 = vpop.f32.mrb[0].mxu0
  %v877 = vadd.f32 %v486, %v876
  %v878 = vpop.f32.mrb[0].mxu0
  %v879 = vpop.f32.mrb[0].mxu0
  %880 = vdwg.mxu0
  %881 = vmatprep.subr.bf16.mxu0 %v720
  %882 = vmatpush1.bf16.msra.mxu0 %v719
  %883 = vmatprep.subr.bf16.mxu0 %v724
  %884 = vmatpush1.bf16.msra.mxu0 %v723
  %885 = vmatprep.subr.bf16.mxu0 %v728
  %886 = vmatpush1.bf16.msra.mxu0 %v727
  %887 = vmatprep.subr.bf16.mxu0 %v732
  %888 = vmatpush1.bf16.msra.mxu0 %v731
  %889 = vmatprep.subr.bf16.mxu0 %v736
  %890 = vmatpush1.bf16.msra.mxu0 %v735
  %891 = vmatprep.subr.bf16.mxu0 %v740
  %892 = vmatpush1.bf16.msra.mxu0 %v739
  %893 = vmatprep.subr.bf16.mxu0 %v744
  %894 = vmatpush1.bf16.msra.mxu0 %v743
  %895 = vmatprep.subr.bf16.mxu0 %v748
  %896 = vmatpush1.bf16.msra.mxu0 %v747
  %897 = vmatprep.subr.bf16.mxu0 %v752
  %898 = vmatpush1.bf16.msra.mxu0 %v751
  %899 = vmatprep.subr.bf16.mxu0 %v756
  %900 = vmatpush1.bf16.msra.mxu0 %v755
  %901 = vmatprep.subr.bf16.mxu0 %v760
  %902 = vmatpush1.bf16.msra.mxu0 %v759
  %903 = vmatprep.subr.bf16.mxu0 %v764
  %904 = vmatpush1.bf16.msra.mxu0 %v763
  %905 = vmatprep.subr.bf16.mxu0 %v768
  %906 = vmatpush1.bf16.msra.mxu0 %v767
  %907 = vmatprep.subr.bf16.mxu0 %v772
  %908 = vmatpush1.bf16.msra.mxu0 %v771
  %909 = vmatprep.subr.bf16.mxu0 %v776
  %910 = vmatpush1.bf16.msra.mxu0 %v775
  %911 = vmatprep.subr.bf16.mxu0 0
  %912 = vmatpush1.bf16.msra.mxu0 0
  %913 = vmatprep.mubr.bf16.mxu0 %v838
  %914 = vmatmul.mubr.bf16.gmra.mrb[0].mxu0 %v534
  %v915 = vpop.f32.mrb[0].mxu0
  %v916 = vadd.f32 %v525, %v915
  %v917 = vpop.f32.mrb[0].mxu0
  %v918 = vadd.f32 %v527, %v917
  %v919 = vpop.f32.mrb[0].mxu0
  %v920 = vpop.f32.mrb[0].mxu0
  %921 = vdwg.mxu0
  %s922 = scalar_lea.vmem %s0, 16
  %v923 = vld [vmem:[%s922] sm:$0xff]
  %v925 = vunpack.c.l.b16 %v923
  %v926 = vunpack.c.h.b16 %v923
  %v927 = vpack.c.b16 %v925, %v925
  %v928 = vpack.c.b16 %v926, %v926
  %v931 = vsel %vm445, %v928, 0
  %933 = vmatprep.subr.bf16.mxu0 %v326
  %934 = vmatpush1.bf16.msra.mxu0 %v325
  %935 = vmatprep.subr.bf16.mxu0 %v330
  %936 = vmatpush1.bf16.msra.mxu0 %v329
  %937 = vmatprep.subr.bf16.mxu0 %v334
  %938 = vmatpush1.bf16.msra.mxu0 %v333
  %939 = vmatprep.subr.bf16.mxu0 %v338
  %940 = vmatpush1.bf16.msra.mxu0 %v337
  %941 = vmatprep.subr.bf16.mxu0 %v342
  %942 = vmatpush1.bf16.msra.mxu0 %v341
  %943 = vmatprep.subr.bf16.mxu0 %v346
  %944 = vmatpush1.bf16.msra.mxu0 %v345
  %945 = vmatprep.subr.bf16.mxu0 %v350
  %946 = vmatpush1.bf16.msra.mxu0 %v349
  %947 = vmatprep.subr.bf16.mxu0 %v354
  %948 = vmatpush1.bf16.msra.mxu0 %v353
  %949 = vmatprep.subr.bf16.mxu0 %v358
  %950 = vmatpush1.bf16.msra.mxu0 %v357
  %951 = vmatprep.subr.bf16.mxu0 %v362
  %952 = vmatpush1.bf16.msra.mxu0 %v361
  %953 = vmatprep.subr.bf16.mxu0 %v366
  %954 = vmatpush1.bf16.msra.mxu0 %v365
  %955 = vmatprep.subr.bf16.mxu0 %v370
  %956 = vmatpush1.bf16.msra.mxu0 %v369
  %957 = vmatprep.subr.bf16.mxu0 %v374
  %958 = vmatpush1.bf16.msra.mxu0 %v373
  %959 = vmatprep.subr.bf16.mxu0 %v378
  %960 = vmatpush1.bf16.msra.mxu0 %v377
  %961 = vmatprep.subr.bf16.mxu0 %v382
  %962 = vmatpush1.bf16.msra.mxu0 %v381
  %963 = vmatprep.subr.bf16.mxu0 0
  %964 = vmatpush1.bf16.msra.mxu0 0
  %965 = vmatprep.mubr.bf16.mxu0 %v931
  %966 = vmatmul.mubr.bf16.gmra.mrb[0].mxu0 %v927
  %v967 = vpop.f32.mrb[0].mxu0
  %v968 = vadd.f32 0.0, %v967
  %v969 = vpop.f32.mrb[0].mxu0
  %v970 = vadd.f32 0.0, %v969
  %v971 = vpop.f32.mrb[0].mxu0
  %v972 = vpop.f32.mrb[0].mxu0
  %973 = vdwg.mxu0
  %974 = vmatprep.subr.bf16.mxu0 %v328
  %975 = vmatpush1.bf16.msra.mxu0 %v327
  %976 = vmatprep.subr.bf16.mxu0 %v332
  %977 = vmatpush1.bf16.msra.mxu0 %v331
  %978 = vmatprep.subr.bf16.mxu0 %v336
  %979 = vmatpush1.bf16.msra.mxu0 %v335
  %980 = vmatprep.subr.bf16.mxu0 %v340
  %981 = vmatpush1.bf16.msra.mxu0 %v339
  %982 = vmatprep.subr.bf16.mxu0 %v344
  %983 = vmatpush1.bf16.msra.mxu0 %v343
  %984 = vmatprep.subr.bf16.mxu0 %v348
  %985 = vmatpush1.bf16.msra.mxu0 %v347
  %986 = vmatprep.subr.bf16.mxu0 %v352
  %987 = vmatpush1.bf16.msra.mxu0 %v351
  %988 = vmatprep.subr.bf16.mxu0 %v356
  %989 = vmatpush1.bf16.msra.mxu0 %v355
  %990 = vmatprep.subr.bf16.mxu0 %v360
  %991 = vmatpush1.bf16.msra.mxu0 %v359
  %992 = vmatprep.subr.bf16.mxu0 %v364
  %993 = vmatpush1.bf16.msra.mxu0 %v363
  %994 = vmatprep.subr.bf16.mxu0 %v368
  %995 = vmatpush1.bf16.msra.mxu0 %v367
  %996 = vmatprep.subr.bf16.mxu0 %v372
  %997 = vmatpush1.bf16.msra.mxu0 %v371
  %998 = vmatprep.subr.bf16.mxu0 %v376
  %999 = vmatpush1.bf16.msra.mxu0 %v375
  %1000 = vmatprep.subr.bf16.mxu0 %v380
  %1001 = vmatpush1.bf16.msra.mxu0 %v379
  %1002 = vmatprep.subr.bf16.mxu0 %v384
  %1003 = vmatpush1.bf16.msra.mxu0 %v383
  %1004 = vmatprep.subr.bf16.mxu0 0
  %1005 = vmatpush1.bf16.msra.mxu0 0
  %1006 = vmatprep.mubr.bf16.mxu0 %v931
  %1007 = vmatmul.mubr.bf16.gmra.mrb[0].mxu0 %v927
  %v1008 = vpop.f32.mrb[0].mxu0
  %v1009 = vadd.f32 0.0, %v1008
  %v1010 = vpop.f32.mrb[0].mxu0
  %v1011 = vadd.f32 0.0, %v1010
  %v1012 = vpop.f32.mrb[0].mxu0
  %v1013 = vpop.f32.mrb[0].mxu0
  %1014 = vdwg.mxu0
  %1015 = vmatprep.subr.bf16.mxu0 %v718
  %1016 = vmatpush1.bf16.msra.mxu0 %v717
  %1017 = vmatprep.subr.bf16.mxu0 %v722
  %1018 = vmatpush1.bf16.msra.mxu0 %v721
  %1019 = vmatprep.subr.bf16.mxu0 %v726
  %1020 = vmatpush1.bf16.msra.mxu0 %v725
  %1021 = vmatprep.subr.bf16.mxu0 %v730
  %1022 = vmatpush1.bf16.msra.mxu0 %v729
  %1023 = vmatprep.subr.bf16.mxu0 %v734
  %1024 = vmatpush1.bf16.msra.mxu0 %v733
  %1025 = vmatprep.subr.bf16.mxu0 %v738
  %1026 = vmatpush1.bf16.msra.mxu0 %v737
  %1027 = vmatprep.subr.bf16.mxu0 %v742
  %1028 = vmatpush1.bf16.msra.mxu0 %v741
  %1029 = vmatprep.subr.bf16.mxu0 %v746
  %1030 = vmatpush1.bf16.msra.mxu0 %v745
  %1031 = vmatprep.subr.bf16.mxu0 %v750
  %1032 = vmatpush1.bf16.msra.mxu0 %v749
  %1033 = vmatprep.subr.bf16.mxu0 %v754
  %1034 = vmatpush1.bf16.msra.mxu0 %v753
  %1035 = vmatprep.subr.bf16.mxu0 %v758
  %1036 = vmatpush1.bf16.msra.mxu0 %v757
  %1037 = vmatprep.subr.bf16.mxu0 %v762
  %1038 = vmatpush1.bf16.msra.mxu0 %v761
  %1039 = vmatprep.subr.bf16.mxu0 %v766
  %1040 = vmatpush1.bf16.msra.mxu0 %v765
  %1041 = vmatprep.subr.bf16.mxu0 %v770
  %1042 = vmatpush1.bf16.msra.mxu0 %v769
  %1043 = vmatprep.subr.bf16.mxu0 %v774
  %1044 = vmatpush1.bf16.msra.mxu0 %v773
  %1045 = vmatprep.subr.bf16.mxu0 0
  %1046 = vmatpush1.bf16.msra.mxu0 0
  %1047 = vmatprep.mubr.bf16.mxu0 %v447
  %1048 = vmatmul.mubr.bf16.gmra.mrb[0].mxu0 %v142
  %v1049 = vpop.f32.mrb[0].mxu0
  %v1050 = vadd.f32 %v968, %v1049
  %v1051 = vpop.f32.mrb[0].mxu0
  %v1052 = vadd.f32 %v970, %v1051
  %v1053 = vpop.f32.mrb[0].mxu0
  %v1054 = vpop.f32.mrb[0].mxu0
  %1055 = vdwg.mxu0
  %1056 = vmatprep.subr.bf16.mxu0 %v720
  %1057 = vmatpush1.bf16.msra.mxu0 %v719
  %1058 = vmatprep.subr.bf16.mxu0 %v724
  %1059 = vmatpush1.bf16.msra.mxu0 %v723
  %1060 = vmatprep.subr.bf16.mxu0 %v728
  %1061 = vmatpush1.bf16.msra.mxu0 %v727
  %1062 = vmatprep.subr.bf16.mxu0 %v732
  %1063 = vmatpush1.bf16.msra.mxu0 %v731
  %1064 = vmatprep.subr.bf16.mxu0 %v736
  %1065 = vmatpush1.bf16.msra.mxu0 %v735
  %1066 = vmatprep.subr.bf16.mxu0 %v740
  %1067 = vmatpush1.bf16.msra.mxu0 %v739
  %1068 = vmatprep.subr.bf16.mxu0 %v744
  %1069 = vmatpush1.bf16.msra.mxu0 %v743
  %1070 = vmatprep.subr.bf16.mxu0 %v748
  %1071 = vmatpush1.bf16.msra.mxu0 %v747
  %1072 = vmatprep.subr.bf16.mxu0 %v752
  %1073 = vmatpush1.bf16.msra.mxu0 %v751
  %1074 = vmatprep.subr.bf16.mxu0 %v756
  %1075 = vmatpush1.bf16.msra.mxu0 %v755
  %1076 = vmatprep.subr.bf16.mxu0 %v760
  %1077 = vmatpush1.bf16.msra.mxu0 %v759
  %1078 = vmatprep.subr.bf16.mxu0 %v764
  %1079 = vmatpush1.bf16.msra.mxu0 %v763
  %1080 = vmatprep.subr.bf16.mxu0 %v768
  %1081 = vmatpush1.bf16.msra.mxu0 %v767
  %1082 = vmatprep.subr.bf16.mxu0 %v772
  %1083 = vmatpush1.bf16.msra.mxu0 %v771
  %1084 = vmatprep.subr.bf16.mxu0 %v776
  %1085 = vmatpush1.bf16.msra.mxu0 %v775
  %1086 = vmatprep.subr.bf16.mxu0 0
  %1087 = vmatpush1.bf16.msra.mxu0 0
  %1088 = vmatprep.mubr.bf16.mxu0 %v447
  %1089 = vmatmul.mubr.bf16.gmra.mrb[0].mxu0 %v142
  %v1090 = vpop.f32.mrb[0].mxu0
  %v1091 = vadd.f32 %v1009, %v1090
  %v1092 = vpop.f32.mrb[0].mxu0
  %v1093 = vadd.f32 %v1011, %v1092
  %v1094 = vpop.f32.mrb[0].mxu0
  %v1095 = vpop.f32.mrb[0].mxu0
  %1096 = vdwg.mxu0
  %s1097 = scalar_lea.vmem %s1, 960
  %v1098 = vld [vmem:[%s1097] sm:$0xff]
  %v1099 = vld [vmem:[%s1097 + $0x8] sm:$0xff]
  %v1100 = vld [vmem:[%s1097 + $0x10] sm:$0xff]
  %v1101 = vld [vmem:[%s1097 + $0x18] sm:$0xff]
  %v1102 = vld [vmem:[%s1097 + $0x20] sm:$0xff]
  %v1103 = vld [vmem:[%s1097 + $0x28] sm:$0xff]
  %v1104 = vld [vmem:[%s1097 + $0x30] sm:$0xff]
  %v1105 = vld [vmem:[%s1097 + $0x38] sm:$0xff]
  %v1106 = vld [vmem:[%s1097 + $0x40] sm:$0xff]
  %v1107 = vld [vmem:[%s1097 + $0x48] sm:$0xff]
  %v1108 = vld [vmem:[%s1097 + $0x50] sm:$0xff]
  %v1109 = vld [vmem:[%s1097 + $0x58] sm:$0xff]
  %v1110 = vld [vmem:[%s1097 + $0x60] sm:$0xff]
  %v1111 = vld [vmem:[%s1097 + $0x68] sm:$0xff]
  %v1112 = vld [vmem:[%s1097 + $0x70] sm:$0xff]
  %v1113 = vld [vmem:[%s1097 + $0x78] sm:$0xff]
  %v1114 = vld [vmem:[%s1097 + $0x80] sm:$0xff]
  %v1115 = vld [vmem:[%s1097 + $0x88] sm:$0xff]
  %v1116 = vld [vmem:[%s1097 + $0x90] sm:$0xff]
  %v1117 = vld [vmem:[%s1097 + $0x98] sm:$0xff]
  %v1118 = vld [vmem:[%s1097 + $0xa0] sm:$0xff]
  %v1119 = vld [vmem:[%s1097 + $0xa8] sm:$0xff]
  %v1120 = vld [vmem:[%s1097 + $0xb0] sm:$0xff]
  %v1121 = vld [vmem:[%s1097 + $0xb8] sm:$0xff]
  %v1122 = vld [vmem:[%s1097 + $0xc0] sm:$0xff]
  %v1123 = vld [vmem:[%s1097 + $0xc8] sm:$0xff]
  %v1124 = vld [vmem:[%s1097 + $0xd0] sm:$0xff]
  %v1125 = vld [vmem:[%s1097 + $0xd8] sm:$0xff]
  %v1126 = vld [vmem:[%s1097 + $0xe0] sm:$0xff]
  %v1127 = vld [vmem:[%s1097 + $0xe8] sm:$0xff]
  %v1128 = vld [vmem:[%s1097 + $0xf0] sm:$0xff]
  %v1129 = vld [vmem:[%s1097 + $0xf8] sm:$0xff]
  %v1130 = vld [vmem:[%s1097 + $0x100] sm:$0xff]
  %v1131 = vld [vmem:[%s1097 + $0x108] sm:$0xff]
  %v1132 = vld [vmem:[%s1097 + $0x110] sm:$0xff]
  %v1133 = vld [vmem:[%s1097 + $0x118] sm:$0xff]
  %v1134 = vld [vmem:[%s1097 + $0x120] sm:$0xff]
  %v1135 = vld [vmem:[%s1097 + $0x128] sm:$0xff]
  %v1136 = vld [vmem:[%s1097 + $0x130] sm:$0xff]
  %v1137 = vld [vmem:[%s1097 + $0x138] sm:$0xff]
  %v1138 = vld [vmem:[%s1097 + $0x140] sm:$0xff]
  %v1139 = vld [vmem:[%s1097 + $0x148] sm:$0xff]
  %v1140 = vld [vmem:[%s1097 + $0x150] sm:$0xff]
  %v1141 = vld [vmem:[%s1097 + $0x158] sm:$0xff]
  %v1142 = vld [vmem:[%s1097 + $0x160] sm:$0xff]
  %v1143 = vld [vmem:[%s1097 + $0x168] sm:$0xff]
  %v1144 = vld [vmem:[%s1097 + $0x170] sm:$0xff]
  %v1145 = vld [vmem:[%s1097 + $0x178] sm:$0xff]
  %v1146 = vld [vmem:[%s1097 + $0x180] sm:$0xff]
  %v1147 = vld [vmem:[%s1097 + $0x188] sm:$0xff]
  %v1148 = vld [vmem:[%s1097 + $0x190] sm:$0xff]
  %v1149 = vld [vmem:[%s1097 + $0x198] sm:$0xff]
  %v1150 = vld [vmem:[%s1097 + $0x1a0] sm:$0xff]
  %v1151 = vld [vmem:[%s1097 + $0x1a8] sm:$0xff]
  %v1152 = vld [vmem:[%s1097 + $0x1b0] sm:$0xff]
  %v1153 = vld [vmem:[%s1097 + $0x1b8] sm:$0xff]
  %v1154 = vld [vmem:[%s1097 + $0x1c0] sm:$0xff]
  %v1155 = vld [vmem:[%s1097 + $0x1c8] sm:$0xff]
  %v1156 = vld [vmem:[%s1097 + $0x1d0] sm:$0xff]
  %v1157 = vld [vmem:[%s1097 + $0x1d8] sm:$0xff]
  %v1218 = vunpack.c.l.b16 %v1098
  %v1219 = vunpack.c.h.b16 %v1098
  %v1220 = vunpack.c.l.b16 %v1099
  %v1221 = vunpack.c.h.b16 %v1099
  %v1222 = vunpack.c.l.b16 %v1100
  %v1223 = vunpack.c.h.b16 %v1100
  %v1224 = vunpack.c.l.b16 %v1101
  %v1225 = vunpack.c.h.b16 %v1101
  %v1226 = vunpack.c.l.b16 %v1102
  %v1227 = vunpack.c.h.b16 %v1102
  %v1228 = vunpack.c.l.b16 %v1103
  %v1229 = vunpack.c.h.b16 %v1103
  %v1230 = vunpack.c.l.b16 %v1104
  %v1231 = vunpack.c.h.b16 %v1104
  %v1232 = vunpack.c.l.b16 %v1105
  %v1233 = vunpack.c.h.b16 %v1105
  %v1234 = vunpack.c.l.b16 %v1106
  %v1235 = vunpack.c.h.b16 %v1106
  %v1236 = vunpack.c.l.b16 %v1107
  %v1237 = vunpack.c.h.b16 %v1107
  %v1238 = vunpack.c.l.b16 %v1108
  %v1239 = vunpack.c.h.b16 %v1108
  %v1240 = vunpack.c.l.b16 %v1109
  %v1241 = vunpack.c.h.b16 %v1109
  %v1242 = vunpack.c.l.b16 %v1110
  %v1243 = vunpack.c.h.b16 %v1110
  %v1244 = vunpack.c.l.b16 %v1111
  %v1245 = vunpack.c.h.b16 %v1111
  %v1246 = vunpack.c.l.b16 %v1112
  %v1247 = vunpack.c.h.b16 %v1112
  %v1248 = vunpack.c.l.b16 %v1113
  %v1249 = vunpack.c.h.b16 %v1113
  %v1250 = vunpack.c.l.b16 %v1114
  %v1251 = vunpack.c.h.b16 %v1114
  %v1252 = vunpack.c.l.b16 %v1115
  %v1253 = vunpack.c.h.b16 %v1115
  %v1254 = vunpack.c.l.b16 %v1116
  %v1255 = vunpack.c.h.b16 %v1116
  %v1256 = vunpack.c.l.b16 %v1117
  %v1257 = vunpack.c.h.b16 %v1117
  %v1258 = vunpack.c.l.b16 %v1118
  %v1259 = vunpack.c.h.b16 %v1118
  %v1260 = vunpack.c.l.b16 %v1119
  %v1261 = vunpack.c.h.b16 %v1119
  %v1262 = vunpack.c.l.b16 %v1120
  %v1263 = vunpack.c.h.b16 %v1120
  %v1264 = vunpack.c.l.b16 %v1121
  %v1265 = vunpack.c.h.b16 %v1121
  %v1266 = vunpack.c.l.b16 %v1122
  %v1267 = vunpack.c.h.b16 %v1122
  %v1268 = vunpack.c.l.b16 %v1123
  %v1269 = vunpack.c.h.b16 %v1123
  %v1270 = vunpack.c.l.b16 %v1124
  %v1271 = vunpack.c.h.b16 %v1124
  %v1272 = vunpack.c.l.b16 %v1125
  %v1273 = vunpack.c.h.b16 %v1125
  %v1274 = vunpack.c.l.b16 %v1126
  %v1275 = vunpack.c.h.b16 %v1126
  %v1276 = vunpack.c.l.b16 %v1127
  %v1277 = vunpack.c.h.b16 %v1127
  %v1278 = vunpack.c.l.b16 %v1128
  %v1279 = vunpack.c.h.b16 %v1128
  %v1280 = vunpack.c.l.b16 %v1129
  %v1281 = vunpack.c.h.b16 %v1129
  %v1282 = vunpack.c.l.b16 %v1130
  %v1283 = vunpack.c.h.b16 %v1130
  %v1284 = vunpack.c.l.b16 %v1131
  %v1285 = vunpack.c.h.b16 %v1131
  %v1286 = vunpack.c.l.b16 %v1132
  %v1287 = vunpack.c.h.b16 %v1132
  %v1288 = vunpack.c.l.b16 %v1133
  %v1289 = vunpack.c.h.b16 %v1133
  %v1290 = vunpack.c.l.b16 %v1134
  %v1291 = vunpack.c.h.b16 %v1134
  %v1292 = vunpack.c.l.b16 %v1135
  %v1293 = vunpack.c.h.b16 %v1135
  %v1294 = vunpack.c.l.b16 %v1136
  %v1295 = vunpack.c.h.b16 %v1136
  %v1296 = vunpack.c.l.b16 %v1137
  %v1297 = vunpack.c.h.b16 %v1137
  %v1298 = vunpack.c.l.b16 %v1138
  %v1299 = vunpack.c.h.b16 %v1138
  %v1300 = vunpack.c.l.b16 %v1139
  %v1301 = vunpack.c.h.b16 %v1139
  %v1302 = vunpack.c.l.b16 %v1140
  %v1303 = vunpack.c.h.b16 %v1140
  %v1304 = vunpack.c.l.b16 %v1141
  %v1305 = vunpack.c.h.b16 %v1141
  %v1306 = vunpack.c.l.b16 %v1142
  %v1307 = vunpack.c.h.b16 %v1142
  %v1308 = vunpack.c.l.b16 %v1143
  %v1309 = vunpack.c.h.b16 %v1143
  %v1310 = vunpack.c.l.b16 %v1144
  %v1311 = vunpack.c.h.b16 %v1144
  %v1312 = vunpack.c.l.b16 %v1145
  %v1313 = vunpack.c.h.b16 %v1145
  %v1314 = vunpack.c.l.b16 %v1146
  %v1315 = vunpack.c.h.b16 %v1146
  %v1316 = vunpack.c.l.b16 %v1147
  %v1317 = vunpack.c.h.b16 %v1147
  %v1318 = vunpack.c.l.b16 %v1148
  %v1319 = vunpack.c.h.b16 %v1148
  %v1320 = vunpack.c.l.b16 %v1149
  %v1321 = vunpack.c.h.b16 %v1149
  %v1322 = vunpack.c.l.b16 %v1150
  %v1323 = vunpack.c.h.b16 %v1150
  %v1324 = vunpack.c.l.b16 %v1151
  %v1325 = vunpack.c.h.b16 %v1151
  %v1326 = vunpack.c.l.b16 %v1152
  %v1327 = vunpack.c.h.b16 %v1152
  %v1328 = vunpack.c.l.b16 %v1153
  %v1329 = vunpack.c.h.b16 %v1153
  %v1330 = vunpack.c.l.b16 %v1154
  %v1331 = vunpack.c.h.b16 %v1154
  %v1332 = vunpack.c.l.b16 %v1155
  %v1333 = vunpack.c.h.b16 %v1155
  %v1334 = vunpack.c.l.b16 %v1156
  %v1335 = vunpack.c.h.b16 %v1156
  %v1336 = vunpack.c.l.b16 %v1157
  %v1337 = vunpack.c.h.b16 %v1157
  %v1338 = vpack.c.b16 %v1222, %v1218
  %v1339 = vpack.c.b16 %v1223, %v1219
  %v1340 = vpack.c.b16 %v1224, %v1220
  %v1341 = vpack.c.b16 %v1225, %v1221
  %v1342 = vpack.c.b16 %v1230, %v1226
  %v1343 = vpack.c.b16 %v1231, %v1227
  %v1344 = vpack.c.b16 %v1232, %v1228
  %v1345 = vpack.c.b16 %v1233, %v1229
  %v1346 = vpack.c.b16 %v1238, %v1234
  %v1347 = vpack.c.b16 %v1239, %v1235
  %v1348 = vpack.c.b16 %v1240, %v1236
  %v1349 = vpack.c.b16 %v1241, %v1237
  %v1350 = vpack.c.b16 %v1246, %v1242
  %v1351 = vpack.c.b16 %v1247, %v1243
  %v1352 = vpack.c.b16 %v1248, %v1244
  %v1353 = vpack.c.b16 %v1249, %v1245
  %v1354 = vpack.c.b16 %v1254, %v1250
  %v1355 = vpack.c.b16 %v1255, %v1251
  %v1356 = vpack.c.b16 %v1256, %v1252
  %v1357 = vpack.c.b16 %v1257, %v1253
  %v1358 = vpack.c.b16 %v1262, %v1258
  %v1359 = vpack.c.b16 %v1263, %v1259
  %v1360 = vpack.c.b16 %v1264, %v1260
  %v1361 = vpack.c.b16 %v1265, %v1261
  %v1362 = vpack.c.b16 %v1270, %v1266
  %v1363 = vpack.c.b16 %v1271, %v1267
  %v1364 = vpack.c.b16 %v1272, %v1268
  %v1365 = vpack.c.b16 %v1273, %v1269
  %v1366 = vpack.c.b16 %v1278, %v1274
  %v1367 = vpack.c.b16 %v1279, %v1275
  %v1368 = vpack.c.b16 %v1280, %v1276
  %v1369 = vpack.c.b16 %v1281, %v1277
  %v1370 = vpack.c.b16 %v1286, %v1282
  %v1371 = vpack.c.b16 %v1287, %v1283
  %v1372 = vpack.c.b16 %v1288, %v1284
  %v1373 = vpack.c.b16 %v1289, %v1285
  %v1374 = vpack.c.b16 %v1294, %v1290
  %v1375 = vpack.c.b16 %v1295, %v1291
  %v1376 = vpack.c.b16 %v1296, %v1292
  %v1377 = vpack.c.b16 %v1297, %v1293
  %v1378 = vpack.c.b16 %v1302, %v1298
  %v1379 = vpack.c.b16 %v1303, %v1299
  %v1380 = vpack.c.b16 %v1304, %v1300
  %v1381 = vpack.c.b16 %v1305, %v1301
  %v1382 = vpack.c.b16 %v1310, %v1306
  %v1383 = vpack.c.b16 %v1311, %v1307
  %v1384 = vpack.c.b16 %v1312, %v1308
  %v1385 = vpack.c.b16 %v1313, %v1309
  %v1386 = vpack.c.b16 %v1318, %v1314
  %v1387 = vpack.c.b16 %v1319, %v1315
  %v1388 = vpack.c.b16 %v1320, %v1316
  %v1389 = vpack.c.b16 %v1321, %v1317
  %v1390 = vpack.c.b16 %v1326, %v1322
  %v1391 = vpack.c.b16 %v1327, %v1323
  %v1392 = vpack.c.b16 %v1328, %v1324
  %v1393 = vpack.c.b16 %v1329, %v1325
  %v1394 = vpack.c.b16 %v1334, %v1330
  %v1395 = vpack.c.b16 %v1335, %v1331
  %v1396 = vpack.c.b16 %v1336, %v1332
  %v1397 = vpack.c.b16 %v1337, %v1333
  %1458 = vmatprep.subr.bf16.mxu0 %v1339
  %1459 = vmatpush1.bf16.msra.mxu0 %v1338
  %1460 = vmatprep.subr.bf16.mxu0 %v1343
  %1461 = vmatpush1.bf16.msra.mxu0 %v1342
  %1462 = vmatprep.subr.bf16.mxu0 %v1347
  %1463 = vmatpush1.bf16.msra.mxu0 %v1346
  %1464 = vmatprep.subr.bf16.mxu0 %v1351
  %1465 = vmatpush1.bf16.msra.mxu0 %v1350
  %1466 = vmatprep.subr.bf16.mxu0 %v1355
  %1467 = vmatpush1.bf16.msra.mxu0 %v1354
  %1468 = vmatprep.subr.bf16.mxu0 %v1359
  %1469 = vmatpush1.bf16.msra.mxu0 %v1358
  %1470 = vmatprep.subr.bf16.mxu0 %v1363
  %1471 = vmatpush1.bf16.msra.mxu0 %v1362
  %1472 = vmatprep.subr.bf16.mxu0 %v1367
  %1473 = vmatpush1.bf16.msra.mxu0 %v1366
  %1474 = vmatprep.subr.bf16.mxu0 %v1371
  %1475 = vmatpush1.bf16.msra.mxu0 %v1370
  %1476 = vmatprep.subr.bf16.mxu0 %v1375
  %1477 = vmatpush1.bf16.msra.mxu0 %v1374
  %1478 = vmatprep.subr.bf16.mxu0 %v1379
  %1479 = vmatpush1.bf16.msra.mxu0 %v1378
  %1480 = vmatprep.subr.bf16.mxu0 %v1383
  %1481 = vmatpush1.bf16.msra.mxu0 %v1382
  %1482 = vmatprep.subr.bf16.mxu0 %v1387
  %1483 = vmatpush1.bf16.msra.mxu0 %v1386
  %1484 = vmatprep.subr.bf16.mxu0 %v1391
  %1485 = vmatpush1.bf16.msra.mxu0 %v1390
  %1486 = vmatprep.subr.bf16.mxu0 %v1395
  %1487 = vmatpush1.bf16.msra.mxu0 %v1394
  %1488 = vmatprep.subr.bf16.mxu0 0
  %1489 = vmatpush1.bf16.msra.mxu0 0
  %1490 = vmatprep.mubr.bf16.mxu0 %v931
  %1491 = vmatmul.mubr.bf16.gmra.mrb[0].mxu0 %v927
  %v1492 = vpop.f32.mrb[0].mxu0
  %v1493 = vadd.f32 0.0, %v1492
  %v1494 = vpop.f32.mrb[0].mxu0
  %v1495 = vadd.f32 0.0, %v1494
  %v1496 = vpop.f32.mrb[0].mxu0
  %v1497 = vpop.f32.mrb[0].mxu0
  %1498 = vdwg.mxu0
  %1499 = vmatprep.subr.bf16.mxu0 %v1341
  %1500 = vmatpush1.bf16.msra.mxu0 %v1340
  %1501 = vmatprep.subr.bf16.mxu0 %v1345
  %1502 = vmatpush1.bf16.msra.mxu0 %v1344
  %1503 = vmatprep.subr.bf16.mxu0 %v1349
  %1504 = vmatpush1.bf16.msra.mxu0 %v1348
  %1505 = vmatprep.subr.bf16.mxu0 %v1353
  %1506 = vmatpush1.bf16.msra.mxu0 %v1352
  %1507 = vmatprep.subr.bf16.mxu0 %v1357
  %1508 = vmatpush1.bf16.msra.mxu0 %v1356
  %1509 = vmatprep.subr.bf16.mxu0 %v1361
  %1510 = vmatpush1.bf16.msra.mxu0 %v1360
  %1511 = vmatprep.subr.bf16.mxu0 %v1365
  %1512 = vmatpush1.bf16.msra.mxu0 %v1364
  %1513 = vmatprep.subr.bf16.mxu0 %v1369
  %1514 = vmatpush1.bf16.msra.mxu0 %v1368
  %1515 = vmatprep.subr.bf16.mxu0 %v1373
  %1516 = vmatpush1.bf16.msra.mxu0 %v1372
  %1517 = vmatprep.subr.bf16.mxu0 %v1377
  %1518 = vmatpush1.bf16.msra.mxu0 %v1376
  %1519 = vmatprep.subr.bf16.mxu0 %v1381
  %1520 = vmatpush1.bf16.msra.mxu0 %v1380
  %1521 = vmatprep.subr.bf16.mxu0 %v1385
  %1522 = vmatpush1.bf16.msra.mxu0 %v1384
  %1523 = vmatprep.subr.bf16.mxu0 %v1389
  %1524 = vmatpush1.bf16.msra.mxu0 %v1388
  %1525 = vmatprep.subr.bf16.mxu0 %v1393
  %1526 = vmatpush1.bf16.msra.mxu0 %v1392
  %1527 = vmatprep.subr.bf16.mxu0 %v1397
  %1528 = vmatpush1.bf16.msra.mxu0 %v1396
  %1529 = vmatprep.subr.bf16.mxu0 0
  %1530 = vmatpush1.bf16.msra.mxu0 0
  %1531 = vmatprep.mubr.bf16.mxu0 %v931
  %1532 = vmatmul.mubr.bf16.gmra.mrb[0].mxu0 %v927
  %v1533 = vpop.f32.mrb[0].mxu0
  %v1534 = vadd.f32 0.0, %v1533
  %v1535 = vpop.f32.mrb[0].mxu0
  %v1536 = vadd.f32 0.0, %v1535
  %v1537 = vpop.f32.mrb[0].mxu0
  %v1538 = vpop.f32.mrb[0].mxu0
  %1539 = vdwg.mxu0
  %v1540 = vadd.f32 %v875, %v1493
  %v1541 = vadd.f32 %v877, %v1495
  %v1542 = vadd.f32 %v916, %v1534
  %v1543 = vadd.f32 %v918, %v1536
  %s1544 = scalar_lea.vmem %s0, 24
  %v1545 = vld [vmem:[%s1544] sm:$0xff]
  %v1547 = vunpack.c.l.b16 %v1545
  %v1548 = vunpack.c.h.b16 %v1545
  %v1549 = vpack.c.b16 %v1547, %v1547
  %v1550 = vpack.c.b16 %v1548, %v1548
  %v1553 = vsel %vm445, %v1550, 0
  %1555 = vmatprep.subr.bf16.mxu0 %v1339
  %1556 = vmatpush1.bf16.msra.mxu0 %v1338
  %1557 = vmatprep.subr.bf16.mxu0 %v1343
  %1558 = vmatpush1.bf16.msra.mxu0 %v1342
  %1559 = vmatprep.subr.bf16.mxu0 %v1347
  %1560 = vmatpush1.bf16.msra.mxu0 %v1346
  %1561 = vmatprep.subr.bf16.mxu0 %v1351
  %1562 = vmatpush1.bf16.msra.mxu0 %v1350
  %1563 = vmatprep.subr.bf16.mxu0 %v1355
  %1564 = vmatpush1.bf16.msra.mxu0 %v1354
  %1565 = vmatprep.subr.bf16.mxu0 %v1359
  %1566 = vmatpush1.bf16.msra.mxu0 %v1358
  %1567 = vmatprep.subr.bf16.mxu0 %v1363
  %1568 = vmatpush1.bf16.msra.mxu0 %v1362
  %1569 = vmatprep.subr.bf16.mxu0 %v1367
  %1570 = vmatpush1.bf16.msra.mxu0 %v1366
  %1571 = vmatprep.subr.bf16.mxu0 %v1371
  %1572 = vmatpush1.bf16.msra.mxu0 %v1370
  %1573 = vmatprep.subr.bf16.mxu0 %v1375
  %1574 = vmatpush1.bf16.msra.mxu0 %v1374
  %1575 = vmatprep.subr.bf16.mxu0 %v1379
  %1576 = vmatpush1.bf16.msra.mxu0 %v1378
  %1577 = vmatprep.subr.bf16.mxu0 %v1383
  %1578 = vmatpush1.bf16.msra.mxu0 %v1382
  %1579 = vmatprep.subr.bf16.mxu0 %v1387
  %1580 = vmatpush1.bf16.msra.mxu0 %v1386
  %1581 = vmatprep.subr.bf16.mxu0 %v1391
  %1582 = vmatpush1.bf16.msra.mxu0 %v1390
  %1583 = vmatprep.subr.bf16.mxu0 %v1395
  %1584 = vmatpush1.bf16.msra.mxu0 %v1394
  %1585 = vmatprep.subr.bf16.mxu0 0
  %1586 = vmatpush1.bf16.msra.mxu0 0
  %1587 = vmatprep.mubr.bf16.mxu0 %v1553
  %1588 = vmatmul.mubr.bf16.gmra.mrb[0].mxu0 %v1549
  %v1589 = vpop.f32.mrb[0].mxu0
  %v1590 = vadd.f32 0.0, %v1589
  %v1591 = vpop.f32.mrb[0].mxu0
  %v1592 = vadd.f32 0.0, %v1591
  %v1593 = vpop.f32.mrb[0].mxu0
  %v1594 = vpop.f32.mrb[0].mxu0
  %1595 = vdwg.mxu0
  %1596 = vmatprep.subr.bf16.mxu0 %v1341
  %1597 = vmatpush1.bf16.msra.mxu0 %v1340
  %1598 = vmatprep.subr.bf16.mxu0 %v1345
  %1599 = vmatpush1.bf16.msra.mxu0 %v1344
  %1600 = vmatprep.subr.bf16.mxu0 %v1349
  %1601 = vmatpush1.bf16.msra.mxu0 %v1348
  %1602 = vmatprep.subr.bf16.mxu0 %v1353
  %1603 = vmatpush1.bf16.msra.mxu0 %v1352
  %1604 = vmatprep.subr.bf16.mxu0 %v1357
  %1605 = vmatpush1.bf16.msra.mxu0 %v1356
  %1606 = vmatprep.subr.bf16.mxu0 %v1361
  %1607 = vmatpush1.bf16.msra.mxu0 %v1360
  %1608 = vmatprep.subr.bf16.mxu0 %v1365
  %1609 = vmatpush1.bf16.msra.mxu0 %v1364
  %1610 = vmatprep.subr.bf16.mxu0 %v1369
  %1611 = vmatpush1.bf16.msra.mxu0 %v1368
  %1612 = vmatprep.subr.bf16.mxu0 %v1373
  %1613 = vmatpush1.bf16.msra.mxu0 %v1372
  %1614 = vmatprep.subr.bf16.mxu0 %v1377
  %1615 = vmatpush1.bf16.msra.mxu0 %v1376
  %1616 = vmatprep.subr.bf16.mxu0 %v1381
  %1617 = vmatpush1.bf16.msra.mxu0 %v1380
  %1618 = vmatprep.subr.bf16.mxu0 %v1385
  %1619 = vmatpush1.bf16.msra.mxu0 %v1384
  %1620 = vmatprep.subr.bf16.mxu0 %v1389
  %1621 = vmatpush1.bf16.msra.mxu0 %v1388
  %1622 = vmatprep.subr.bf16.mxu0 %v1393
  %1623 = vmatpush1.bf16.msra.mxu0 %v1392
  %1624 = vmatprep.subr.bf16.mxu0 %v1397
  %1625 = vmatpush1.bf16.msra.mxu0 %v1396
  %1626 = vmatprep.subr.bf16.mxu0 0
  %1627 = vmatpush1.bf16.msra.mxu0 0
  %1628 = vmatprep.mubr.bf16.mxu0 %v1553
  %1629 = vmatmul.mubr.bf16.gmra.mrb[0].mxu0 %v1549
  %v1630 = vpop.f32.mrb[0].mxu0
  %v1631 = vadd.f32 0.0, %v1630
  %v1632 = vpop.f32.mrb[0].mxu0
  %v1633 = vadd.f32 0.0, %v1632
  %v1634 = vpop.f32.mrb[0].mxu0
  %v1635 = vpop.f32.mrb[0].mxu0
  %1636 = vdwg.mxu0
  %v1637 = vadd.f32 %v1050, %v1590
  %v1638 = vadd.f32 %v1052, %v1592
  %v1639 = vadd.f32 %v1091, %v1631
  %v1640 = vadd.f32 %v1093, %v1633
  %s1641 = scalar_lea.vmem %s1, 1440
  %v1642 = vld [vmem:[%s1641] sm:$0xff]
  %v1643 = vld [vmem:[%s1641 + $0x8] sm:$0xff]
  %v1644 = vld [vmem:[%s1641 + $0x10] sm:$0xff]
  %v1645 = vld [vmem:[%s1641 + $0x18] sm:$0xff]
  %v1646 = vld [vmem:[%s1641 + $0x20] sm:$0xff]
  %v1647 = vld [vmem:[%s1641 + $0x28] sm:$0xff]
  %v1648 = vld [vmem:[%s1641 + $0x30] sm:$0xff]
  %v1649 = vld [vmem:[%s1641 + $0x38] sm:$0xff]
  %v1650 = vld [vmem:[%s1641 + $0x40] sm:$0xff]
  %v1651 = vld [vmem:[%s1641 + $0x48] sm:$0xff]
  %v1652 = vld [vmem:[%s1641 + $0x50] sm:$0xff]
  %v1653 = vld [vmem:[%s1641 + $0x58] sm:$0xff]
  %v1654 = vld [vmem:[%s1641 + $0x60] sm:$0xff]
  %v1655 = vld [vmem:[%s1641 + $0x68] sm:$0xff]
  %v1656 = vld [vmem:[%s1641 + $0x70] sm:$0xff]
  %v1657 = vld [vmem:[%s1641 + $0x78] sm:$0xff]
  %v1658 = vld [vmem:[%s1641 + $0x80] sm:$0xff]
  %v1659 = vld [vmem:[%s1641 + $0x88] sm:$0xff]
  %v1660 = vld [vmem:[%s1641 + $0x90] sm:$0xff]
  %v1661 = vld [vmem:[%s1641 + $0x98] sm:$0xff]
  %v1662 = vld [vmem:[%s1641 + $0xa0] sm:$0xff]
  %v1663 = vld [vmem:[%s1641 + $0xa8] sm:$0xff]
  %v1664 = vld [vmem:[%s1641 + $0xb0] sm:$0xff]
  %v1665 = vld [vmem:[%s1641 + $0xb8] sm:$0xff]
  %v1666 = vld [vmem:[%s1641 + $0xc0] sm:$0xff]
  %v1667 = vld [vmem:[%s1641 + $0xc8] sm:$0xff]
  %v1668 = vld [vmem:[%s1641 + $0xd0] sm:$0xff]
  %v1669 = vld [vmem:[%s1641 + $0xd8] sm:$0xff]
  %v1670 = vld [vmem:[%s1641 + $0xe0] sm:$0xff]
  %v1671 = vld [vmem:[%s1641 + $0xe8] sm:$0xff]
  %v1672 = vld [vmem:[%s1641 + $0xf0] sm:$0xff]
  %v1673 = vld [vmem:[%s1641 + $0xf8] sm:$0xff]
  %v1674 = vld [vmem:[%s1641 + $0x100] sm:$0xff]
  %v1675 = vld [vmem:[%s1641 + $0x108] sm:$0xff]
  %v1676 = vld [vmem:[%s1641 + $0x110] sm:$0xff]
  %v1677 = vld [vmem:[%s1641 + $0x118] sm:$0xff]
  %v1678 = vld [vmem:[%s1641 + $0x120] sm:$0xff]
  %v1679 = vld [vmem:[%s1641 + $0x128] sm:$0xff]
  %v1680 = vld [vmem:[%s1641 + $0x130] sm:$0xff]
  %v1681 = vld [vmem:[%s1641 + $0x138] sm:$0xff]
  %v1682 = vld [vmem:[%s1641 + $0x140] sm:$0xff]
  %v1683 = vld [vmem:[%s1641 + $0x148] sm:$0xff]
  %v1684 = vld [vmem:[%s1641 + $0x150] sm:$0xff]
  %v1685 = vld [vmem:[%s1641 + $0x158] sm:$0xff]
  %v1686 = vld [vmem:[%s1641 + $0x160] sm:$0xff]
  %v1687 = vld [vmem:[%s1641 + $0x168] sm:$0xff]
  %v1688 = vld [vmem:[%s1641 + $0x170] sm:$0xff]
  %v1689 = vld [vmem:[%s1641 + $0x178] sm:$0xff]
  %v1690 = vld [vmem:[%s1641 + $0x180] sm:$0xff]
  %v1691 = vld [vmem:[%s1641 + $0x188] sm:$0xff]
  %v1692 = vld [vmem:[%s1641 + $0x190] sm:$0xff]
  %v1693 = vld [vmem:[%s1641 + $0x198] sm:$0xff]
  %v1694 = vld [vmem:[%s1641 + $0x1a0] sm:$0xff]
  %v1695 = vld [vmem:[%s1641 + $0x1a8] sm:$0xff]
  %v1696 = vld [vmem:[%s1641 + $0x1b0] sm:$0xff]
  %v1697 = vld [vmem:[%s1641 + $0x1b8] sm:$0xff]
  %v1698 = vld [vmem:[%s1641 + $0x1c0] sm:$0xff]
  %v1699 = vld [vmem:[%s1641 + $0x1c8] sm:$0xff]
  %v1700 = vld [vmem:[%s1641 + $0x1d0] sm:$0xff]
  %v1701 = vld [vmem:[%s1641 + $0x1d8] sm:$0xff]
  %v1762 = vunpack.c.l.b16 %v1642
  %v1763 = vunpack.c.h.b16 %v1642
  %v1764 = vunpack.c.l.b16 %v1643
  %v1765 = vunpack.c.h.b16 %v1643
  %v1766 = vunpack.c.l.b16 %v1644
  %v1767 = vunpack.c.h.b16 %v1644
  %v1768 = vunpack.c.l.b16 %v1645
  %v1769 = vunpack.c.h.b16 %v1645
  %v1770 = vunpack.c.l.b16 %v1646
  %v1771 = vunpack.c.h.b16 %v1646
  %v1772 = vunpack.c.l.b16 %v1647
  %v1773 = vunpack.c.h.b16 %v1647
  %v1774 = vunpack.c.l.b16 %v1648
  %v1775 = vunpack.c.h.b16 %v1648
  %v1776 = vunpack.c.l.b16 %v1649
  %v1777 = vunpack.c.h.b16 %v1649
  %v1778 = vunpack.c.l.b16 %v1650
  %v1779 = vunpack.c.h.b16 %v1650
  %v1780 = vunpack.c.l.b16 %v1651
  %v1781 = vunpack.c.h.b16 %v1651
  %v1782 = vunpack.c.l.b16 %v1652
  %v1783 = vunpack.c.h.b16 %v1652
  %v1784 = vunpack.c.l.b16 %v1653
  %v1785 = vunpack.c.h.b16 %v1653
  %v1786 = vunpack.c.l.b16 %v1654
  %v1787 = vunpack.c.h.b16 %v1654
  %v1788 = vunpack.c.l.b16 %v1655
  %v1789 = vunpack.c.h.b16 %v1655
  %v1790 = vunpack.c.l.b16 %v1656
  %v1791 = vunpack.c.h.b16 %v1656
  %v1792 = vunpack.c.l.b16 %v1657
  %v1793 = vunpack.c.h.b16 %v1657
  %v1794 = vunpack.c.l.b16 %v1658
  %v1795 = vunpack.c.h.b16 %v1658
  %v1796 = vunpack.c.l.b16 %v1659
  %v1797 = vunpack.c.h.b16 %v1659
  %v1798 = vunpack.c.l.b16 %v1660
  %v1799 = vunpack.c.h.b16 %v1660
  %v1800 = vunpack.c.l.b16 %v1661
  %v1801 = vunpack.c.h.b16 %v1661
  %v1802 = vunpack.c.l.b16 %v1662
  %v1803 = vunpack.c.h.b16 %v1662
  %v1804 = vunpack.c.l.b16 %v1663
  %v1805 = vunpack.c.h.b16 %v1663
  %v1806 = vunpack.c.l.b16 %v1664
  %v1807 = vunpack.c.h.b16 %v1664
  %v1808 = vunpack.c.l.b16 %v1665
  %v1809 = vunpack.c.h.b16 %v1665
  %v1810 = vunpack.c.l.b16 %v1666
  %v1811 = vunpack.c.h.b16 %v1666
  %v1812 = vunpack.c.l.b16 %v1667
  %v1813 = vunpack.c.h.b16 %v1667
  %v1814 = vunpack.c.l.b16 %v1668
  %v1815 = vunpack.c.h.b16 %v1668
  %v1816 = vunpack.c.l.b16 %v1669
  %v1817 = vunpack.c.h.b16 %v1669
  %v1818 = vunpack.c.l.b16 %v1670
  %v1819 = vunpack.c.h.b16 %v1670
  %v1820 = vunpack.c.l.b16 %v1671
  %v1821 = vunpack.c.h.b16 %v1671
  %v1822 = vunpack.c.l.b16 %v1672
  %v1823 = vunpack.c.h.b16 %v1672
  %v1824 = vunpack.c.l.b16 %v1673
  %v1825 = vunpack.c.h.b16 %v1673
  %v1826 = vunpack.c.l.b16 %v1674
  %v1827 = vunpack.c.h.b16 %v1674
  %v1828 = vunpack.c.l.b16 %v1675
  %v1829 = vunpack.c.h.b16 %v1675
  %v1830 = vunpack.c.l.b16 %v1676
  %v1831 = vunpack.c.h.b16 %v1676
  %v1832 = vunpack.c.l.b16 %v1677
  %v1833 = vunpack.c.h.b16 %v1677
  %v1834 = vunpack.c.l.b16 %v1678
  %v1835 = vunpack.c.h.b16 %v1678
  %v1836 = vunpack.c.l.b16 %v1679
  %v1837 = vunpack.c.h.b16 %v1679
  %v1838 = vunpack.c.l.b16 %v1680
  %v1839 = vunpack.c.h.b16 %v1680
  %v1840 = vunpack.c.l.b16 %v1681
  %v1841 = vunpack.c.h.b16 %v1681
  %v1842 = vunpack.c.l.b16 %v1682
  %v1843 = vunpack.c.h.b16 %v1682
  %v1844 = vunpack.c.l.b16 %v1683
  %v1845 = vunpack.c.h.b16 %v1683
  %v1846 = vunpack.c.l.b16 %v1684
  %v1847 = vunpack.c.h.b16 %v1684
  %v1848 = vunpack.c.l.b16 %v1685
  %v1849 = vunpack.c.h.b16 %v1685
  %v1850 = vunpack.c.l.b16 %v1686
  %v1851 = vunpack.c.h.b16 %v1686
  %v1852 = vunpack.c.l.b16 %v1687
  %v1853 = vunpack.c.h.b16 %v1687
  %v1854 = vunpack.c.l.b16 %v1688
  %v1855 = vunpack.c.h.b16 %v1688
  %v1856 = vunpack.c.l.b16 %v1689
  %v1857 = vunpack.c.h.b16 %v1689
  %v1858 = vunpack.c.l.b16 %v1690
  %v1859 = vunpack.c.h.b16 %v1690
  %v1860 = vunpack.c.l.b16 %v1691
  %v1861 = vunpack.c.h.b16 %v1691
  %v1862 = vunpack.c.l.b16 %v1692
  %v1863 = vunpack.c.h.b16 %v1692
  %v1864 = vunpack.c.l.b16 %v1693
  %v1865 = vunpack.c.h.b16 %v1693
  %v1866 = vunpack.c.l.b16 %v1694
  %v1867 = vunpack.c.h.b16 %v1694
  %v1868 = vunpack.c.l.b16 %v1695
  %v1869 = vunpack.c.h.b16 %v1695
  %v1870 = vunpack.c.l.b16 %v1696
  %v1871 = vunpack.c.h.b16 %v1696
  %v1872 = vunpack.c.l.b16 %v1697
  %v1873 = vunpack.c.h.b16 %v1697
  %v1874 = vunpack.c.l.b16 %v1698
  %v1875 = vunpack.c.h.b16 %v1698
  %v1876 = vunpack.c.l.b16 %v1699
  %v1877 = vunpack.c.h.b16 %v1699
  %v1878 = vunpack.c.l.b16 %v1700
  %v1879 = vunpack.c.h.b16 %v1700
  %v1880 = vunpack.c.l.b16 %v1701
  %v1881 = vunpack.c.h.b16 %v1701
  %v1882 = vpack.c.b16 %v1766, %v1762
  %v1883 = vpack.c.b16 %v1767, %v1763
  %v1884 = vpack.c.b16 %v1768, %v1764
  %v1885 = vpack.c.b16 %v1769, %v1765
  %v1886 = vpack.c.b16 %v1774, %v1770
  %v1887 = vpack.c.b16 %v1775, %v1771
  %v1888 = vpack.c.b16 %v1776, %v1772
  %v1889 = vpack.c.b16 %v1777, %v1773
  %v1890 = vpack.c.b16 %v1782, %v1778
  %v1891 = vpack.c.b16 %v1783, %v1779
  %v1892 = vpack.c.b16 %v1784, %v1780
  %v1893 = vpack.c.b16 %v1785, %v1781
  %v1894 = vpack.c.b16 %v1790, %v1786
  %v1895 = vpack.c.b16 %v1791, %v1787
  %v1896 = vpack.c.b16 %v1792, %v1788
  %v1897 = vpack.c.b16 %v1793, %v1789
  %v1898 = vpack.c.b16 %v1798, %v1794
  %v1899 = vpack.c.b16 %v1799, %v1795
  %v1900 = vpack.c.b16 %v1800, %v1796
  %v1901 = vpack.c.b16 %v1801, %v1797
  %v1902 = vpack.c.b16 %v1806, %v1802
  %v1903 = vpack.c.b16 %v1807, %v1803
  %v1904 = vpack.c.b16 %v1808, %v1804
  %v1905 = vpack.c.b16 %v1809, %v1805
  %v1906 = vpack.c.b16 %v1814, %v1810
  %v1907 = vpack.c.b16 %v1815, %v1811
  %v1908 = vpack.c.b16 %v1816, %v1812
  %v1909 = vpack.c.b16 %v1817, %v1813
  %v1910 = vpack.c.b16 %v1822, %v1818
  %v1911 = vpack.c.b16 %v1823, %v1819
  %v1912 = vpack.c.b16 %v1824, %v1820
  %v1913 = vpack.c.b16 %v1825, %v1821
  %v1914 = vpack.c.b16 %v1830, %v1826
  %v1915 = vpack.c.b16 %v1831, %v1827
  %v1916 = vpack.c.b16 %v1832, %v1828
  %v1917 = vpack.c.b16 %v1833, %v1829
  %v1918 = vpack.c.b16 %v1838, %v1834
  %v1919 = vpack.c.b16 %v1839, %v1835
  %v1920 = vpack.c.b16 %v1840, %v1836
  %v1921 = vpack.c.b16 %v1841, %v1837
  %v1922 = vpack.c.b16 %v1846, %v1842
  %v1923 = vpack.c.b16 %v1847, %v1843
  %v1924 = vpack.c.b16 %v1848, %v1844
  %v1925 = vpack.c.b16 %v1849, %v1845
  %v1926 = vpack.c.b16 %v1854, %v1850
  %v1927 = vpack.c.b16 %v1855, %v1851
  %v1928 = vpack.c.b16 %v1856, %v1852
  %v1929 = vpack.c.b16 %v1857, %v1853
  %v1930 = vpack.c.b16 %v1862, %v1858
  %v1931 = vpack.c.b16 %v1863, %v1859
  %v1932 = vpack.c.b16 %v1864, %v1860
  %v1933 = vpack.c.b16 %v1865, %v1861
  %v1934 = vpack.c.b16 %v1870, %v1866
  %v1935 = vpack.c.b16 %v1871, %v1867
  %v1936 = vpack.c.b16 %v1872, %v1868
  %v1937 = vpack.c.b16 %v1873, %v1869
  %v1938 = vpack.c.b16 %v1878, %v1874
  %v1939 = vpack.c.b16 %v1879, %v1875
  %v1940 = vpack.c.b16 %v1880, %v1876
  %v1941 = vpack.c.b16 %v1881, %v1877
  %2002 = vmatprep.subr.bf16.mxu0 %v1883
  %2003 = vmatpush1.bf16.msra.mxu0 %v1882
  %2004 = vmatprep.subr.bf16.mxu0 %v1887
  %2005 = vmatpush1.bf16.msra.mxu0 %v1886
  %2006 = vmatprep.subr.bf16.mxu0 %v1891
  %2007 = vmatpush1.bf16.msra.mxu0 %v1890
  %2008 = vmatprep.subr.bf16.mxu0 %v1895
  %2009 = vmatpush1.bf16.msra.mxu0 %v1894
  %2010 = vmatprep.subr.bf16.mxu0 %v1899
  %2011 = vmatpush1.bf16.msra.mxu0 %v1898
  %2012 = vmatprep.subr.bf16.mxu0 %v1903
  %2013 = vmatpush1.bf16.msra.mxu0 %v1902
  %2014 = vmatprep.subr.bf16.mxu0 %v1907
  %2015 = vmatpush1.bf16.msra.mxu0 %v1906
  %2016 = vmatprep.subr.bf16.mxu0 %v1911
  %2017 = vmatpush1.bf16.msra.mxu0 %v1910
  %2018 = vmatprep.subr.bf16.mxu0 %v1915
  %2019 = vmatpush1.bf16.msra.mxu0 %v1914
  %2020 = vmatprep.subr.bf16.mxu0 %v1919
  %2021 = vmatpush1.bf16.msra.mxu0 %v1918
  %2022 = vmatprep.subr.bf16.mxu0 %v1923
  %2023 = vmatpush1.bf16.msra.mxu0 %v1922
  %2024 = vmatprep.subr.bf16.mxu0 %v1927
  %2025 = vmatpush1.bf16.msra.mxu0 %v1926
  %2026 = vmatprep.subr.bf16.mxu0 %v1931
  %2027 = vmatpush1.bf16.msra.mxu0 %v1930
  %2028 = vmatprep.subr.bf16.mxu0 %v1935
  %2029 = vmatpush1.bf16.msra.mxu0 %v1934
  %2030 = vmatprep.subr.bf16.mxu0 %v1939
  %2031 = vmatpush1.bf16.msra.mxu0 %v1938
  %2032 = vmatprep.subr.bf16.mxu0 0
  %2033 = vmatpush1.bf16.msra.mxu0 0
  %2034 = vmatprep.mubr.bf16.mxu0 %v1553
  %2035 = vmatmul.mubr.bf16.gmra.mrb[0].mxu0 %v1549
  %v2036 = vpop.f32.mrb[0].mxu0
  %v2037 = vadd.f32 0.0, %v2036
  %v2038 = vpop.f32.mrb[0].mxu0
  %v2039 = vadd.f32 0.0, %v2038
  %v2040 = vpop.f32.mrb[0].mxu0
  %v2041 = vpop.f32.mrb[0].mxu0
  %2042 = vdwg.mxu0
  %2043 = vmatprep.subr.bf16.mxu0 %v1885
  %2044 = vmatpush1.bf16.msra.mxu0 %v1884
  %2045 = vmatprep.subr.bf16.mxu0 %v1889
  %2046 = vmatpush1.bf16.msra.mxu0 %v1888
  %2047 = vmatprep.subr.bf16.mxu0 %v1893
  %2048 = vmatpush1.bf16.msra.mxu0 %v1892
  %2049 = vmatprep.subr.bf16.mxu0 %v1897
  %2050 = vmatpush1.bf16.msra.mxu0 %v1896
  %2051 = vmatprep.subr.bf16.mxu0 %v1901
  %2052 = vmatpush1.bf16.msra.mxu0 %v1900
  %2053 = vmatprep.subr.bf16.mxu0 %v1905
  %2054 = vmatpush1.bf16.msra.mxu0 %v1904
  %2055 = vmatprep.subr.bf16.mxu0 %v1909
  %2056 = vmatpush1.bf16.msra.mxu0 %v1908
  %2057 = vmatprep.subr.bf16.mxu0 %v1913
  %2058 = vmatpush1.bf16.msra.mxu0 %v1912
  %2059 = vmatprep.subr.bf16.mxu0 %v1917
  %2060 = vmatpush1.bf16.msra.mxu0 %v1916
  %2061 = vmatprep.subr.bf16.mxu0 %v1921
  %2062 = vmatpush1.bf16.msra.mxu0 %v1920
  %2063 = vmatprep.subr.bf16.mxu0 %v1925
  %2064 = vmatpush1.bf16.msra.mxu0 %v1924
  %2065 = vmatprep.subr.bf16.mxu0 %v1929
  %2066 = vmatpush1.bf16.msra.mxu0 %v1928
  %2067 = vmatprep.subr.bf16.mxu0 %v1933
  %2068 = vmatpush1.bf16.msra.mxu0 %v1932
  %2069 = vmatprep.subr.bf16.mxu0 %v1937
  %2070 = vmatpush1.bf16.msra.mxu0 %v1936
  %2071 = vmatprep.subr.bf16.mxu0 %v1941
  %2072 = vmatpush1.bf16.msra.mxu0 %v1940
  %2073 = vmatprep.subr.bf16.mxu0 0
  %2074 = vmatpush1.bf16.msra.mxu0 0
  %2075 = vmatprep.mubr.bf16.mxu0 %v1553
  %2076 = vmatmul.mubr.bf16.gmra.mrb[0].mxu0 %v1549
  %v2077 = vpop.f32.mrb[0].mxu0
  %v2078 = vadd.f32 0.0, %v2077
  %v2079 = vpop.f32.mrb[0].mxu0
  %v2080 = vadd.f32 0.0, %v2079
  %v2081 = vpop.f32.mrb[0].mxu0
  %v2082 = vpop.f32.mrb[0].mxu0
  %2083 = vdwg.mxu0
  %v2084 = vadd.f32 %v1540, %v2037
  %v2085 = vadd.f32 %v1541, %v2039
  %v2086 = vadd.f32 %v1542, %v2078
  %v2087 = vadd.f32 %v1543, %v2080
  %s2088 = scalar_lea.vmem %s0, 32
  %v2089 = vld [vmem:[%s2088] sm:$0xff]
  %v2091 = vunpack.c.l.b16 %v2089
  %v2092 = vunpack.c.h.b16 %v2089
  %v2093 = vpack.c.b16 %v2091, %v2091
  %v2094 = vpack.c.b16 %v2092, %v2092
  %v2097 = vsel %vm445, %v2094, 0
  %2099 = vmatprep.subr.bf16.mxu0 %v1883
  %2100 = vmatpush1.bf16.msra.mxu0 %v1882
  %2101 = vmatprep.subr.bf16.mxu0 %v1887
  %2102 = vmatpush1.bf16.msra.mxu0 %v1886
  %2103 = vmatprep.subr.bf16.mxu0 %v1891
  %2104 = vmatpush1.bf16.msra.mxu0 %v1890
  %2105 = vmatprep.subr.bf16.mxu0 %v1895
  %2106 = vmatpush1.bf16.msra.mxu0 %v1894
  %2107 = vmatprep.subr.bf16.mxu0 %v1899
  %2108 = vmatpush1.bf16.msra.mxu0 %v1898
  %2109 = vmatprep.subr.bf16.mxu0 %v1903
  %2110 = vmatpush1.bf16.msra.mxu0 %v1902
  %2111 = vmatprep.subr.bf16.mxu0 %v1907
  %2112 = vmatpush1.bf16.msra.mxu0 %v1906
  %2113 = vmatprep.subr.bf16.mxu0 %v1911
  %2114 = vmatpush1.bf16.msra.mxu0 %v1910
  %2115 = vmatprep.subr.bf16.mxu0 %v1915
  %2116 = vmatpush1.bf16.msra.mxu0 %v1914
  %2117 = vmatprep.subr.bf16.mxu0 %v1919
  %2118 = vmatpush1.bf16.msra.mxu0 %v1918
  %2119 = vmatprep.subr.bf16.mxu0 %v1923
  %2120 = vmatpush1.bf16.msra.mxu0 %v1922
  %2121 = vmatprep.subr.bf16.mxu0 %v1927
  %2122 = vmatpush1.bf16.msra.mxu0 %v1926
  %2123 = vmatprep.subr.bf16.mxu0 %v1931
  %2124 = vmatpush1.bf16.msra.mxu0 %v1930
  %2125 = vmatprep.subr.bf16.mxu0 %v1935
  %2126 = vmatpush1.bf16.msra.mxu0 %v1934
  %2127 = vmatprep.subr.bf16.mxu0 %v1939
  %2128 = vmatpush1.bf16.msra.mxu0 %v1938
  %2129 = vmatprep.subr.bf16.mxu0 0
  %2130 = vmatpush1.bf16.msra.mxu0 0
  %2131 = vmatprep.mubr.bf16.mxu0 %v2097
  %2132 = vmatmul.mubr.bf16.gmra.mrb[0].mxu0 %v2093
  %v2133 = vpop.f32.mrb[0].mxu0
  %v2134 = vadd.f32 0.0, %v2133
  %v2135 = vpop.f32.mrb[0].mxu0
  %v2136 = vadd.f32 0.0, %v2135
  %v2137 = vpop.f32.mrb[0].mxu0
  %v2138 = vpop.f32.mrb[0].mxu0
  %2139 = vdwg.mxu0
  %2140 = vmatprep.subr.bf16.mxu0 %v1885
  %2141 = vmatpush1.bf16.msra.mxu0 %v1884
  %2142 = vmatprep.subr.bf16.mxu0 %v1889
  %2143 = vmatpush1.bf16.msra.mxu0 %v1888
  %2144 = vmatprep.subr.bf16.mxu0 %v1893
  %2145 = vmatpush1.bf16.msra.mxu0 %v1892
  %2146 = vmatprep.subr.bf16.mxu0 %v1897
  %2147 = vmatpush1.bf16.msra.mxu0 %v1896
  %2148 = vmatprep.subr.bf16.mxu0 %v1901
  %2149 = vmatpush1.bf16.msra.mxu0 %v1900
  %2150 = vmatprep.subr.bf16.mxu0 %v1905
  %2151 = vmatpush1.bf16.msra.mxu0 %v1904
  %2152 = vmatprep.subr.bf16.mxu0 %v1909
  %2153 = vmatpush1.bf16.msra.mxu0 %v1908
  %2154 = vmatprep.subr.bf16.mxu0 %v1913
  %2155 = vmatpush1.bf16.msra.mxu0 %v1912
  %2156 = vmatprep.subr.bf16.mxu0 %v1917
  %2157 = vmatpush1.bf16.msra.mxu0 %v1916
  %2158 = vmatprep.subr.bf16.mxu0 %v1921
  %2159 = vmatpush1.bf16.msra.mxu0 %v1920
  %2160 = vmatprep.subr.bf16.mxu0 %v1925
  %2161 = vmatpush1.bf16.msra.mxu0 %v1924
  %2162 = vmatprep.subr.bf16.mxu0 %v1929
  %2163 = vmatpush1.bf16.msra.mxu0 %v1928
  %2164 = vmatprep.subr.bf16.mxu0 %v1933
  %2165 = vmatpush1.bf16.msra.mxu0 %v1932
  %2166 = vmatprep.subr.bf16.mxu0 %v1937
  %2167 = vmatpush1.bf16.msra.mxu0 %v1936
  %2168 = vmatprep.subr.bf16.mxu0 %v1941
  %2169 = vmatpush1.bf16.msra.mxu0 %v1940
  %2170 = vmatprep.subr.bf16.mxu0 0
  %2171 = vmatpush1.bf16.msra.mxu0 0
  %2172 = vmatprep.mubr.bf16.mxu0 %v2097
  %2173 = vmatmul.mubr.bf16.gmra.mrb[0].mxu0 %v2093
  %v2174 = vpop.f32.mrb[0].mxu0
  %v2175 = vadd.f32 0.0, %v2174
  %v2176 = vpop.f32.mrb[0].mxu0
  %v2177 = vadd.f32 0.0, %v2176
  %v2178 = vpop.f32.mrb[0].mxu0
  %v2179 = vpop.f32.mrb[0].mxu0
  %2180 = vdwg.mxu0
  %v2181 = vadd.f32 %v1637, %v2134
  %v2182 = vadd.f32 %v1638, %v2136
  %v2183 = vadd.f32 %v1639, %v2175
  %v2184 = vadd.f32 %v1640, %v2177
  %s2185 = scalar_lea.vmem %s1, 1920
  %v2186 = vld [vmem:[%s2185] sm:$0xff]
  %v2187 = vld [vmem:[%s2185 + $0x8] sm:$0xff]
  %v2188 = vld [vmem:[%s2185 + $0x10] sm:$0xff]
  %v2189 = vld [vmem:[%s2185 + $0x18] sm:$0xff]
  %v2190 = vld [vmem:[%s2185 + $0x20] sm:$0xff]
  %v2191 = vld [vmem:[%s2185 + $0x28] sm:$0xff]
  %v2192 = vld [vmem:[%s2185 + $0x30] sm:$0xff]
  %v2193 = vld [vmem:[%s2185 + $0x38] sm:$0xff]
  %v2194 = vld [vmem:[%s2185 + $0x40] sm:$0xff]
  %v2195 = vld [vmem:[%s2185 + $0x48] sm:$0xff]
  %v2196 = vld [vmem:[%s2185 + $0x50] sm:$0xff]
  %v2197 = vld [vmem:[%s2185 + $0x58] sm:$0xff]
  %v2198 = vld [vmem:[%s2185 + $0x60] sm:$0xff]
  %v2199 = vld [vmem:[%s2185 + $0x68] sm:$0xff]
  %v2200 = vld [vmem:[%s2185 + $0x70] sm:$0xff]
  %v2201 = vld [vmem:[%s2185 + $0x78] sm:$0xff]
  %v2202 = vld [vmem:[%s2185 + $0x80] sm:$0xff]
  %v2203 = vld [vmem:[%s2185 + $0x88] sm:$0xff]
  %v2204 = vld [vmem:[%s2185 + $0x90] sm:$0xff]
  %v2205 = vld [vmem:[%s2185 + $0x98] sm:$0xff]
  %v2206 = vld [vmem:[%s2185 + $0xa0] sm:$0xff]
  %v2207 = vld [vmem:[%s2185 + $0xa8] sm:$0xff]
  %v2208 = vld [vmem:[%s2185 + $0xb0] sm:$0xff]
  %v2209 = vld [vmem:[%s2185 + $0xb8] sm:$0xff]
  %v2210 = vld [vmem:[%s2185 + $0xc0] sm:$0xff]
  %v2211 = vld [vmem:[%s2185 + $0xc8] sm:$0xff]
  %v2212 = vld [vmem:[%s2185 + $0xd0] sm:$0xff]
  %v2213 = vld [vmem:[%s2185 + $0xd8] sm:$0xff]
  %v2214 = vld [vmem:[%s2185 + $0xe0] sm:$0xff]
  %v2215 = vld [vmem:[%s2185 + $0xe8] sm:$0xff]
  %v2216 = vld [vmem:[%s2185 + $0xf0] sm:$0xff]
  %v2217 = vld [vmem:[%s2185 + $0xf8] sm:$0xff]
  %v2218 = vld [vmem:[%s2185 + $0x100] sm:$0xff]
  %v2219 = vld [vmem:[%s2185 + $0x108] sm:$0xff]
  %v2220 = vld [vmem:[%s2185 + $0x110] sm:$0xff]
  %v2221 = vld [vmem:[%s2185 + $0x118] sm:$0xff]
  %v2222 = vld [vmem:[%s2185 + $0x120] sm:$0xff]
  %v2223 = vld [vmem:[%s2185 + $0x128] sm:$0xff]
  %v2224 = vld [vmem:[%s2185 + $0x130] sm:$0xff]
  %v2225 = vld [vmem:[%s2185 + $0x138] sm:$0xff]
  %v2226 = vld [vmem:[%s2185 + $0x140] sm:$0xff]
  %v2227 = vld [vmem:[%s2185 + $0x148] sm:$0xff]
  %v2228 = vld [vmem:[%s2185 + $0x150] sm:$0xff]
  %v2229 = vld [vmem:[%s2185 + $0x158] sm:$0xff]
  %v2230 = vld [vmem:[%s2185 + $0x160] sm:$0xff]
  %v2231 = vld [vmem:[%s2185 + $0x168] sm:$0xff]
  %v2232 = vld [vmem:[%s2185 + $0x170] sm:$0xff]
  %v2233 = vld [vmem:[%s2185 + $0x178] sm:$0xff]
  %v2234 = vld [vmem:[%s2185 + $0x180] sm:$0xff]
  %v2235 = vld [vmem:[%s2185 + $0x188] sm:$0xff]
  %v2236 = vld [vmem:[%s2185 + $0x190] sm:$0xff]
  %v2237 = vld [vmem:[%s2185 + $0x198] sm:$0xff]
  %v2238 = vld [vmem:[%s2185 + $0x1a0] sm:$0xff]
  %v2239 = vld [vmem:[%s2185 + $0x1a8] sm:$0xff]
  %v2240 = vld [vmem:[%s2185 + $0x1b0] sm:$0xff]
  %v2241 = vld [vmem:[%s2185 + $0x1b8] sm:$0xff]
  %v2242 = vld [vmem:[%s2185 + $0x1c0] sm:$0xff]
  %v2243 = vld [vmem:[%s2185 + $0x1c8] sm:$0xff]
  %v2244 = vld [vmem:[%s2185 + $0x1d0] sm:$0xff]
  %v2245 = vld [vmem:[%s2185 + $0x1d8] sm:$0xff]
  %v2306 = vunpack.c.l.b16 %v2186
  %v2307 = vunpack.c.h.b16 %v2186
  %v2308 = vunpack.c.l.b16 %v2187
  %v2309 = vunpack.c.h.b16 %v2187
  %v2310 = vunpack.c.l.b16 %v2188
  %v2311 = vunpack.c.h.b16 %v2188
  %v2312 = vunpack.c.l.b16 %v2189
  %v2313 = vunpack.c.h.b16 %v2189
  %v2314 = vunpack.c.l.b16 %v2190
  %v2315 = vunpack.c.h.b16 %v2190
  %v2316 = vunpack.c.l.b16 %v2191
  %v2317 = vunpack.c.h.b16 %v2191
  %v2318 = vunpack.c.l.b16 %v2192
  %v2319 = vunpack.c.h.b16 %v2192
  %v2320 = vunpack.c.l.b16 %v2193
  %v2321 = vunpack.c.h.b16 %v2193
  %v2322 = vunpack.c.l.b16 %v2194
  %v2323 = vunpack.c.h.b16 %v2194
  %v2324 = vunpack.c.l.b16 %v2195
  %v2325 = vunpack.c.h.b16 %v2195
  %v2326 = vunpack.c.l.b16 %v2196
  %v2327 = vunpack.c.h.b16 %v2196
  %v2328 = vunpack.c.l.b16 %v2197
  %v2329 = vunpack.c.h.b16 %v2197
  %v2330 = vunpack.c.l.b16 %v2198
  %v2331 = vunpack.c.h.b16 %v2198
  %v2332 = vunpack.c.l.b16 %v2199
  %v2333 = vunpack.c.h.b16 %v2199
  %v2334 = vunpack.c.l.b16 %v2200
  %v2335 = vunpack.c.h.b16 %v2200
  %v2336 = vunpack.c.l.b16 %v2201
  %v2337 = vunpack.c.h.b16 %v2201
  %v2338 = vunpack.c.l.b16 %v2202
  %v2339 = vunpack.c.h.b16 %v2202
  %v2340 = vunpack.c.l.b16 %v2203
  %v2341 = vunpack.c.h.b16 %v2203
  %v2342 = vunpack.c.l.b16 %v2204
  %v2343 = vunpack.c.h.b16 %v2204
  %v2344 = vunpack.c.l.b16 %v2205
  %v2345 = vunpack.c.h.b16 %v2205
  %v2346 = vunpack.c.l.b16 %v2206
  %v2347 = vunpack.c.h.b16 %v2206
  %v2348 = vunpack.c.l.b16 %v2207
  %v2349 = vunpack.c.h.b16 %v2207
  %v2350 = vunpack.c.l.b16 %v2208
  %v2351 = vunpack.c.h.b16 %v2208
  %v2352 = vunpack.c.l.b16 %v2209
  %v2353 = vunpack.c.h.b16 %v2209
  %v2354 = vunpack.c.l.b16 %v2210
  %v2355 = vunpack.c.h.b16 %v2210
  %v2356 = vunpack.c.l.b16 %v2211
  %v2357 = vunpack.c.h.b16 %v2211
  %v2358 = vunpack.c.l.b16 %v2212
  %v2359 = vunpack.c.h.b16 %v2212
  %v2360 = vunpack.c.l.b16 %v2213
  %v2361 = vunpack.c.h.b16 %v2213
  %v2362 = vunpack.c.l.b16 %v2214
  %v2363 = vunpack.c.h.b16 %v2214
  %v2364 = vunpack.c.l.b16 %v2215
  %v2365 = vunpack.c.h.b16 %v2215
  %v2366 = vunpack.c.l.b16 %v2216
  %v2367 = vunpack.c.h.b16 %v2216
  %v2368 = vunpack.c.l.b16 %v2217
  %v2369 = vunpack.c.h.b16 %v2217
  %v2370 = vunpack.c.l.b16 %v2218
  %v2371 = vunpack.c.h.b16 %v2218
  %v2372 = vunpack.c.l.b16 %v2219
  %v2373 = vunpack.c.h.b16 %v2219
  %v2374 = vunpack.c.l.b16 %v2220
  %v2375 = vunpack.c.h.b16 %v2220
  %v2376 = vunpack.c.l.b16 %v2221
  %v2377 = vunpack.c.h.b16 %v2221
  %v2378 = vunpack.c.l.b16 %v2222
  %v2379 = vunpack.c.h.b16 %v2222
  %v2380 = vunpack.c.l.b16 %v2223
  %v2381 = vunpack.c.h.b16 %v2223
  %v2382 = vunpack.c.l.b16 %v2224
  %v2383 = vunpack.c.h.b16 %v2224
  %v2384 = vunpack.c.l.b16 %v2225
  %v2385 = vunpack.c.h.b16 %v2225
  %v2386 = vunpack.c.l.b16 %v2226
  %v2387 = vunpack.c.h.b16 %v2226
  %v2388 = vunpack.c.l.b16 %v2227
  %v2389 = vunpack.c.h.b16 %v2227
  %v2390 = vunpack.c.l.b16 %v2228
  %v2391 = vunpack.c.h.b16 %v2228
  %v2392 = vunpack.c.l.b16 %v2229
  %v2393 = vunpack.c.h.b16 %v2229
  %v2394 = vunpack.c.l.b16 %v2230
  %v2395 = vunpack.c.h.b16 %v2230
  %v2396 = vunpack.c.l.b16 %v2231
  %v2397 = vunpack.c.h.b16 %v2231
  %v2398 = vunpack.c.l.b16 %v2232
  %v2399 = vunpack.c.h.b16 %v2232
  %v2400 = vunpack.c.l.b16 %v2233
  %v2401 = vunpack.c.h.b16 %v2233
  %v2402 = vunpack.c.l.b16 %v2234
  %v2403 = vunpack.c.h.b16 %v2234
  %v2404 = vunpack.c.l.b16 %v2235
  %v2405 = vunpack.c.h.b16 %v2235
  %v2406 = vunpack.c.l.b16 %v2236
  %v2407 = vunpack.c.h.b16 %v2236
  %v2408 = vunpack.c.l.b16 %v2237
  %v2409 = vunpack.c.h.b16 %v2237
  %v2410 = vunpack.c.l.b16 %v2238
  %v2411 = vunpack.c.h.b16 %v2238
  %v2412 = vunpack.c.l.b16 %v2239
  %v2413 = vunpack.c.h.b16 %v2239
  %v2414 = vunpack.c.l.b16 %v2240
  %v2415 = vunpack.c.h.b16 %v2240
  %v2416 = vunpack.c.l.b16 %v2241
  %v2417 = vunpack.c.h.b16 %v2241
  %v2418 = vunpack.c.l.b16 %v2242
  %v2419 = vunpack.c.h.b16 %v2242
  %v2420 = vunpack.c.l.b16 %v2243
  %v2421 = vunpack.c.h.b16 %v2243
  %v2422 = vunpack.c.l.b16 %v2244
  %v2423 = vunpack.c.h.b16 %v2244
  %v2424 = vunpack.c.l.b16 %v2245
  %v2425 = vunpack.c.h.b16 %v2245
  %v2426 = vpack.c.b16 %v2310, %v2306
  %v2427 = vpack.c.b16 %v2311, %v2307
  %v2428 = vpack.c.b16 %v2312, %v2308
  %v2429 = vpack.c.b16 %v2313, %v2309
  %v2430 = vpack.c.b16 %v2318, %v2314
  %v2431 = vpack.c.b16 %v2319, %v2315
  %v2432 = vpack.c.b16 %v2320, %v2316
  %v2433 = vpack.c.b16 %v2321, %v2317
  %v2434 = vpack.c.b16 %v2326, %v2322
  %v2435 = vpack.c.b16 %v2327, %v2323
  %v2436 = vpack.c.b16 %v2328, %v2324
  %v2437 = vpack.c.b16 %v2329, %v2325
  %v2438 = vpack.c.b16 %v2334, %v2330
  %v2439 = vpack.c.b16 %v2335, %v2331
  %v2440 = vpack.c.b16 %v2336, %v2332
  %v2441 = vpack.c.b16 %v2337, %v2333
  %v2442 = vpack.c.b16 %v2342, %v2338
  %v2443 = vpack.c.b16 %v2343, %v2339
  %v2444 = vpack.c.b16 %v2344, %v2340
  %v2445 = vpack.c.b16 %v2345, %v2341
  %v2446 = vpack.c.b16 %v2350, %v2346
  %v2447 = vpack.c.b16 %v2351, %v2347
  %v2448 = vpack.c.b16 %v2352, %v2348
  %v2449 = vpack.c.b16 %v2353, %v2349
  %v2450 = vpack.c.b16 %v2358, %v2354
  %v2451 = vpack.c.b16 %v2359, %v2355
  %v2452 = vpack.c.b16 %v2360, %v2356
  %v2453 = vpack.c.b16 %v2361, %v2357
  %v2454 = vpack.c.b16 %v2366, %v2362
  %v2455 = vpack.c.b16 %v2367, %v2363
  %v2456 = vpack.c.b16 %v2368, %v2364
  %v2457 = vpack.c.b16 %v2369, %v2365
  %v2458 = vpack.c.b16 %v2374, %v2370
  %v2459 = vpack.c.b16 %v2375, %v2371
  %v2460 = vpack.c.b16 %v2376, %v2372
  %v2461 = vpack.c.b16 %v2377, %v2373
  %v2462 = vpack.c.b16 %v2382, %v2378
  %v2463 = vpack.c.b16 %v2383, %v2379
  %v2464 = vpack.c.b16 %v2384, %v2380
  %v2465 = vpack.c.b16 %v2385, %v2381
  %v2466 = vpack.c.b16 %v2390, %v2386
  %v2467 = vpack.c.b16 %v2391, %v2387
  %v2468 = vpack.c.b16 %v2392, %v2388
  %v2469 = vpack.c.b16 %v2393, %v2389
  %v2470 = vpack.c.b16 %v2398, %v2394
  %v2471 = vpack.c.b16 %v2399, %v2395
  %v2472 = vpack.c.b16 %v2400, %v2396
  %v2473 = vpack.c.b16 %v2401, %v2397
  %v2474 = vpack.c.b16 %v2406, %v2402
  %v2475 = vpack.c.b16 %v2407, %v2403
  %v2476 = vpack.c.b16 %v2408, %v2404
  %v2477 = vpack.c.b16 %v2409, %v2405
  %v2478 = vpack.c.b16 %v2414, %v2410
  %v2479 = vpack.c.b16 %v2415, %v2411
  %v2480 = vpack.c.b16 %v2416, %v2412
  %v2481 = vpack.c.b16 %v2417, %v2413
  %v2482 = vpack.c.b16 %v2422, %v2418
  %v2483 = vpack.c.b16 %v2423, %v2419
  %v2484 = vpack.c.b16 %v2424, %v2420
  %v2485 = vpack.c.b16 %v2425, %v2421
  %2546 = vmatprep.subr.bf16.mxu0 %v2427
  %2547 = vmatpush1.bf16.msra.mxu0 %v2426
  %2548 = vmatprep.subr.bf16.mxu0 %v2431
  %2549 = vmatpush1.bf16.msra.mxu0 %v2430
  %2550 = vmatprep.subr.bf16.mxu0 %v2435
  %2551 = vmatpush1.bf16.msra.mxu0 %v2434
  %2552 = vmatprep.subr.bf16.mxu0 %v2439
  %2553 = vmatpush1.bf16.msra.mxu0 %v2438
  %2554 = vmatprep.subr.bf16.mxu0 %v2443
  %2555 = vmatpush1.bf16.msra.mxu0 %v2442
  %2556 = vmatprep.subr.bf16.mxu0 %v2447
  %2557 = vmatpush1.bf16.msra.mxu0 %v2446
  %2558 = vmatprep.subr.bf16.mxu0 %v2451
  %2559 = vmatpush1.bf16.msra.mxu0 %v2450
  %2560 = vmatprep.subr.bf16.mxu0 %v2455
  %2561 = vmatpush1.bf16.msra.mxu0 %v2454
  %2562 = vmatprep.subr.bf16.mxu0 %v2459
  %2563 = vmatpush1.bf16.msra.mxu0 %v2458
  %2564 = vmatprep.subr.bf16.mxu0 %v2463
  %2565 = vmatpush1.bf16.msra.mxu0 %v2462
  %2566 = vmatprep.subr.bf16.mxu0 %v2467
  %2567 = vmatpush1.bf16.msra.mxu0 %v2466
  %2568 = vmatprep.subr.bf16.mxu0 %v2471
  %2569 = vmatpush1.bf16.msra.mxu0 %v2470
  %2570 = vmatprep.subr.bf16.mxu0 %v2475
  %2571 = vmatpush1.bf16.msra.mxu0 %v2474
  %2572 = vmatprep.subr.bf16.mxu0 %v2479
  %2573 = vmatpush1.bf16.msra.mxu0 %v2478
  %2574 = vmatprep.subr.bf16.mxu0 %v2483
  %2575 = vmatpush1.bf16.msra.mxu0 %v2482
  %2576 = vmatprep.subr.bf16.mxu0 0
  %2577 = vmatpush1.bf16.msra.mxu0 0
  %2578 = vmatprep.mubr.bf16.mxu0 %v2097
  %2579 = vmatmul.mubr.bf16.gmra.mrb[0].mxu0 %v2093
  %v2580 = vpop.f32.mrb[0].mxu0
  %v2581 = vadd.f32 0.0, %v2580
  %v2582 = vpop.f32.mrb[0].mxu0
  %v2583 = vadd.f32 0.0, %v2582
  %v2584 = vpop.f32.mrb[0].mxu0
  %v2585 = vpop.f32.mrb[0].mxu0
  %2586 = vdwg.mxu0
  %2587 = vmatprep.subr.bf16.mxu0 %v2429
  %2588 = vmatpush1.bf16.msra.mxu0 %v2428
  %2589 = vmatprep.subr.bf16.mxu0 %v2433
  %2590 = vmatpush1.bf16.msra.mxu0 %v2432
  %2591 = vmatprep.subr.bf16.mxu0 %v2437
  %2592 = vmatpush1.bf16.msra.mxu0 %v2436
  %2593 = vmatprep.subr.bf16.mxu0 %v2441
  %2594 = vmatpush1.bf16.msra.mxu0 %v2440
  %2595 = vmatprep.subr.bf16.mxu0 %v2445
  %2596 = vmatpush1.bf16.msra.mxu0 %v2444
  %2597 = vmatprep.subr.bf16.mxu0 %v2449
  %2598 = vmatpush1.bf16.msra.mxu0 %v2448
  %2599 = vmatprep.subr.bf16.mxu0 %v2453
  %2600 = vmatpush1.bf16.msra.mxu0 %v2452
  %2601 = vmatprep.subr.bf16.mxu0 %v2457
  %2602 = vmatpush1.bf16.msra.mxu0 %v2456
  %2603 = vmatprep.subr.bf16.mxu0 %v2461
  %2604 = vmatpush1.bf16.msra.mxu0 %v2460
  %2605 = vmatprep.subr.bf16.mxu0 %v2465
  %2606 = vmatpush1.bf16.msra.mxu0 %v2464
  %2607 = vmatprep.subr.bf16.mxu0 %v2469
  %2608 = vmatpush1.bf16.msra.mxu0 %v2468
  %2609 = vmatprep.subr.bf16.mxu0 %v2473
  %2610 = vmatpush1.bf16.msra.mxu0 %v2472
  %2611 = vmatprep.subr.bf16.mxu0 %v2477
  %2612 = vmatpush1.bf16.msra.mxu0 %v2476
  %2613 = vmatprep.subr.bf16.mxu0 %v2481
  %2614 = vmatpush1.bf16.msra.mxu0 %v2480
  %2615 = vmatprep.subr.bf16.mxu0 %v2485
  %2616 = vmatpush1.bf16.msra.mxu0 %v2484
  %2617 = vmatprep.subr.bf16.mxu0 0
  %2618 = vmatpush1.bf16.msra.mxu0 0
  %2619 = vmatprep.mubr.bf16.mxu0 %v2097
  %2620 = vmatmul.mubr.bf16.gmra.mrb[0].mxu0 %v2093
  %v2621 = vpop.f32.mrb[0].mxu0
  %v2622 = vadd.f32 0.0, %v2621
  %v2623 = vpop.f32.mrb[0].mxu0
  %v2624 = vadd.f32 0.0, %v2623
  %v2625 = vpop.f32.mrb[0].mxu0
  %v2626 = vpop.f32.mrb[0].mxu0
  %2627 = vdwg.mxu0
  %v2628 = vadd.f32 %v2084, %v2581
  %v2629 = vadd.f32 %v2085, %v2583
  %v2630 = vadd.f32 %v2086, %v2622
  %v2631 = vadd.f32 %v2087, %v2624
  %s2632 = scalar_lea.vmem %s0, 40
  %v2633 = vld [vmem:[%s2632] sm:$0xff]
  %v2635 = vunpack.c.l.b16 %v2633
  %v2636 = vunpack.c.h.b16 %v2633
  %v2637 = vpack.c.b16 %v2635, %v2635
  %v2638 = vpack.c.b16 %v2636, %v2636
  %v2641 = vsel %vm445, %v2638, 0
  %2643 = vmatprep.subr.bf16.mxu0 %v2427
  %2644 = vmatpush1.bf16.msra.mxu0 %v2426
  %2645 = vmatprep.subr.bf16.mxu0 %v2431
  %2646 = vmatpush1.bf16.msra.mxu0 %v2430
  %2647 = vmatprep.subr.bf16.mxu0 %v2435
  %2648 = vmatpush1.bf16.msra.mxu0 %v2434
  %2649 = vmatprep.subr.bf16.mxu0 %v2439
  %2650 = vmatpush1.bf16.msra.mxu0 %v2438
  %2651 = vmatprep.subr.bf16.mxu0 %v2443
  %2652 = vmatpush1.bf16.msra.mxu0 %v2442
  %2653 = vmatprep.subr.bf16.mxu0 %v2447
  %2654 = vmatpush1.bf16.msra.mxu0 %v2446
  %2655 = vmatprep.subr.bf16.mxu0 %v2451
  %2656 = vmatpush1.bf16.msra.mxu0 %v2450
  %2657 = vmatprep.subr.bf16.mxu0 %v2455
  %2658 = vmatpush1.bf16.msra.mxu0 %v2454
  %2659 = vmatprep.subr.bf16.mxu0 %v2459
  %2660 = vmatpush1.bf16.msra.mxu0 %v2458
  %2661 = vmatprep.subr.bf16.mxu0 %v2463
  %2662 = vmatpush1.bf16.msra.mxu0 %v2462
  %2663 = vmatprep.subr.bf16.mxu0 %v2467
  %2664 = vmatpush1.bf16.msra.mxu0 %v2466
  %2665 = vmatprep.subr.bf16.mxu0 %v2471
  %2666 = vmatpush1.bf16.msra.mxu0 %v2470
  %2667 = vmatprep.subr.bf16.mxu0 %v2475
  %2668 = vmatpush1.bf16.msra.mxu0 %v2474
  %2669 = vmatprep.subr.bf16.mxu0 %v2479
  %2670 = vmatpush1.bf16.msra.mxu0 %v2478
  %2671 = vmatprep.subr.bf16.mxu0 %v2483
  %2672 = vmatpush1.bf16.msra.mxu0 %v2482
  %2673 = vmatprep.subr.bf16.mxu0 0
  %2674 = vmatpush1.bf16.msra.mxu0 0
  %2675 = vmatprep.mubr.bf16.mxu0 %v2641
  %2676 = vmatmul.mubr.bf16.gmra.mrb[0].mxu0 %v2637
  %v2677 = vpop.f32.mrb[0].mxu0
  %v2678 = vadd.f32 0.0, %v2677
  %v2679 = vpop.f32.mrb[0].mxu0
  %v2680 = vadd.f32 0.0, %v2679
  %v2681 = vpop.f32.mrb[0].mxu0
  %v2682 = vpop.f32.mrb[0].mxu0
  %2683 = vdwg.mxu0
  %2684 = vmatprep.subr.bf16.mxu0 %v2429
  %2685 = vmatpush1.bf16.msra.mxu0 %v2428
  %2686 = vmatprep.subr.bf16.mxu0 %v2433
  %2687 = vmatpush1.bf16.msra.mxu0 %v2432
  %2688 = vmatprep.subr.bf16.mxu0 %v2437
  %2689 = vmatpush1.bf16.msra.mxu0 %v2436
  %2690 = vmatprep.subr.bf16.mxu0 %v2441
  %2691 = vmatpush1.bf16.msra.mxu0 %v2440
  %2692 = vmatprep.subr.bf16.mxu0 %v2445
  %2693 = vmatpush1.bf16.msra.mxu0 %v2444
  %2694 = vmatprep.subr.bf16.mxu0 %v2449
  %2695 = vmatpush1.bf16.msra.mxu0 %v2448
  %2696 = vmatprep.subr.bf16.mxu0 %v2453
  %2697 = vmatpush1.bf16.msra.mxu0 %v2452
  %2698 = vmatprep.subr.bf16.mxu0 %v2457
  %2699 = vmatpush1.bf16.msra.mxu0 %v2456
  %2700 = vmatprep.subr.bf16.mxu0 %v2461
  %2701 = vmatpush1.bf16.msra.mxu0 %v2460
  %2702 = vmatprep.subr.bf16.mxu0 %v2465
  %2703 = vmatpush1.bf16.msra.mxu0 %v2464
  %2704 = vmatprep.subr.bf16.mxu0 %v2469
  %2705 = vmatpush1.bf16.msra.mxu0 %v2468
  %2706 = vmatprep.subr.bf16.mxu0 %v2473
  %2707 = vmatpush1.bf16.msra.mxu0 %v2472
  %2708 = vmatprep.subr.bf16.mxu0 %v2477
  %2709 = vmatpush1.bf16.msra.mxu0 %v2476
  %2710 = vmatprep.subr.bf16.mxu0 %v2481
  %2711 = vmatpush1.bf16.msra.mxu0 %v2480
  %2712 = vmatprep.subr.bf16.mxu0 %v2485
  %2713 = vmatpush1.bf16.msra.mxu0 %v2484
  %2714 = vmatprep.subr.bf16.mxu0 0
  %2715 = vmatpush1.bf16.msra.mxu0 0
  %2716 = vmatprep.mubr.bf16.mxu0 %v2641
  %2717 = vmatmul.mubr.bf16.gmra.mrb[0].mxu0 %v2637
  %v2718 = vpop.f32.mrb[0].mxu0
  %v2719 = vadd.f32 0.0, %v2718
  %v2720 = vpop.f32.mrb[0].mxu0
  %v2721 = vadd.f32 0.0, %v2720
  %v2722 = vpop.f32.mrb[0].mxu0
  %v2723 = vpop.f32.mrb[0].mxu0
  %2724 = vdwg.mxu0
  %v2725 = vadd.f32 %v2181, %v2678
  %v2726 = vadd.f32 %v2182, %v2680
  %v2727 = vadd.f32 %v2183, %v2719
  %v2728 = vadd.f32 %v2184, %v2721
  %v2729 = vmax.f32 %v2628, %v2725
  %v2730 = vmax.f32 %v2629, %v2726
  %v2731 = vmax.f32 %v2630, %v2727
  %v2732 = vmax.f32 %v2631, %v2728
  %2736 = vrot.lane.b32.xlu0 %v2730, 56
  %v2737 = vpop.permute.xlu0 %2736
  %2738 = vrot.lane.b32.xlu0 %v2731, 56
  %v2739 = vpop.permute.xlu0 %2738
  %2740 = vrot.lane.b32.xlu0 %v2732, 56
  %v2741 = vpop.permute.xlu0 %2740
  %vm2742 = vcmask 457728
  %v2743 = vsel %vm2742, %v2737, %v2739
  %v2744 = vsel %vm2742, %v2739, %v2741
  %v2747 = vmax.f32 %v2729, %v2743
  %v2748 = vmax.f32 %v2730, %v2744
  %v2749 = vld [vmem:[%s2] sm:$0x3]
  %v2751 = vlaneseq
  %v2752 = vshrl.u32 %v2751, 7
  %v2753 = vsub.s32 0, %v2752
  %v2754 = vrot.slane %v2749, %v2753
  %v2755 = vlaneseq
  %v2756 = vshrl.u32 %v2755, 7
  %v2757 = vsub.s32 1, %v2756
  %v2758 = vrot.slane %v2749, %v2757
  %v2761 = vadd.f32 %v2747, %v2754
  %v2762 = vadd.f32 %v2748, %v2758
  %v2763 = vmax.f32 %v2761, 0.0
  %v2764 = vmax.f32 %v2762, 0.0
  %v2765 = vpack.c.bf16 %v2763, %v2763
  %v2766 = vpack.c.bf16 %v2764, %v2764
  %v2769 = vunpack.c.l.b16 %v2765
  %v2770 = vunpack.c.l.b16 %v2766
  %v2771 = vpack.c.b16 %v2770, %v2769
  %vm2773 = vcmask 1043456
  %vm2774 = vcmask 588804
  %vm2775 = vmor %vm2774, %vm2773
  %2776 = vst.msk [vmem:[%s3] sm:$0xff] %vm2775, %v2771
  // Predicated region
  $region14: #{net_forward.4} parent=0 // pred_check
    _
  $region15: #{net_forward.4} parent=0 // pred_check_branch
    %2778 = sbr.rel (0) target = $region17
  $region16: #{net_forward.4} parent=0 // pred_region
    _
  $region17: #{net_forward.4} parent=0 // pred_fallthru
    _
  // Predicated region
  $region18: #{net_forward.4} parent=0 // pred_check
    _
  $region19: #{net_forward.4} parent=0 // pred_check_branch
    %2780 = sbr.rel (0) target = $region21
  $region20: #{net_forward.4} parent=0 // pred_region
    _
  $region21: #{net_forward.4} parent=0 // pred_fallthru
    _

</llo_original>
